<compile_context>
chip_gen: v5e
topology: v5e:2x2
jax: 0.10.0
libtpu: 0.0.40
codegen_flags: <defaults>
</compile_context>

<pallas_src>
import jax
import jax.numpy as jnp
from jax.experimental import pallas as pl
from jax.experimental.pallas import tpu as pltpu

NEG_SLOPE = 0.01   # nn.LeakyReLU default
BN_EPS = 1e-5      # nn.BatchNorm1d default
LANE = 128         # TPU lane width


def _round_up(a, m):
    return ((a + m - 1) // m) * m


def _cdiv(a, b):
    return -(-a // b)


def _use_bf16_epilogue():
    """bf16 VALU exists on v6e/v7x; v5e (and older) would only add converts."""
    try:
        kind = jax.devices()[0].device_kind.lower()
    except Exception:
        return False
    return any(t in kind for t in ("v6", "v7", "7x"))


def _choose_chunks(B, N, max_tn=2048):
    """Pick (n_chunks, points-tile, padded N).

    n_chunks == 1 for moderate N (grid collapses to (B, 1)); 2 chunks minimum
    for B == 1 so both TensorCores on v7x get work; 512-aligned tiles <= max_tn
    for very large clouds.
    """
    min_chunks = 2 if B == 1 else 1
    n_chunks = max(min_chunks, _cdiv(N, max_tn))
    if n_chunks == 1:
        return 1, N, N              # block == full points dim: no divisibility constraint
    align = 512 if N >= 512 * n_chunks else 16
    tn = _round_up(_cdiv(N, n_chunks), align)
    return n_chunks, tn, tn * n_chunks


# ---------------------------------------------------------------------------
# Kernel
# ---------------------------------------------------------------------------
def _make_encoder_kernel(num_layers, add_bias, bf16_act):
    def kernel(*refs):
        x_ref = refs[0]
        out_ref = refs[-1]
        wb = refs[1:-1]

        h = x_ref[0]                                   # (tn, c_in_pad) bf16
        idx = 0
        acc = None
        for l in range(num_layers):
            w_ref = wb[idx]; idx += 1                  # (c_in_pad, c_out_pad) bf16
            acc = jnp.dot(h, w_ref[...], preferred_element_type=jnp.float32)
            if add_bias[l]:
                acc = acc + wb[idx][...]; idx += 1     # (1, c_out_pad) f32
            if l == num_layers - 1:
                # keep the last activation in f32 for the max reduction
                acc = jnp.maximum(acc, NEG_SLOPE * acc)
            elif bf16_act:
                # v6e/v7x: LeakyReLU on packed bf16 vregs (half the VALU work)
                hb = acc.astype(jnp.bfloat16)
                h = jnp.maximum(hb, NEG_SLOPE * hb)
            else:
                # v5e path: f32 elementwise, then cast for the next MXU pass
                acc = jnp.maximum(acc, NEG_SLOPE * acc)
                h = acc.astype(jnp.bfloat16)

        # partial max over this chunk's points (cross-sublane reduce, XLU)
        out_ref[0] = jnp.max(acc, axis=0, keepdims=True)   # (1, latent_pad) f32

    return kernel


# ---------------------------------------------------------------------------
# Wrapper
# ---------------------------------------------------------------------------
def prepare_input(x, c_in_pad, ones_col, n_chunks, tn):
    """NCL f32 -> (B, n_pad, c_in_pad) bf16: channels on lanes (zero-padded to the
    128 lane width, with a constant-1 channel for bias folding) and points
    edge-padded (duplicate points never change the max)."""
    B, c_in, N = x.shape
    assert ones_col is None or ones_col == c_in
    xt = jnp.transpose(x, (0, 2, 1)).astype(jnp.bfloat16)        # (B, N, C)
    parts = [xt]
    extra = c_in_pad - c_in
    if ones_col is not None:
        parts.append(jnp.ones((B, N, 1), jnp.bfloat16))
        extra -= 1
    if extra > 0:
        parts.append(jnp.zeros((B, N, extra), jnp.bfloat16))
    if len(parts) > 1:
        xt = jnp.concatenate(parts, axis=-1)
    n_pad = n_chunks * tn
    if n_pad != N:
        xt = jnp.pad(xt, ((0, 0), (0, n_pad - N), (0, 0)), mode="edge")
    return xt


def encoder_pointnet_forward(x, kparams, add_bias, ones_col, *, latent_dim,
                             bf16_act=None, max_tn=2048):
    """x: (B, C_in, N) float32 (PyTorch NCL layout)."""
    B, c_in, N = x.shape
    num_layers = len(add_bias)
    c_in_pad = kparams["w0"].shape[0]
    latent_pad = kparams[f"w{num_layers - 1}"].shape[1]
    if bf16_act is None:
        bf16_act = _use_bf16_epilogue()

    n_chunks, tn, _ = _choose_chunks(B, N, max_tn)
    xt = prepare_input(x, c_in_pad, ones_col, n_chunks, tn)     # (B, n_pad, c_in_pad)

    in_specs = [pl.BlockSpec((1, tn, c_in_pad), lambda b, j: (b, j, 0))]
    operands = [xt]
    for l in range(num_layers):
        w = kparams[f"w{l}"]
        in_specs.append(pl.BlockSpec(w.shape, lambda b, j: (0, 0)))      # VMEM-resident
        operands.append(w)
        if add_bias[l]:
            bvec = kparams[f"b{l}"]
            in_specs.append(pl.BlockSpec(bvec.shape, lambda b, j: (0, 0)))
            operands.append(bvec)

    nc = n_chunks
    out = pl.pallas_call(
        _make_encoder_kernel(num_layers, tuple(add_bias), bf16_act),
        out_shape=jax.ShapeDtypeStruct((B * n_chunks, 1, latent_pad), jnp.float32),
        grid_spec=pltpu.PrefetchScalarGridSpec(
            num_scalar_prefetch=0,
            grid=(B, n_chunks),
            in_specs=in_specs,
            out_specs=pl.BlockSpec((1, 1, latent_pad),
                                   lambda b, j: (b * nc + j, 0, 0)),
        ),
        compiler_params=pltpu.CompilerParams(
            dimension_semantics=("parallel", "parallel"),
            # allow XLA to fuse the transpose/pad/cast producer of x into the
            # kernel's input DMA instead of materialising the relayout in HBM
            allow_input_fusion=[True] + [False] * (len(operands) - 1),
        ),
    )(*operands)

    out = out.reshape(B, n_chunks, latent_pad)
    out = jnp.max(out, axis=1)                 # combine per-chunk partial maxes
    return out[:, :latent_dim]


# ---------------------------------------------------------------------------
# Parameters (deterministic synthetic) + eval-mode BatchNorm folding / padding
# ---------------------------------------------------------------------------
def init_raw_params(key, in_channels, n_filters, latent_dim, bn=True):
    dims = [in_channels] + list(n_filters) + [latent_dim]
    raw = {}
    for l, (d_in, d_out) in enumerate(zip(dims[:-1], dims[1:])):
        key, kw, kb, kg, kbe, km, kv = jax.random.split(key, 7)
        bound = float(d_in) ** -0.5
        raw[f"conv_w{l}"] = jax.random.uniform(kw, (d_out, d_in), jnp.float32, -bound, bound)
        raw[f"conv_b{l}"] = jax.random.uniform(kb, (d_out,), jnp.float32, -bound, bound)
        if bn:
            raw[f"bn_g{l}"] = jax.random.uniform(kg, (d_out,), jnp.float32, 0.8, 1.2)
            raw[f"bn_b{l}"] = jax.random.uniform(kbe, (d_out,), jnp.float32, -0.1, 0.1)
            raw[f"bn_m{l}"] = 0.1 * jax.random.normal(km, (d_out,), jnp.float32)
            raw[f"bn_v{l}"] = jax.random.uniform(kv, (d_out,), jnp.float32, 0.5, 1.5)
    return raw


def fold_params(raw, bn=True, eps=BN_EPS):
    """Fold eval-mode BN into the convs, transpose to (in, out), zero-pad every
    channel dim to the 128 lane width, fold biases into a constant-1 lane where
    a padded slot exists, and cast weights to bf16.

    Returns (kparams, add_bias, input_ones_col, c_in_pad)."""
    num_layers = sum(1 for k in raw if k.startswith("conv_w"))
    c_in = raw["conv_w0"].shape[1]
    c_in_pad = _round_up(c_in, LANE)
    x_ones_col = c_in if c_in_pad > c_in else None   # padded input channel set to 1.0

    kp = {}
    add_bias = []
    ones_col = x_ones_col                            # ones column in current layer's input
    for l in range(num_layers):
        w = raw[f"conv_w{l}"]        # (out, in)
        b = raw[f"conv_b{l}"]        # (out,)
        if bn:
            s = raw[f"bn_g{l}"] * jax.lax.rsqrt(raw[f"bn_v{l}"] + eps)
            w = w * s[:, None]
            b = (b - raw[f"bn_m{l}"]) * s + raw[f"bn_b{l}"]
        d_out, d_in = w.shape
        in_pad = _round_up(d_in, LANE)
        out_pad = _round_up(d_out, LANE)

        W = jnp.zeros((in_pad, out_pad), jnp.float32)
        W = W.at[:d_in, :d_out].set(w.T)
        if ones_col is not None:
            W = W.at[ones_col, :d_out].set(b)        # bias folded into the ones row
            add_bias.append(False)
        else:
            add_bias.append(True)
        next_ones = None
        if ones_col is not None and out_pad > d_out and l + 1 < num_layers:
            next_ones = d_out                         # propagate the 1.0 to a spare col
            W = W.at[ones_col, next_ones].set(1.0)

        kp[f"w{l}"] = W.astype(jnp.bfloat16)                                   # (in_pad, out_pad)
        kp[f"b{l}"] = jnp.pad(b, (0, out_pad - d_out)).reshape(1, -1).astype(jnp.float32)
        ones_col = next_ones
    return kp, add_bias, x_ones_col, c_in_pad


# ---------------------------------------------------------------------------
# References
# ---------------------------------------------------------------------------
def encoder_ref_f32(x, raw, bn=True, eps=BN_EPS):
    """Full-precision, unfolded PyTorch-semantics reference (eval mode)."""
    num_layers = sum(1 for k in raw if k.startswith("conv_w"))
    h = x
    for l in range(num_layers):
        h = jnp.einsum("oi,bin->bon", raw[f"conv_w{l}"], h) + raw[f"conv_b{l}"][None, :, None]
        if bn:
            mu = raw[f"bn_m{l}"][None, :, None]
            var = raw[f"bn_v{l}"][None, :, None]
            g = raw[f"bn_g{l}"][None, :, None]
            be = raw[f"bn_b{l}"][None, :, None]
            h = (h - mu) * jax.lax.rsqrt(var + eps) * g + be
        h = jnp.maximum(h, NEG_SLOPE * h)
    return jnp.max(h, axis=2)


def encoder_ref_bf16(xt, kparams, add_bias, bf16_act, latent_dim):
    """Reference mimicking the kernel numerics exactly (same prepared input,
    same folded/padded params, same epilogue dtype choices)."""
    num_layers = len(add_bias)
    h = xt
    acc = None
    for l in range(num_layers):
        acc = jnp.einsum("bnc,cd->bnd", h, kparams[f"w{l}"],
                         preferred_element_type=jnp.float32)
        if add_bias[l]:
            acc = acc + kparams[f"b{l}"]
        if l == num_layers - 1:
            acc = jnp.maximum(acc, NEG_SLOPE * acc)
        elif bf16_act:
            hb = acc.astype(jnp.bfloat16)
            h = jnp.maximum(hb, NEG_SLOPE * hb)
        else:
            acc = jnp.maximum(acc, NEG_SLOPE * acc)
            h = acc.astype(jnp.bfloat16)
    return jnp.max(acc, axis=1)[:, :latent_dim]


if __name__ == "__main__":
    # Module defaults: in_channels=39, n_filters=(64,128,128,256), latent_dim=128, bn=True
    B, C_IN, N = 2, 39, 512
    n_filters = (64, 128, 128, 256)
    latent_dim = 128

    key = jax.random.PRNGKey(0)
    key, kx = jax.random.split(key)
    x = jax.random.normal(kx, (B, C_IN, N), jnp.float32)

    raw = init_raw_params(key, C_IN, n_filters, latent_dim, bn=True)
    kparams, add_bias, ones_col, c_in_pad = fold_params(raw, bn=True)
    bf16_act = _use_bf16_epilogue()

    fwd = jax.jit(lambda xx, kp: encoder_pointnet_forward(
        xx, kp, add_bias, ones_col, latent_dim=latent_dim, bf16_act=bf16_act))
    out = jax.block_until_ready(fwd(x, kparams))
    assert out.shape == (B, latent_dim), out.shape

    # Tight check vs a reference with identical (bf16-operand / f32-accum) numerics.
    n_chunks, tn, _ = _choose_chunks(B, N)
    xt = prepare_input(x, c_in_pad, ones_col, n_chunks, tn)
    ref_bf = encoder_ref_bf16(xt, kparams, add_bias, bf16_act, latent_dim)
    assert jnp.allclose(out, ref_bf, atol=1e-2, rtol=1e-2), "mismatch vs bf16-numerics reference"

    # Loose semantic check vs the full-precision, unfolded Conv1d+BN+LeakyReLU+max.
    ref32 = encoder_ref_f32(x, raw, bn=True)
    assert jnp.allclose(out, ref32, atol=1e-1, rtol=1e-1), "mismatch vs f32 PyTorch-semantics reference"

    # Exercise the B == 1 path (points axis split 2-way "parallel" so both
    # TensorCores on v7x stay busy even at batch 1).
    out1 = jax.block_until_ready(fwd(x[:1], kparams))
    assert out1.shape == (1, latent_dim), out1.shape
    assert jnp.allclose(out1, out[:1], atol=1e-3, rtol=1e-3), "B=1 chunked path mismatch"

    print("KERNEL_OK")
</pallas_src>

<mosaic_0001>
module attributes {stable_mosaic.version = 11 : i64} {
  func.func @kernel(%arg0: i32, %arg1: i32, %arg2: memref<1x512x128xbf16, #tpu.memory_space<vmem>>, %arg3: memref<128x128xbf16, #tpu.memory_space<vmem>>, %arg4: memref<128x128xbf16, #tpu.memory_space<vmem>>, %arg5: memref<128x128xbf16, #tpu.memory_space<vmem>>, %arg6: memref<1x128xf32, #tpu.memory_space<vmem>>, %arg7: memref<128x256xbf16, #tpu.memory_space<vmem>>, %arg8: memref<1x256xf32, #tpu.memory_space<vmem>>, %arg9: memref<256x128xbf16, #tpu.memory_space<vmem>>, %arg10: memref<1x128xf32, #tpu.memory_space<vmem>>, %arg11: memref<1x1x128xf32, #tpu.memory_space<vmem>>) attributes {dimension_semantics = [#tpu.dimension_semantics<parallel>, #tpu.dimension_semantics<parallel>], iteration_bounds = array<i64: 2, 1>, scalar_prefetch = 0 : i64, scratch_operands = 0 : i64, tpu.core_type = #tpu.core_type<tc>, window_params = [{transform_indices = @transform_0, window_bounds = array<i64: 1, 512, 128>}, {pipeline_mode = #tpu.pipeline_mode<synchronous>, transform_indices = @transform_1, window_bounds = array<i64: 128, 128>}, {pipeline_mode = #tpu.pipeline_mode<synchronous>, transform_indices = @transform_2, window_bounds = array<i64: 128, 128>}, {pipeline_mode = #tpu.pipeline_mode<synchronous>, transform_indices = @transform_3, window_bounds = array<i64: 128, 128>}, {pipeline_mode = #tpu.pipeline_mode<synchronous>, transform_indices = @transform_4, window_bounds = array<i64: 1, 128>}, {pipeline_mode = #tpu.pipeline_mode<synchronous>, transform_indices = @transform_5, window_bounds = array<i64: 128, 256>}, {pipeline_mode = #tpu.pipeline_mode<synchronous>, transform_indices = @transform_6, window_bounds = array<i64: 1, 256>}, {pipeline_mode = #tpu.pipeline_mode<synchronous>, transform_indices = @transform_7, window_bounds = array<i64: 256, 128>}, {pipeline_mode = #tpu.pipeline_mode<synchronous>, transform_indices = @transform_8, window_bounds = array<i64: 1, 128>}, {transform_indices = @transform_9, window_bounds = array<i64: 1, 1, 128>}]} {
    %c0 = arith.constant 0 : index
    %c0_0 = arith.constant 0 : index
    %c0_1 = arith.constant 0 : index
    %0 = vector.load %arg2[%c0, %c0_0, %c0_1] : memref<1x512x128xbf16, #tpu.memory_space<vmem>>, vector<1x512x128xbf16>
    %1 = vector.shape_cast %0 : vector<1x512x128xbf16> to vector<512x128xbf16>
    %c0_2 = arith.constant 0 : index
    %c0_3 = arith.constant 0 : index
    %2 = vector.load %arg3[%c0_2, %c0_3] : memref<128x128xbf16, #tpu.memory_space<vmem>>, vector<128x128xbf16>
    %cst = arith.constant dense<0.000000e+00> : vector<512x128xf32>
    %3 = tpu.matmul %1, %2, %cst {dimension_numbers = #tpu.dot_dimension_numbers<[1], [0], [0], [1], [0, 0, 1, 1], [], []>} : vector<512x128xbf16>, vector<128x128xbf16>, vector<512x128xf32> -> vector<512x128xf32>
    %cst_4 = arith.constant 0.00999999977 : f32
    %4 = vector.broadcast %cst_4 : f32 to vector<512x128xf32>
    %5 = arith.mulf %4, %3 : vector<512x128xf32>
    %6 = arith.maximumf %3, %5 : vector<512x128xf32>
    %7 = arith.truncf %6 : vector<512x128xf32> to vector<512x128xbf16>
    %c0_5 = arith.constant 0 : index
    %c0_6 = arith.constant 0 : index
    %8 = vector.load %arg4[%c0_5, %c0_6] : memref<128x128xbf16, #tpu.memory_space<vmem>>, vector<128x128xbf16>
    %cst_7 = arith.constant dense<0.000000e+00> : vector<512x128xf32>
    %9 = tpu.matmul %7, %8, %cst_7 {dimension_numbers = #tpu.dot_dimension_numbers<[1], [0], [0], [1], [0, 0, 1, 1], [], []>} : vector<512x128xbf16>, vector<128x128xbf16>, vector<512x128xf32> -> vector<512x128xf32>
    %cst_8 = arith.constant 0.00999999977 : f32
    %10 = vector.broadcast %cst_8 : f32 to vector<512x128xf32>
    %11 = arith.mulf %10, %9 : vector<512x128xf32>
    %12 = arith.maximumf %9, %11 : vector<512x128xf32>
    %13 = arith.truncf %12 : vector<512x128xf32> to vector<512x128xbf16>
    %c0_9 = arith.constant 0 : index
    %c0_10 = arith.constant 0 : index
    %14 = vector.load %arg5[%c0_9, %c0_10] : memref<128x128xbf16, #tpu.memory_space<vmem>>, vector<128x128xbf16>
    %cst_11 = arith.constant dense<0.000000e+00> : vector<512x128xf32>
    %15 = tpu.matmul %13, %14, %cst_11 {dimension_numbers = #tpu.dot_dimension_numbers<[1], [0], [0], [1], [0, 0, 1, 1], [], []>} : vector<512x128xbf16>, vector<128x128xbf16>, vector<512x128xf32> -> vector<512x128xf32>
    %c0_12 = arith.constant 0 : index
    %c0_13 = arith.constant 0 : index
    %16 = vector.load %arg6[%c0_12, %c0_13] : memref<1x128xf32, #tpu.memory_space<vmem>>, vector<1x128xf32>
    %17 = vector.broadcast %16 : vector<1x128xf32> to vector<512x128xf32>
    %18 = arith.addf %15, %17 : vector<512x128xf32>
    %cst_14 = arith.constant 0.00999999977 : f32
    %19 = vector.broadcast %cst_14 : f32 to vector<512x128xf32>
    %20 = arith.mulf %19, %18 : vector<512x128xf32>
    %21 = arith.maximumf %18, %20 : vector<512x128xf32>
    %22 = arith.truncf %21 : vector<512x128xf32> to vector<512x128xbf16>
    %c0_15 = arith.constant 0 : index
    %c0_16 = arith.constant 0 : index
    %23 = vector.load %arg7[%c0_15, %c0_16] : memref<128x256xbf16, #tpu.memory_space<vmem>>, vector<128x256xbf16>
    %cst_17 = arith.constant dense<0.000000e+00> : vector<512x256xf32>
    %24 = tpu.matmul %22, %23, %cst_17 {dimension_numbers = #tpu.dot_dimension_numbers<[1], [0], [0], [1], [0, 0, 1, 1], [], []>} : vector<512x128xbf16>, vector<128x256xbf16>, vector<512x256xf32> -> vector<512x256xf32>
    %c0_18 = arith.constant 0 : index
    %c0_19 = arith.constant 0 : index
    %25 = vector.load %arg8[%c0_18, %c0_19] : memref<1x256xf32, #tpu.memory_space<vmem>>, vector<1x256xf32>
    %26 = vector.broadcast %25 : vector<1x256xf32> to vector<512x256xf32>
    %27 = arith.addf %24, %26 : vector<512x256xf32>
    %cst_20 = arith.constant 0.00999999977 : f32
    %28 = vector.broadcast %cst_20 : f32 to vector<512x256xf32>
    %29 = arith.mulf %28, %27 : vector<512x256xf32>
    %30 = arith.maximumf %27, %29 : vector<512x256xf32>
    %31 = arith.truncf %30 : vector<512x256xf32> to vector<512x256xbf16>
    %c0_21 = arith.constant 0 : index
    %c0_22 = arith.constant 0 : index
    %32 = vector.load %arg9[%c0_21, %c0_22] : memref<256x128xbf16, #tpu.memory_space<vmem>>, vector<256x128xbf16>
    %cst_23 = arith.constant dense<0.000000e+00> : vector<512x128xf32>
    %33 = tpu.matmul %31, %32, %cst_23 {dimension_numbers = #tpu.dot_dimension_numbers<[1], [0], [0], [1], [0, 0, 1, 1], [], []>} : vector<512x256xbf16>, vector<256x128xbf16>, vector<512x128xf32> -> vector<512x128xf32>
    %c0_24 = arith.constant 0 : index
    %c0_25 = arith.constant 0 : index
    %34 = vector.load %arg10[%c0_24, %c0_25] : memref<1x128xf32, #tpu.memory_space<vmem>>, vector<1x128xf32>
    %35 = vector.broadcast %34 : vector<1x128xf32> to vector<512x128xf32>
    %36 = arith.addf %33, %35 : vector<512x128xf32>
    %cst_26 = arith.constant 0.00999999977 : f32
    %37 = vector.broadcast %cst_26 : f32 to vector<512x128xf32>
    %38 = arith.mulf %37, %36 : vector<512x128xf32>
    %39 = arith.maximumf %36, %38 : vector<512x128xf32>
    %cst_27 = arith.constant dense<0xFF800000> : vector<128xf32>
    %40 = vector.multi_reduction <maximumf>, %39, %cst_27 [0] : vector<512x128xf32> to vector<128xf32>
    %41 = vector.shape_cast %40 : vector<128xf32> to vector<1x128xf32>
    %c0_28 = arith.constant 0 : index
    %c0_29 = arith.constant 0 : index
    %c0_30 = arith.constant 0 : index
    %42 = vector.load %arg11[%c0_28, %c0_29, %c0_30] : memref<1x1x128xf32, #tpu.memory_space<vmem>>, vector<1x1x128xf32>
    %43 = vector.shape_cast %42 : vector<1x1x128xf32> to vector<1x128xf32>
    %44 = vector.shape_cast %41 : vector<1x128xf32> to vector<1x1x128xf32>
    tpu.vector_store %arg11[%c0_28, %c0_29, %c0_30], %44 {strides = array<i32>} : memref<1x1x128xf32, #tpu.memory_space<vmem>>, vector<1x1x128xf32>,
    return
  }
  func.func @transform_0(%arg0: i32, %arg1: i32) -> (i32, i32, i32) {
    %c0_i32 = arith.constant 0 : i32
    %c0_i32_0 = arith.constant 0 : i32
    return %arg0, %arg1, %c0_i32 : i32, i32, i32
  }
  func.func @transform_1(%arg0: i32, %arg1: i32) -> (i32, i32) {
    %c0_i32 = arith.constant 0 : i32
    %c0_i32_0 = arith.constant 0 : i32
    %c0_i32_1 = arith.constant 0 : i32
    return %c0_i32, %c0_i32_0 : i32, i32
  }
  func.func @transform_2(%arg0: i32, %arg1: i32) -> (i32, i32) {
    %c0_i32 = arith.constant 0 : i32
    %c0_i32_0 = arith.constant 0 : i32
    %c0_i32_1 = arith.constant 0 : i32
    return %c0_i32, %c0_i32_0 : i32, i32
  }
  func.func @transform_3(%arg0: i32, %arg1: i32) -> (i32, i32) {
    %c0_i32 = arith.constant 0 : i32
    %c0_i32_0 = arith.constant 0 : i32
    %c0_i32_1 = arith.constant 0 : i32
    return %c0_i32, %c0_i32_0 : i32, i32
  }
  func.func @transform_4(%arg0: i32, %arg1: i32) -> (i32, i32) {
    %c0_i32 = arith.constant 0 : i32
    %c0_i32_0 = arith.constant 0 : i32
    %c0_i32_1 = arith.constant 0 : i32
    return %c0_i32, %c0_i32_0 : i32, i32
  }
  func.func @transform_5(%arg0: i32, %arg1: i32) -> (i32, i32) {
    %c0_i32 = arith.constant 0 : i32
    %c0_i32_0 = arith.constant 0 : i32
    %c0_i32_1 = arith.constant 0 : i32
    return %c0_i32, %c0_i32_0 : i32, i32
  }
  func.func @transform_6(%arg0: i32, %arg1: i32) -> (i32, i32) {
    %c0_i32 = arith.constant 0 : i32
    %c0_i32_0 = arith.constant 0 : i32
    %c0_i32_1 = arith.constant 0 : i32
    return %c0_i32, %c0_i32_0 : i32, i32
  }
  func.func @transform_7(%arg0: i32, %arg1: i32) -> (i32, i32) {
    %c0_i32 = arith.constant 0 : i32
    %c0_i32_0 = arith.constant 0 : i32
    %c0_i32_1 = arith.constant 0 : i32
    return %c0_i32, %c0_i32_0 : i32, i32
  }
  func.func @transform_8(%arg0: i32, %arg1: i32) -> (i32, i32) {
    %c0_i32 = arith.constant 0 : i32
    %c0_i32_0 = arith.constant 0 : i32
    %c0_i32_1 = arith.constant 0 : i32
    return %c0_i32, %c0_i32_0 : i32, i32
  }
  func.func @transform_9(%arg0: i32, %arg1: i32) -> (i32, i32, i32) {
    %c1_i32 = arith.constant 1 : i32
    %0 = arith.muli %arg0, %c1_i32 : i32
    %1 = arith.addi %0, %arg1 : i32
    %c0_i32 = arith.constant 0 : i32
    %c0_i32_0 = arith.constant 0 : i32
    %c0_i32_1 = arith.constant 0 : i32
    return %1, %c0_i32, %c0_i32_0 : i32, i32, i32
  }
}

</mosaic_0001>

<llo_original>
// kernel: _lambda_.2
$region0: #{_lambda_.2}
  #allocation0 [shape = 'u32[]', space=smem, size = 0x4, offset = 0x4, fixed_abs, tag = 'smem constant byte address 0x4 - core index']
  #allocation1 [shape = 'u32[72,128]{1,0:T(1,128)}', space=vmem, size = 0x9000, scoped, tag = 'internal scratch']
  #allocation2 [shape = 'u32[2048]{0}', space=vmem, size = 0x2000, scoped, tag = 'scoped memory for _lambda_.2']
  #allocation3 [shape = 'u32[2048]{0}', space=vmem, size = 0x2000, scoped, tag = 'scoped memory for _lambda_.2']
  #allocation4 [shape = 'u32[2048]{0}', space=vmem, size = 0x2000, scoped, tag = 'scoped memory for _lambda_.2']
  #allocation5 [shape = 'u32[2048]{0}', space=vmem, size = 0x2000, scoped, tag = 'scoped memory for _lambda_.2']
  #allocation6 [shape = 'u32[2048]{0}', space=vmem, size = 0x2000, scoped, tag = 'scoped memory for _lambda_.2']
  %s0 = inlined_call_operand.vmem [shape: bf16[128,128], index: 0, kind: input, shape index: {}]
  %s1 = inlined_call_operand.vmem [shape: bf16[128,128], index: 1, kind: input, shape index: {}]
  %s2 = inlined_call_operand.vmem [shape: bf16[128,128], index: 2, kind: input, shape index: {}]
  %s3 = inlined_call_operand.vmem [shape: f32[1,128], index: 3, kind: input, shape index: {}]
  %s4 = inlined_call_operand.vmem [shape: bf16[128,256], index: 4, kind: input, shape index: {}]
  %s5 = inlined_call_operand.vmem [shape: f32[1,256], index: 5, kind: input, shape index: {}]
  %s6 = inlined_call_operand.vmem [shape: bf16[256,128], index: 6, kind: input, shape index: {}]
  %s7 = inlined_call_operand.vmem [shape: f32[1,128], index: 7, kind: input, shape index: {}]
  %s8 = inlined_call_operand.vmem [shape: bf16[2,512,39], index: 8, kind: input, shape index: {}]
  %s9 = inlined_call_operand.<no memory space> [shape: bf16[], index: 9, kind: input, shape index: {}]
  %s10 = inlined_call_operand.vmem [shape: bf16[128], index: 10, kind: input, shape index: {}]
  %s11 = inlined_call_operand.vmem [shape: bf16[128], index: 11, kind: input, shape index: {}]
  %s12 = inlined_call_operand.hbm [shape: f32[2,1,128], index: 12, kind: output, shape index: {}]
  %s13 = sld [smem:[#allocation0]]
  $region77: #{_lambda_.2} parent=0
    _
  %s15 = ssub.s32 1, %s13
  %s16 = scalar_select 0, %s15, %s13
  %v17 = vstv %s9
  %v18 = vunpack.i.l.bf16 %v17
  %v20 = vunpack.i.h.bf16 %v17
  $region1: #{_lambda_.2} parent=0
    #allocation7 [shape = 'u8[1024]{0}', space=vmem, size = 0x400, scoped, tag = 'output window, operand 0']
    #allocation8 [shape = 's32[2]{0}', space=sflag, size = 0x8, scoped, tag = 'scoped memory for _lambda_.2']
    %22 = vsyncpa [#allocation8], 0
    %s23 = scalar_lea.sflag [#allocation8], 1
    %24 = vsyncpa %s23, 0
    loop: start=0, step=1, limit=4
    $region2: #{_lambda_.2} parent=1 // loop_pre_header
      _
    $region3: #{_lambda_.2} parent=1 // loop_header
      %s26 = sphi 0, %s30
      %p27 = scmp.ge.s32.totalorder %s26, 4
      %s33 = sphi 0, %s45
      %s34 = sphi 0, %s41
      %s35 = sphi 0, %s33
      %s36 = sphi 0, %s34
      %s37 = sphi 0, %s35
      %s38 = sphi 0, %s36
      %s50 = sphi 0, %s52
      %s53 = sphi 0, %s50
      %s54 = sphi 0, %s53
      %s70 = sphi 0, %s54
      %s74 = sphi 0, %s74
      %s76 = sphi 0, %s74
      %s77 = sphi 0, %s76
      %s91 = sphi 0, %s77
      %s95 = sphi 0, %s95
      %s97 = sphi 0, %s95
      %s98 = sphi 0, %s97
      %s112 = sphi 0, %s98
      %s116 = sphi 0, %s116
      %s118 = sphi 0, %s116
      %s119 = sphi 0, %s118
      %s133 = sphi 0, %s119
      %s137 = sphi 0, %s137
      %s139 = sphi 0, %s137
      %s140 = sphi 0, %s139
      %s154 = sphi 0, %s140
      %s158 = sphi 0, %s158
      %s160 = sphi 0, %s158
      %s161 = sphi 0, %s160
      %s175 = sphi 0, %s161
      %s179 = sphi 0, %s179
      %s181 = sphi 0, %s179
      %s182 = sphi 0, %s181
      %s196 = sphi 0, %s182
      %s200 = sphi 0, %s200
      %s202 = sphi 0, %s200
      %s203 = sphi 0, %s202
      %s217 = sphi 0, %s203
      %s221 = sphi 0, %s221
      %s223 = sphi 0, %s221
      %s224 = sphi 0, %s223
      %s238 = sphi 0, %s224
      %s242 = sphi 0, %s242
      %s244 = sphi 0, %s242
      %s245 = sphi 0, %s244
      %s259 = sphi 0, %s245
      %s263 = sphi 0, %s263
      %s265 = sphi 0, %s263
      %s266 = sphi 0, %s265
      %s280 = sphi 0, %s266
      %s288 = sphi 0, %s290
      %s291 = sphi 0, %s288
      %s292 = sphi 0, %s291
      %s308 = sphi 0, %s292
    $region4: #{_lambda_.2} parent=1 // loop_header_branch
      %29 = sbr.rel (%p27) target = $region8
    $region5: #{_lambda_.2} parent=1 // loop_body
      %s31 = ssub.s32 %s26, 1
      %s32 = ssub.s32 %s26, 2
      %s39 = sadd.s32 1, %s34
      %p40 = scmp.ge.s32.totalorder %s39, 1
      %s41 = scalar_select %p40, 0, %s39
      %s42 = sadd.s32 1, %s33
      %s43 = scalar_select %p40, %s42, %s33
      %p44 = scmp.ge.s32.totalorder %s43, 2
      %s45 = scalar_select %p44, 0, %s43
      %s46 = ssub.s32 %s33, %s45
      %s47 = ssub.s32 %s34, %s41
      %s48 = sor.u32 %s46, %s47
      %p49 = scmp.eq.s32.totalorder %s48, 0
      %s51 = sadd.s32 %s50, 1
      %s52 = scalar_select %p49, %s50, %s51
      %p55 = pneg %p49
      %p56 = scmp.eq.s32.totalorder %s26, 1
      %p57 = por %p55, %p56
      %p58 = scmp.ne.s32.totalorder %s50, %s53
      %p59 = scmp.eq.s32.totalorder %s26, 0
      %p60 = por %p58, %p59
      %p61 = scmp.ne.s32.totalorder %s50, %s53
      %p62 = scmp.eq.s32.totalorder %s31, 1
      %p63 = por %p61, %p62
      %p64 = scmp.ne.s32.totalorder %s53, %s54
      %p65 = scmp.eq.s32.totalorder %s31, 0
      %p66 = por %p64, %p65
      %p67 = scmp.ne.s32.totalorder %s53, %s54
      %p68 = scmp.eq.s32.totalorder %s32, 1
      %p69 = por %p67, %p68
      %p71 = scmp.ne.s32.totalorder %s54, %s70
      %p72 = scmp.eq.s32.totalorder %s32, 0
      %p73 = por %p71, %p72
      %s75 = sadd.s32 %s74, 1
      %p78 = scmp.eq.s32.totalorder %s26, 1
      %p79 = scmp.ne.s32.totalorder %s74, %s76
      %p80 = scmp.eq.s32.totalorder %s26, 0
      %p81 = por %p79, %p80
      %p82 = scmp.ne.s32.totalorder %s74, %s76
      %p83 = scmp.eq.s32.totalorder %s31, 1
      %p84 = por %p82, %p83
      %p85 = scmp.ne.s32.totalorder %s76, %s77
      %p86 = scmp.eq.s32.totalorder %s31, 0
      %p87 = por %p85, %p86
      %p88 = scmp.ne.s32.totalorder %s76, %s77
      %p89 = scmp.eq.s32.totalorder %s32, 1
      %p90 = por %p88, %p89
      %p92 = scmp.ne.s32.totalorder %s77, %s91
      %p93 = scmp.eq.s32.totalorder %s32, 0
      %p94 = por %p92, %p93
      %s96 = sadd.s32 %s95, 1
      %p99 = scmp.eq.s32.totalorder %s26, 1
      %p100 = scmp.ne.s32.totalorder %s95, %s97
      %p101 = scmp.eq.s32.totalorder %s26, 0
      %p102 = por %p100, %p101
      %p103 = scmp.ne.s32.totalorder %s95, %s97
      %p104 = scmp.eq.s32.totalorder %s31, 1
      %p105 = por %p103, %p104
      %p106 = scmp.ne.s32.totalorder %s97, %s98
      %p107 = scmp.eq.s32.totalorder %s31, 0
      %p108 = por %p106, %p107
      %p109 = scmp.ne.s32.totalorder %s97, %s98
      %p110 = scmp.eq.s32.totalorder %s32, 1
      %p111 = por %p109, %p110
      %p113 = scmp.ne.s32.totalorder %s98, %s112
      %p114 = scmp.eq.s32.totalorder %s32, 0
      %p115 = por %p113, %p114
      %s117 = sadd.s32 %s116, 1
      %p120 = scmp.eq.s32.totalorder %s26, 1
      %p121 = scmp.ne.s32.totalorder %s116, %s118
      %p122 = scmp.eq.s32.totalorder %s26, 0
      %p123 = por %p121, %p122
      %p124 = scmp.ne.s32.totalorder %s116, %s118
      %p125 = scmp.eq.s32.totalorder %s31, 1
      %p126 = por %p124, %p125
      %p127 = scmp.ne.s32.totalorder %s118, %s119
      %p128 = scmp.eq.s32.totalorder %s31, 0
      %p129 = por %p127, %p128
      %p130 = scmp.ne.s32.totalorder %s118, %s119
      %p131 = scmp.eq.s32.totalorder %s32, 1
      %p132 = por %p130, %p131
      %p134 = scmp.ne.s32.totalorder %s119, %s133
      %p135 = scmp.eq.s32.totalorder %s32, 0
      %p136 = por %p134, %p135
      %s138 = sadd.s32 %s137, 1
      %p141 = scmp.eq.s32.totalorder %s26, 1
      %p142 = scmp.ne.s32.totalorder %s137, %s139
      %p143 = scmp.eq.s32.totalorder %s26, 0
      %p144 = por %p142, %p143
      %p145 = scmp.ne.s32.totalorder %s137, %s139
      %p146 = scmp.eq.s32.totalorder %s31, 1
      %p147 = por %p145, %p146
      %p148 = scmp.ne.s32.totalorder %s139, %s140
      %p149 = scmp.eq.s32.totalorder %s31, 0
      %p150 = por %p148, %p149
      %p151 = scmp.ne.s32.totalorder %s139, %s140
      %p152 = scmp.eq.s32.totalorder %s32, 1
      %p153 = por %p151, %p152
      %p155 = scmp.ne.s32.totalorder %s140, %s154
      %p156 = scmp.eq.s32.totalorder %s32, 0
      %p157 = por %p155, %p156
      %s159 = sadd.s32 %s158, 1
      %p162 = scmp.eq.s32.totalorder %s26, 1
      %p163 = scmp.ne.s32.totalorder %s158, %s160
      %p164 = scmp.eq.s32.totalorder %s26, 0
      %p165 = por %p163, %p164
      %p166 = scmp.ne.s32.totalorder %s158, %s160
      %p167 = scmp.eq.s32.totalorder %s31, 1
      %p168 = por %p166, %p167
      %p169 = scmp.ne.s32.totalorder %s160, %s161
      %p170 = scmp.eq.s32.totalorder %s31, 0
      %p171 = por %p169, %p170
      %p172 = scmp.ne.s32.totalorder %s160, %s161
      %p173 = scmp.eq.s32.totalorder %s32, 1
      %p174 = por %p172, %p173
      %p176 = scmp.ne.s32.totalorder %s161, %s175
      %p177 = scmp.eq.s32.totalorder %s32, 0
      %p178 = por %p176, %p177
      %s180 = sadd.s32 %s179, 1
      %p183 = scmp.eq.s32.totalorder %s26, 1
      %p184 = scmp.ne.s32.totalorder %s179, %s181
      %p185 = scmp.eq.s32.totalorder %s26, 0
      %p186 = por %p184, %p185
      %p187 = scmp.ne.s32.totalorder %s179, %s181
      %p188 = scmp.eq.s32.totalorder %s31, 1
      %p189 = por %p187, %p188
      %p190 = scmp.ne.s32.totalorder %s181, %s182
      %p191 = scmp.eq.s32.totalorder %s31, 0
      %p192 = por %p190, %p191
      %p193 = scmp.ne.s32.totalorder %s181, %s182
      %p194 = scmp.eq.s32.totalorder %s32, 1
      %p195 = por %p193, %p194
      %p197 = scmp.ne.s32.totalorder %s182, %s196
      %p198 = scmp.eq.s32.totalorder %s32, 0
      %p199 = por %p197, %p198
      %s201 = sadd.s32 %s200, 1
      %p204 = scmp.eq.s32.totalorder %s26, 1
      %p205 = scmp.ne.s32.totalorder %s200, %s202
      %p206 = scmp.eq.s32.totalorder %s26, 0
      %p207 = por %p205, %p206
      %p208 = scmp.ne.s32.totalorder %s200, %s202
      %p209 = scmp.eq.s32.totalorder %s31, 1
      %p210 = por %p208, %p209
      %p211 = scmp.ne.s32.totalorder %s202, %s203
      %p212 = scmp.eq.s32.totalorder %s31, 0
      %p213 = por %p211, %p212
      %p214 = scmp.ne.s32.totalorder %s202, %s203
      %p215 = scmp.eq.s32.totalorder %s32, 1
      %p216 = por %p214, %p215
      %p218 = scmp.ne.s32.totalorder %s203, %s217
      %p219 = scmp.eq.s32.totalorder %s32, 0
      %p220 = por %p218, %p219
      %s222 = sadd.s32 %s221, 1
      %p225 = scmp.eq.s32.totalorder %s26, 1
      %p226 = scmp.ne.s32.totalorder %s221, %s223
      %p227 = scmp.eq.s32.totalorder %s26, 0
      %p228 = por %p226, %p227
      %p229 = scmp.ne.s32.totalorder %s221, %s223
      %p230 = scmp.eq.s32.totalorder %s31, 1
      %p231 = por %p229, %p230
      %p232 = scmp.ne.s32.totalorder %s223, %s224
      %p233 = scmp.eq.s32.totalorder %s31, 0
      %p234 = por %p232, %p233
      %p235 = scmp.ne.s32.totalorder %s223, %s224
      %p236 = scmp.eq.s32.totalorder %s32, 1
      %p237 = por %p235, %p236
      %p239 = scmp.ne.s32.totalorder %s224, %s238
      %p240 = scmp.eq.s32.totalorder %s32, 0
      %p241 = por %p239, %p240
      %s243 = sadd.s32 %s242, 1
      %p246 = scmp.eq.s32.totalorder %s26, 1
      %p247 = scmp.ne.s32.totalorder %s242, %s244
      %p248 = scmp.eq.s32.totalorder %s26, 0
      %p249 = por %p247, %p248
      %p250 = scmp.ne.s32.totalorder %s242, %s244
      %p251 = scmp.eq.s32.totalorder %s31, 1
      %p252 = por %p250, %p251
      %p253 = scmp.ne.s32.totalorder %s244, %s245
      %p254 = scmp.eq.s32.totalorder %s31, 0
      %p255 = por %p253, %p254
      %p256 = scmp.ne.s32.totalorder %s244, %s245
      %p257 = scmp.eq.s32.totalorder %s32, 1
      %p258 = por %p256, %p257
      %p260 = scmp.ne.s32.totalorder %s245, %s259
      %p261 = scmp.eq.s32.totalorder %s32, 0
      %p262 = por %p260, %p261
      %s264 = sadd.s32 %s263, 1
      %p267 = scmp.eq.s32.totalorder %s26, 1
      %p268 = scmp.ne.s32.totalorder %s263, %s265
      %p269 = scmp.eq.s32.totalorder %s26, 0
      %p270 = por %p268, %p269
      %p271 = scmp.ne.s32.totalorder %s263, %s265
      %p272 = scmp.eq.s32.totalorder %s31, 1
      %p273 = por %p271, %p272
      %p274 = scmp.ne.s32.totalorder %s265, %s266
      %p275 = scmp.eq.s32.totalorder %s31, 0
      %p276 = por %p274, %p275
      %p277 = scmp.ne.s32.totalorder %s265, %s266
      %p278 = scmp.eq.s32.totalorder %s32, 1
      %p279 = por %p277, %p278
      %p281 = scmp.ne.s32.totalorder %s266, %s280
      %p282 = scmp.eq.s32.totalorder %s32, 0
      %p283 = por %p281, %p282
      %s284 = sadd.s32 %s33, %s34
      %s285 = sadd.s32 %s45, %s41
      %s286 = ssub.s32 %s284, %s285
      %p287 = scmp.eq.s32.totalorder %s286, 0
      %s289 = sadd.s32 %s288, 1
      %s290 = scalar_select %p287, %s288, %s289
      %p293 = pneg %p287
      %p294 = scmp.eq.s32.totalorder %s26, 1
      %p295 = por %p293, %p294
      %p296 = scmp.ne.s32.totalorder %s288, %s291
      %p297 = scmp.eq.s32.totalorder %s26, 0
      %p298 = por %p296, %p297
      %p299 = scmp.ne.s32.totalorder %s288, %s291
      %p300 = scmp.eq.s32.totalorder %s31, 1
      %p301 = por %p299, %p300
      %p302 = scmp.ne.s32.totalorder %s291, %s292
      %p303 = scmp.eq.s32.totalorder %s31, 0
      %p304 = por %p302, %p303
      %p305 = scmp.ne.s32.totalorder %s291, %s292
      %p306 = scmp.eq.s32.totalorder %s32, 1
      %p307 = por %p305, %p306
      %p309 = scmp.ne.s32.totalorder %s292, %s308
      %p310 = scmp.eq.s32.totalorder %s32, 0
      %p311 = por %p309, %p310
      %p312 = scmp.le.s32.totalorder 1, %s26
      %p313 = scmp.lt.s32.totalorder %s26, 3
      %p314 = pnand %p312, %p313
      %p315 = pneg %p314
      // Predicated region
      $region9: #{_lambda_.2} parent=5 // pred_check
        _
      $region10: #{_lambda_.2} parent=5 // pred_check_branch
        %317 = sbr.rel (%p314) target = $region12
      $region11: #{_lambda_.2} parent=5 // pred_region
        %s318 = ssub.s32 %s26, 1
        // Predicated region
        $region13: #{_lambda_.2} parent=11 // pred_check
          %p319 = pneg %p129
        $region14: #{_lambda_.2} parent=11 // pred_check_branch
          %321 = sbr.rel (%p319) target = $region16
        $region15: #{_lambda_.2} parent=11 // pred_region
          _
        $region16: #{_lambda_.2} parent=11 // pred_fallthru
          _
        // Predicated region
        $region17: #{_lambda_.2} parent=11 // pred_check
          %p322 = pneg %p150
        $region18: #{_lambda_.2} parent=11 // pred_check_branch
          %324 = sbr.rel (%p322) target = $region20
        $region19: #{_lambda_.2} parent=11 // pred_region
          _
        $region20: #{_lambda_.2} parent=11 // pred_fallthru
          _
        // Predicated region
        $region21: #{_lambda_.2} parent=11 // pred_check
          %p325 = pneg %p171
        $region22: #{_lambda_.2} parent=11 // pred_check_branch
          %327 = sbr.rel (%p325) target = $region24
        $region23: #{_lambda_.2} parent=11 // pred_region
          _
        $region24: #{_lambda_.2} parent=11 // pred_fallthru
          _
        // Predicated region
        $region25: #{_lambda_.2} parent=11 // pred_check
          %p328 = pneg %p192
        $region26: #{_lambda_.2} parent=11 // pred_check_branch
          %330 = sbr.rel (%p328) target = $region28
        $region27: #{_lambda_.2} parent=11 // pred_region
          _
        $region28: #{_lambda_.2} parent=11 // pred_fallthru
          _
        // Predicated region
        $region29: #{_lambda_.2} parent=11 // pred_check
          %p331 = pneg %p213
        $region30: #{_lambda_.2} parent=11 // pred_check_branch
          %333 = sbr.rel (%p331) target = $region32
        $region31: #{_lambda_.2} parent=11 // pred_region
          _
        $region32: #{_lambda_.2} parent=11 // pred_fallthru
          _
        // Predicated region
        $region33: #{_lambda_.2} parent=11 // pred_check
          %p334 = pneg %p234
        $region34: #{_lambda_.2} parent=11 // pred_check_branch
          %336 = sbr.rel (%p334) target = $region36
        $region35: #{_lambda_.2} parent=11 // pred_region
          _
        $region36: #{_lambda_.2} parent=11 // pred_fallthru
          _
        // Predicated region
        $region37: #{_lambda_.2} parent=11 // pred_check
          %p337 = pneg %p255
        $region38: #{_lambda_.2} parent=11 // pred_check_branch
          %339 = sbr.rel (%p337) target = $region40
        $region39: #{_lambda_.2} parent=11 // pred_region
          _
        $region40: #{_lambda_.2} parent=11 // pred_fallthru
          _
        // Predicated region
        $region41: #{_lambda_.2} parent=11 // pred_check
          %p340 = pneg %p276
        $region42: #{_lambda_.2} parent=11 // pred_check_branch
          %342 = sbr.rel (%p340) target = $region44
        $region43: #{_lambda_.2} parent=11 // pred_region
          _
        $region44: #{_lambda_.2} parent=11 // pred_fallthru
          _
      $region12: #{_lambda_.2} parent=5 // pred_fallthru
        _
      %p343 = scmp.lt.s32.totalorder %s26, 2
      // Predicated region
      $region45: #{_lambda_.2} parent=5 // pred_check
        %p344 = pneg %p343
      $region46: #{_lambda_.2} parent=5 // pred_check_branch
        %346 = sbr.rel (%p344) target = $region48
      $region47: #{_lambda_.2} parent=5 // pred_region
        // Predicated region
        $region49: #{_lambda_.2} parent=47 // pred_check
          %p347 = pneg %p60
        $region50: #{_lambda_.2} parent=47 // pred_check_branch
          %349 = sbr.rel (%p347) target = $region52
        $region51: #{_lambda_.2} parent=47 // pred_region
          %s350 = smul.u32 64, %s34
          %p351 = scmp.lt.s32.totalorder %s33, 1
          %s352 = scalar_select %p351, %s33, 1
          %p353 = scmp.lt.s32.totalorder %s350, 63
          %s354 = scalar_select %p353, %s350, 63
          %s355 = smul.addr %s352, 64
          %s356 = sadd.s32 %s354, %s355
          %s357 = smul.addr %s356, 4
          %s358 = scalar_lea.vmem %s8, %s357
          %s359 = smul.u32 64, %s34
        $region52: #{_lambda_.2} parent=47 // pred_fallthru
          _
        // Predicated region
        $region53: #{_lambda_.2} parent=47 // pred_check
          %p360 = pneg %p81
        $region54: #{_lambda_.2} parent=47 // pred_check_branch
          %362 = sbr.rel (%p360) target = $region56
        $region55: #{_lambda_.2} parent=47 // pred_region
          _
        $region56: #{_lambda_.2} parent=47 // pred_fallthru
          _
        // Predicated region
        $region57: #{_lambda_.2} parent=47 // pred_check
          %p363 = pneg %p102
        $region58: #{_lambda_.2} parent=47 // pred_check_branch
          %365 = sbr.rel (%p363) target = $region60
        $region59: #{_lambda_.2} parent=47 // pred_region
          _
        $region60: #{_lambda_.2} parent=47 // pred_fallthru
          _
      $region48: #{_lambda_.2} parent=5 // pred_fallthru
        _
      %p366 = scmp.le.s32.totalorder 1, %s26
      %p367 = scmp.lt.s32.totalorder %s26, 3
      %p368 = pnand %p366, %p367
      %p369 = pneg %p368
      // Predicated region
      $region61: #{_lambda_.2} parent=5 // pred_check
        _
      $region62: #{_lambda_.2} parent=5 // pred_check_branch
        %371 = sbr.rel (%p368) target = $region64
      $region63: #{_lambda_.2} parent=5 // pred_region
        #allocation9 [shape = 'u8[131072]{0}', space=vmem, size = 0x20000, dematerialized = true, scoped, tag = 'FusionAdapter Buffer %fusion.1 = bf16[2,512,128]{2,1,0:T(8,128)(2,1)} fusion(%param_8.4, %param_9.4, %param_10.3, %param_11.2), kind=kLoop, calls=%fused_computation.1.clone, metadata={op_name="jit(<lambda>)/concatenate" stack_frame_id=13}']
        %s372 = ssub.s32 %s26, 1
        %s373 = smul.u32 64, %s36
        %p374 = scmp.lt.s32.totalorder %s35, 1
        %s375 = scalar_select %p374, %s35, 1
        %p376 = scmp.lt.s32.totalorder %s373, 63
        %s377 = scalar_select %p376, %s373, 63
        %s378 = smul.addr %s375, 64
        %s379 = sadd.s32 %s377, %s378
        %s380 = smul.addr %s379, 4
        %s381 = scalar_lea.vmem %s8, %s380
        %p382 = pneg %p66
        %p383 = pneg %p63
        %p384 = pneg %p87
        %p385 = pneg %p84
        %p386 = pneg %p108
        %p387 = pneg %p105
        %p388 = pneg %p129
        %p389 = pneg %p126
        %p390 = pneg %p150
        %p391 = pneg %p147
        %p392 = pneg %p171
        %p393 = pneg %p168
        %p394 = pneg %p192
        %p395 = pneg %p189
        %p396 = pneg %p213
        %p397 = pneg %p210
        %p398 = pneg %p234
        %p399 = pneg %p231
        %p400 = pneg %p255
        %p401 = pneg %p252
        %p402 = pneg %p276
        %p403 = pneg %p273
        %p404 = pneg %p304
        %p405 = pneg %p301
        %s406 = sand.u32 %s291, 1
        %s407 = scalar_lea.sflag [#allocation8], %s406
        %s408 = sand.u32 %s291, 1
        %s409 = scalar_lea.vmem [#allocation7], %s408
        %s410 = smul.u32 64, %s36
        %p411 = scmp.lt.s32.totalorder %s35, 1
        %s412 = scalar_select %p411, %s35, 1
        %p413 = scmp.lt.s32.totalorder %s410, 63
        %s414 = scalar_select %p413, %s410, 63
        %s415 = smul.addr %s412, 64
        %s416 = sadd.s32 %s414, %s415
        %s417 = smul.addr %s416, 4
        %s418 = scalar_lea.vmem %s8, %s417
        %s419 = smul.u32 64, %s36
        %s420 = sadd.s32 %s35, %s36
        %s421 = smul.addr %s36, 64
        %s422 = smul.addr %s421, 8
        %s423 = smul.addr %s36, 64
        %s424 = smul.addr %s423, 8
        %s426 = sor.u32 255, 127
        %s427 = sand.u32 %s426, 85
        %s428 = sshrl.u32 %s427, 1
        %s429 = sor.u32 %s427, %s428
        %s430 = sand.u32 51, %s429
        %s431 = sshrl.u32 %s430, 2
        %s432 = sor.u32 %s430, %s431
        %s433 = sand.u32 15, %s432
        %v434 = vld [vmem:[%s418] sm:%s433]
        %v435 = vunpack.c.l.bf16 %v434
        %v436 = vunpack.c.h.bf16 %v434
        %v437 = vlaneseq
        %v438 = vand.u32 %v437, 127
        %vm440 = vcmp.lt.s32.totalorder %v438, 39
        %v441 = vsel %vm440, %v435, %v18
        %v442 = vld [vmem:[%s10] ss:$0 sm:$0xff]
        %v443 = vunpack.i.l.bf16 %v442
        %v445 = vunpack.i.h.bf16 %v442
        %v447 = vld [vmem:[%s11] ss:$0 sm:$0xff]
        %v448 = vunpack.i.l.bf16 %v447
        %v450 = vunpack.i.h.bf16 %v447
        %452 = xla_tuple %v441, %v448
        %453 = xla_tuple %452
        %v454 = vmax.f32 %v441, %v448
        %455 = xla_tuple %v454
        %456 = xla_tuple %v454, %v443
        %457 = xla_tuple %456
        %v458 = vmax.f32 %v454, %v443
        %459 = xla_tuple %v458
        %v460 = vpack.c.bf16 0.0, %v458
        %s462 = ssub.s32 16, 1
        %463 = vst [vmem:[#allocation9] sm:%s462] %v460
        %s464 = scalar_lea.vmem %s418, 4
        %s466 = sor.u32 255, 127
        %s467 = sand.u32 %s466, 85
        %s468 = sshrl.u32 %s467, 1
        %s469 = sor.u32 %s467, %s468
        %s470 = sand.u32 51, %s469
        %s471 = sshrl.u32 %s470, 2
        %s472 = sor.u32 %s470, %s471
        %s473 = sand.u32 15, %s472
        %v474 = vld [vmem:[%s464] sm:%s473]
        %v475 = vunpack.c.l.bf16 %v474
        %v476 = vunpack.c.h.bf16 %v474
        %v477 = vlaneseq
        %v478 = vand.u32 %v477, 127
        %vm480 = vcmp.lt.s32.totalorder %v478, 39
        %v481 = vsel %vm480, %v475, %v18
        %482 = xla_tuple %v481, %v448
        %483 = xla_tuple %482
        %v484 = vmax.f32 %v481, %v448
        %485 = xla_tuple %v484
        %486 = xla_tuple %v484, %v443
        %487 = xla_tuple %486
        %v488 = vmax.f32 %v484, %v443
        %489 = xla_tuple %v488
        %s490 = scalar_lea.vmem [#allocation9], 4
        %v491 = vpack.c.bf16 0.0, %v488
        %s493 = ssub.s32 16, 1
        %494 = vst [vmem:[%s490] sm:%s493] %v491
        %s495 = scalar_lea.vmem %s418, 8
        %s497 = sor.u32 255, 127
        %s498 = sand.u32 %s497, 85
        %s499 = sshrl.u32 %s498, 1
        %s500 = sor.u32 %s498, %s499
        %s501 = sand.u32 51, %s500
        %s502 = sshrl.u32 %s501, 2
        %s503 = sor.u32 %s501, %s502
        %s504 = sand.u32 15, %s503
        %v505 = vld [vmem:[%s495] sm:%s504]
        %v506 = vunpack.c.l.bf16 %v505
        %v507 = vunpack.c.h.bf16 %v505
        %v508 = vlaneseq
        %v509 = vand.u32 %v508, 127
        %vm511 = vcmp.lt.s32.totalorder %v509, 39
        %v512 = vsel %vm511, %v506, %v18
        %513 = xla_tuple %v512, %v448
        %514 = xla_tuple %513
        %v515 = vmax.f32 %v512, %v448
        %516 = xla_tuple %v515
        %517 = xla_tuple %v515, %v443
        %518 = xla_tuple %517
        %v519 = vmax.f32 %v515, %v443
        %520 = xla_tuple %v519
        %s521 = scalar_lea.vmem [#allocation9], 8
        %v522 = vpack.c.bf16 0.0, %v519
        %s524 = ssub.s32 16, 1
        %525 = vst [vmem:[%s521] sm:%s524] %v522
        %s526 = scalar_lea.vmem %s418, 12
        %s528 = sor.u32 255, 127
        %s529 = sand.u32 %s528, 85
        %s530 = sshrl.u32 %s529, 1
        %s531 = sor.u32 %s529, %s530
        %s532 = sand.u32 51, %s531
        %s533 = sshrl.u32 %s532, 2
        %s534 = sor.u32 %s532, %s533
        %s535 = sand.u32 15, %s534
        %v536 = vld [vmem:[%s526] sm:%s535]
        %v537 = vunpack.c.l.bf16 %v536
        %v538 = vunpack.c.h.bf16 %v536
        %v539 = vlaneseq
        %v540 = vand.u32 %v539, 127
        %vm542 = vcmp.lt.s32.totalorder %v540, 39
        %v543 = vsel %vm542, %v537, %v18
        %544 = xla_tuple %v543, %v448
        %545 = xla_tuple %544
        %v546 = vmax.f32 %v543, %v448
        %547 = xla_tuple %v546
        %548 = xla_tuple %v546, %v443
        %549 = xla_tuple %548
        %v550 = vmax.f32 %v546, %v443
        %551 = xla_tuple %v550
        %s552 = scalar_lea.vmem [#allocation9], 12
        %v553 = vpack.c.bf16 0.0, %v550
        %s555 = ssub.s32 16, 1
        %556 = vst [vmem:[%s552] sm:%s555] %v553
        %s557 = scalar_lea.vmem %s418, 16
        %s559 = sor.u32 255, 127
        %s560 = sand.u32 %s559, 85
        %s561 = sshrl.u32 %s560, 1
        %s562 = sor.u32 %s560, %s561
        %s563 = sand.u32 51, %s562
        %s564 = sshrl.u32 %s563, 2
        %s565 = sor.u32 %s563, %s564
        %s566 = sand.u32 15, %s565
        %v567 = vld [vmem:[%s557] sm:%s566]
        %v568 = vunpack.c.l.bf16 %v567
        %v569 = vunpack.c.h.bf16 %v567
        %v570 = vlaneseq
        %v571 = vand.u32 %v570, 127
        %vm573 = vcmp.lt.s32.totalorder %v571, 39
        %v574 = vsel %vm573, %v568, %v18
        %575 = xla_tuple %v574, %v448
        %576 = xla_tuple %575
        %v577 = vmax.f32 %v574, %v448
        %578 = xla_tuple %v577
        %579 = xla_tuple %v577, %v443
        %580 = xla_tuple %579
        %v581 = vmax.f32 %v577, %v443
        %582 = xla_tuple %v581
        %s583 = scalar_lea.vmem [#allocation9], 16
        %v584 = vpack.c.bf16 0.0, %v581
        %s586 = ssub.s32 16, 1
        %587 = vst [vmem:[%s583] sm:%s586] %v584
        %s588 = scalar_lea.vmem %s418, 20
        %s590 = sor.u32 255, 127
        %s591 = sand.u32 %s590, 85
        %s592 = sshrl.u32 %s591, 1
        %s593 = sor.u32 %s591, %s592
        %s594 = sand.u32 51, %s593
        %s595 = sshrl.u32 %s594, 2
        %s596 = sor.u32 %s594, %s595
        %s597 = sand.u32 15, %s596
        %v598 = vld [vmem:[%s588] sm:%s597]
        %v599 = vunpack.c.l.bf16 %v598
        %v600 = vunpack.c.h.bf16 %v598
        %v601 = vlaneseq
        %v602 = vand.u32 %v601, 127
        %vm604 = vcmp.lt.s32.totalorder %v602, 39
        %v605 = vsel %vm604, %v599, %v18
        %606 = xla_tuple %v605, %v448
        %607 = xla_tuple %606
        %v608 = vmax.f32 %v605, %v448
        %609 = xla_tuple %v608
        %610 = xla_tuple %v608, %v443
        %611 = xla_tuple %610
        %v612 = vmax.f32 %v608, %v443
        %613 = xla_tuple %v612
        %s614 = scalar_lea.vmem [#allocation9], 20
        %v615 = vpack.c.bf16 0.0, %v612
        %s617 = ssub.s32 16, 1
        %618 = vst [vmem:[%s614] sm:%s617] %v615
        %s619 = scalar_lea.vmem %s418, 24
        %s621 = sor.u32 255, 127
        %s622 = sand.u32 %s621, 85
        %s623 = sshrl.u32 %s622, 1
        %s624 = sor.u32 %s622, %s623
        %s625 = sand.u32 51, %s624
        %s626 = sshrl.u32 %s625, 2
        %s627 = sor.u32 %s625, %s626
        %s628 = sand.u32 15, %s627
        %v629 = vld [vmem:[%s619] sm:%s628]
        %v630 = vunpack.c.l.bf16 %v629
        %v631 = vunpack.c.h.bf16 %v629
        %v632 = vlaneseq
        %v633 = vand.u32 %v632, 127
        %vm635 = vcmp.lt.s32.totalorder %v633, 39
        %v636 = vsel %vm635, %v630, %v18
        %637 = xla_tuple %v636, %v448
        %638 = xla_tuple %637
        %v639 = vmax.f32 %v636, %v448
        %640 = xla_tuple %v639
        %641 = xla_tuple %v639, %v443
        %642 = xla_tuple %641
        %v643 = vmax.f32 %v639, %v443
        %644 = xla_tuple %v643
        %s645 = scalar_lea.vmem [#allocation9], 24
        %v646 = vpack.c.bf16 0.0, %v643
        %s648 = ssub.s32 16, 1
        %649 = vst [vmem:[%s645] sm:%s648] %v646
        %s650 = scalar_lea.vmem %s418, 28
        %s652 = sor.u32 255, 127
        %s653 = sand.u32 %s652, 85
        %s654 = sshrl.u32 %s653, 1
        %s655 = sor.u32 %s653, %s654
        %s656 = sand.u32 51, %s655
        %s657 = sshrl.u32 %s656, 2
        %s658 = sor.u32 %s656, %s657
        %s659 = sand.u32 15, %s658
        %v660 = vld [vmem:[%s650] sm:%s659]
        %v661 = vunpack.c.l.bf16 %v660
        %v662 = vunpack.c.h.bf16 %v660
        %v663 = vlaneseq
        %v664 = vand.u32 %v663, 127
        %vm666 = vcmp.lt.s32.totalorder %v664, 39
        %v667 = vsel %vm666, %v661, %v18
        %668 = xla_tuple %v667, %v448
        %669 = xla_tuple %668
        %v670 = vmax.f32 %v667, %v448
        %671 = xla_tuple %v670
        %672 = xla_tuple %v670, %v443
        %673 = xla_tuple %672
        %v674 = vmax.f32 %v670, %v443
        %675 = xla_tuple %v674
        %s676 = scalar_lea.vmem [#allocation9], 28
        %v677 = vpack.c.bf16 0.0, %v674
        %s679 = ssub.s32 16, 1
        %680 = vst [vmem:[%s676] sm:%s679] %v677
        %s681 = scalar_lea.vmem %s418, 32
        %s683 = sor.u32 255, 127
        %s684 = sand.u32 %s683, 85
        %s685 = sshrl.u32 %s684, 1
        %s686 = sor.u32 %s684, %s685
        %s687 = sand.u32 51, %s686
        %s688 = sshrl.u32 %s687, 2
        %s689 = sor.u32 %s687, %s688
        %s690 = sand.u32 15, %s689
        %v691 = vld [vmem:[%s681] sm:%s690]
        %v692 = vunpack.c.l.bf16 %v691
        %v693 = vunpack.c.h.bf16 %v691
        %v694 = vlaneseq
        %v695 = vand.u32 %v694, 127
        %vm697 = vcmp.lt.s32.totalorder %v695, 39
        %v698 = vsel %vm697, %v692, %v18
        %699 = xla_tuple %v698, %v448
        %700 = xla_tuple %699
        %v701 = vmax.f32 %v698, %v448
        %702 = xla_tuple %v701
        %703 = xla_tuple %v701, %v443
        %704 = xla_tuple %703
        %v705 = vmax.f32 %v701, %v443
        %706 = xla_tuple %v705
        %s707 = scalar_lea.vmem [#allocation9], 32
        %v708 = vpack.c.bf16 0.0, %v705
        %s710 = ssub.s32 16, 1
        %711 = vst [vmem:[%s707] sm:%s710] %v708
        %s712 = scalar_lea.vmem %s418, 36
        %s714 = sor.u32 255, 127
        %s715 = sand.u32 %s714, 85
        %s716 = sshrl.u32 %s715, 1
        %s717 = sor.u32 %s715, %s716
        %s718 = sand.u32 51, %s717
        %s719 = sshrl.u32 %s718, 2
        %s720 = sor.u32 %s718, %s719
        %s721 = sand.u32 15, %s720
        %v722 = vld [vmem:[%s712] sm:%s721]
        %v723 = vunpack.c.l.bf16 %v722
        %v724 = vunpack.c.h.bf16 %v722
        %v725 = vlaneseq
        %v726 = vand.u32 %v725, 127
        %vm728 = vcmp.lt.s32.totalorder %v726, 39
        %v729 = vsel %vm728, %v723, %v18
        %730 = xla_tuple %v729, %v448
        %731 = xla_tuple %730
        %v732 = vmax.f32 %v729, %v448
        %733 = xla_tuple %v732
        %734 = xla_tuple %v732, %v443
        %735 = xla_tuple %734
        %v736 = vmax.f32 %v732, %v443
        %737 = xla_tuple %v736
        %s738 = scalar_lea.vmem [#allocation9], 36
        %v739 = vpack.c.bf16 0.0, %v736
        %s741 = ssub.s32 16, 1
        %742 = vst [vmem:[%s738] sm:%s741] %v739
        %s743 = scalar_lea.vmem %s418, 40
        %s745 = sor.u32 255, 127
        %s746 = sand.u32 %s745, 85
        %s747 = sshrl.u32 %s746, 1
        %s748 = sor.u32 %s746, %s747
        %s749 = sand.u32 51, %s748
        %s750 = sshrl.u32 %s749, 2
        %s751 = sor.u32 %s749, %s750
        %s752 = sand.u32 15, %s751
        %v753 = vld [vmem:[%s743] sm:%s752]
        %v754 = vunpack.c.l.bf16 %v753
        %v755 = vunpack.c.h.bf16 %v753
        %v756 = vlaneseq
        %v757 = vand.u32 %v756, 127
        %vm759 = vcmp.lt.s32.totalorder %v757, 39
        %v760 = vsel %vm759, %v754, %v18
        %761 = xla_tuple %v760, %v448
        %762 = xla_tuple %761
        %v763 = vmax.f32 %v760, %v448
        %764 = xla_tuple %v763
        %765 = xla_tuple %v763, %v443
        %766 = xla_tuple %765
        %v767 = vmax.f32 %v763, %v443
        %768 = xla_tuple %v767
        %s769 = scalar_lea.vmem [#allocation9], 40
        %v770 = vpack.c.bf16 0.0, %v767
        %s772 = ssub.s32 16, 1
        %773 = vst [vmem:[%s769] sm:%s772] %v770
        %s774 = scalar_lea.vmem %s418, 44
        %s776 = sor.u32 255, 127
        %s777 = sand.u32 %s776, 85
        %s778 = sshrl.u32 %s777, 1
        %s779 = sor.u32 %s777, %s778
        %s780 = sand.u32 51, %s779
        %s781 = sshrl.u32 %s780, 2
        %s782 = sor.u32 %s780, %s781
        %s783 = sand.u32 15, %s782
        %v784 = vld [vmem:[%s774] sm:%s783]
        %v785 = vunpack.c.l.bf16 %v784
        %v786 = vunpack.c.h.bf16 %v784
        %v787 = vlaneseq
        %v788 = vand.u32 %v787, 127
        %vm790 = vcmp.lt.s32.totalorder %v788, 39
        %v791 = vsel %vm790, %v785, %v18
        %792 = xla_tuple %v791, %v448
        %793 = xla_tuple %792
        %v794 = vmax.f32 %v791, %v448
        %795 = xla_tuple %v794
        %796 = xla_tuple %v794, %v443
        %797 = xla_tuple %796
        %v798 = vmax.f32 %v794, %v443
        %799 = xla_tuple %v798
        %s800 = scalar_lea.vmem [#allocation9], 44
        %v801 = vpack.c.bf16 0.0, %v798
        %s803 = ssub.s32 16, 1
        %804 = vst [vmem:[%s800] sm:%s803] %v801
        %s805 = scalar_lea.vmem %s418, 48
        %s807 = sor.u32 255, 127
        %s808 = sand.u32 %s807, 85
        %s809 = sshrl.u32 %s808, 1
        %s810 = sor.u32 %s808, %s809
        %s811 = sand.u32 51, %s810
        %s812 = sshrl.u32 %s811, 2
        %s813 = sor.u32 %s811, %s812
        %s814 = sand.u32 15, %s813
        %v815 = vld [vmem:[%s805] sm:%s814]
        %v816 = vunpack.c.l.bf16 %v815
        %v817 = vunpack.c.h.bf16 %v815
        %v818 = vlaneseq
        %v819 = vand.u32 %v818, 127
        %vm821 = vcmp.lt.s32.totalorder %v819, 39
        %v822 = vsel %vm821, %v816, %v18
        %823 = xla_tuple %v822, %v448
        %824 = xla_tuple %823
        %v825 = vmax.f32 %v822, %v448
        %826 = xla_tuple %v825
        %827 = xla_tuple %v825, %v443
        %828 = xla_tuple %827
        %v829 = vmax.f32 %v825, %v443
        %830 = xla_tuple %v829
        %s831 = scalar_lea.vmem [#allocation9], 48
        %v832 = vpack.c.bf16 0.0, %v829
        %s834 = ssub.s32 16, 1
        %835 = vst [vmem:[%s831] sm:%s834] %v832
        %s836 = scalar_lea.vmem %s418, 52
        %s838 = sor.u32 255, 127
        %s839 = sand.u32 %s838, 85
        %s840 = sshrl.u32 %s839, 1
        %s841 = sor.u32 %s839, %s840
        %s842 = sand.u32 51, %s841
        %s843 = sshrl.u32 %s842, 2
        %s844 = sor.u32 %s842, %s843
        %s845 = sand.u32 15, %s844
        %v846 = vld [vmem:[%s836] sm:%s845]
        %v847 = vunpack.c.l.bf16 %v846
        %v848 = vunpack.c.h.bf16 %v846
        %v849 = vlaneseq
        %v850 = vand.u32 %v849, 127
        %vm852 = vcmp.lt.s32.totalorder %v850, 39
        %v853 = vsel %vm852, %v847, %v18
        %854 = xla_tuple %v853, %v448
        %855 = xla_tuple %854
        %v856 = vmax.f32 %v853, %v448
        %857 = xla_tuple %v856
        %858 = xla_tuple %v856, %v443
        %859 = xla_tuple %858
        %v860 = vmax.f32 %v856, %v443
        %861 = xla_tuple %v860
        %s862 = scalar_lea.vmem [#allocation9], 52
        %v863 = vpack.c.bf16 0.0, %v860
        %s865 = ssub.s32 16, 1
        %866 = vst [vmem:[%s862] sm:%s865] %v863
        %s867 = scalar_lea.vmem %s418, 56
        %s869 = sor.u32 255, 127
        %s870 = sand.u32 %s869, 85
        %s871 = sshrl.u32 %s870, 1
        %s872 = sor.u32 %s870, %s871
        %s873 = sand.u32 51, %s872
        %s874 = sshrl.u32 %s873, 2
        %s875 = sor.u32 %s873, %s874
        %s876 = sand.u32 15, %s875
        %v877 = vld [vmem:[%s867] sm:%s876]
        %v878 = vunpack.c.l.bf16 %v877
        %v879 = vunpack.c.h.bf16 %v877
        %v880 = vlaneseq
        %v881 = vand.u32 %v880, 127
        %vm883 = vcmp.lt.s32.totalorder %v881, 39
        %v884 = vsel %vm883, %v878, %v18
        %885 = xla_tuple %v884, %v448
        %886 = xla_tuple %885
        %v887 = vmax.f32 %v884, %v448
        %888 = xla_tuple %v887
        %889 = xla_tuple %v887, %v443
        %890 = xla_tuple %889
        %v891 = vmax.f32 %v887, %v443
        %892 = xla_tuple %v891
        %s893 = scalar_lea.vmem [#allocation9], 56
        %v894 = vpack.c.bf16 0.0, %v891
        %s896 = ssub.s32 16, 1
        %897 = vst [vmem:[%s893] sm:%s896] %v894
        %s898 = scalar_lea.vmem %s418, 60
        %s900 = sor.u32 255, 127
        %s901 = sand.u32 %s900, 85
        %s902 = sshrl.u32 %s901, 1
        %s903 = sor.u32 %s901, %s902
        %s904 = sand.u32 51, %s903
        %s905 = sshrl.u32 %s904, 2
        %s906 = sor.u32 %s904, %s905
        %s907 = sand.u32 15, %s906
        %v908 = vld [vmem:[%s898] sm:%s907]
        %v909 = vunpack.c.l.bf16 %v908
        %v910 = vunpack.c.h.bf16 %v908
        %v911 = vlaneseq
        %v912 = vand.u32 %v911, 127
        %vm914 = vcmp.lt.s32.totalorder %v912, 39
        %v915 = vsel %vm914, %v909, %v18
        %916 = xla_tuple %v915, %v448
        %917 = xla_tuple %916
        %v918 = vmax.f32 %v915, %v448
        %919 = xla_tuple %v918
        %920 = xla_tuple %v918, %v443
        %921 = xla_tuple %920
        %v922 = vmax.f32 %v918, %v443
        %923 = xla_tuple %v922
        %s924 = scalar_lea.vmem [#allocation9], 60
        %v925 = vpack.c.bf16 0.0, %v922
        %s927 = ssub.s32 16, 1
        %928 = vst [vmem:[%s924] sm:%s927] %v925
        %s929 = scalar_lea.vmem %s418, 64
        %s931 = sor.u32 255, 127
        %s932 = sand.u32 %s931, 85
        %s933 = sshrl.u32 %s932, 1
        %s934 = sor.u32 %s932, %s933
        %s935 = sand.u32 51, %s934
        %s936 = sshrl.u32 %s935, 2
        %s937 = sor.u32 %s935, %s936
        %s938 = sand.u32 15, %s937
        %v939 = vld [vmem:[%s929] sm:%s938]
        %v940 = vunpack.c.l.bf16 %v939
        %v941 = vunpack.c.h.bf16 %v939
        %v942 = vlaneseq
        %v943 = vand.u32 %v942, 127
        %vm945 = vcmp.lt.s32.totalorder %v943, 39
        %v946 = vsel %vm945, %v940, %v18
        %947 = xla_tuple %v946, %v448
        %948 = xla_tuple %947
        %v949 = vmax.f32 %v946, %v448
        %950 = xla_tuple %v949
        %951 = xla_tuple %v949, %v443
        %952 = xla_tuple %951
        %v953 = vmax.f32 %v949, %v443
        %954 = xla_tuple %v953
        %s955 = scalar_lea.vmem [#allocation9], 64
        %v956 = vpack.c.bf16 0.0, %v953
        %s958 = ssub.s32 16, 1
        %959 = vst [vmem:[%s955] sm:%s958] %v956
        %s960 = scalar_lea.vmem %s418, 68
        %s962 = sor.u32 255, 127
        %s963 = sand.u32 %s962, 85
        %s964 = sshrl.u32 %s963, 1
        %s965 = sor.u32 %s963, %s964
        %s966 = sand.u32 51, %s965
        %s967 = sshrl.u32 %s966, 2
        %s968 = sor.u32 %s966, %s967
        %s969 = sand.u32 15, %s968
        %v970 = vld [vmem:[%s960] sm:%s969]
        %v971 = vunpack.c.l.bf16 %v970
        %v972 = vunpack.c.h.bf16 %v970
        %v973 = vlaneseq
        %v974 = vand.u32 %v973, 127
        %vm976 = vcmp.lt.s32.totalorder %v974, 39
        %v977 = vsel %vm976, %v971, %v18
        %978 = xla_tuple %v977, %v448
        %979 = xla_tuple %978
        %v980 = vmax.f32 %v977, %v448
        %981 = xla_tuple %v980
        %982 = xla_tuple %v980, %v443
        %983 = xla_tuple %982
        %v984 = vmax.f32 %v980, %v443
        %985 = xla_tuple %v984
        %s986 = scalar_lea.vmem [#allocation9], 68
        %v987 = vpack.c.bf16 0.0, %v984
        %s989 = ssub.s32 16, 1
        %990 = vst [vmem:[%s986] sm:%s989] %v987
        %s991 = scalar_lea.vmem %s418, 72
        %s993 = sor.u32 255, 127
        %s994 = sand.u32 %s993, 85
        %s995 = sshrl.u32 %s994, 1
        %s996 = sor.u32 %s994, %s995
        %s997 = sand.u32 51, %s996
        %s998 = sshrl.u32 %s997, 2
        %s999 = sor.u32 %s997, %s998
        %s1000 = sand.u32 15, %s999
        %v1001 = vld [vmem:[%s991] sm:%s1000]
        %v1002 = vunpack.c.l.bf16 %v1001
        %v1003 = vunpack.c.h.bf16 %v1001
        %v1004 = vlaneseq
        %v1005 = vand.u32 %v1004, 127
        %vm1007 = vcmp.lt.s32.totalorder %v1005, 39
        %v1008 = vsel %vm1007, %v1002, %v18
        %1009 = xla_tuple %v1008, %v448
        %1010 = xla_tuple %1009
        %v1011 = vmax.f32 %v1008, %v448
        %1012 = xla_tuple %v1011
        %1013 = xla_tuple %v1011, %v443
        %1014 = xla_tuple %1013
        %v1015 = vmax.f32 %v1011, %v443
        %1016 = xla_tuple %v1015
        %s1017 = scalar_lea.vmem [#allocation9], 72
        %v1018 = vpack.c.bf16 0.0, %v1015
        %s1020 = ssub.s32 16, 1
        %1021 = vst [vmem:[%s1017] sm:%s1020] %v1018
        %s1022 = scalar_lea.vmem %s418, 76
        %s1024 = sor.u32 255, 127
        %s1025 = sand.u32 %s1024, 85
        %s1026 = sshrl.u32 %s1025, 1
        %s1027 = sor.u32 %s1025, %s1026
        %s1028 = sand.u32 51, %s1027
        %s1029 = sshrl.u32 %s1028, 2
        %s1030 = sor.u32 %s1028, %s1029
        %s1031 = sand.u32 15, %s1030
        %v1032 = vld [vmem:[%s1022] sm:%s1031]
        %v1033 = vunpack.c.l.bf16 %v1032
        %v1034 = vunpack.c.h.bf16 %v1032
        %v1035 = vlaneseq
        %v1036 = vand.u32 %v1035, 127
        %vm1038 = vcmp.lt.s32.totalorder %v1036, 39
        %v1039 = vsel %vm1038, %v1033, %v18
        %1040 = xla_tuple %v1039, %v448
        %1041 = xla_tuple %1040
        %v1042 = vmax.f32 %v1039, %v448
        %1043 = xla_tuple %v1042
        %1044 = xla_tuple %v1042, %v443
        %1045 = xla_tuple %1044
        %v1046 = vmax.f32 %v1042, %v443
        %1047 = xla_tuple %v1046
        %s1048 = scalar_lea.vmem [#allocation9], 76
        %v1049 = vpack.c.bf16 0.0, %v1046
        %s1051 = ssub.s32 16, 1
        %1052 = vst [vmem:[%s1048] sm:%s1051] %v1049
        %s1053 = scalar_lea.vmem %s418, 80
        %s1055 = sor.u32 255, 127
        %s1056 = sand.u32 %s1055, 85
        %s1057 = sshrl.u32 %s1056, 1
        %s1058 = sor.u32 %s1056, %s1057
        %s1059 = sand.u32 51, %s1058
        %s1060 = sshrl.u32 %s1059, 2
        %s1061 = sor.u32 %s1059, %s1060
        %s1062 = sand.u32 15, %s1061
        %v1063 = vld [vmem:[%s1053] sm:%s1062]
        %v1064 = vunpack.c.l.bf16 %v1063
        %v1065 = vunpack.c.h.bf16 %v1063
        %v1066 = vlaneseq
        %v1067 = vand.u32 %v1066, 127
        %vm1069 = vcmp.lt.s32.totalorder %v1067, 39
        %v1070 = vsel %vm1069, %v1064, %v18
        %1071 = xla_tuple %v1070, %v448
        %1072 = xla_tuple %1071
        %v1073 = vmax.f32 %v1070, %v448
        %1074 = xla_tuple %v1073
        %1075 = xla_tuple %v1073, %v443
        %1076 = xla_tuple %1075
        %v1077 = vmax.f32 %v1073, %v443
        %1078 = xla_tuple %v1077
        %s1079 = scalar_lea.vmem [#allocation9], 80
        %v1080 = vpack.c.bf16 0.0, %v1077
        %s1082 = ssub.s32 16, 1
        %1083 = vst [vmem:[%s1079] sm:%s1082] %v1080
        %s1084 = scalar_lea.vmem %s418, 84
        %s1086 = sor.u32 255, 127
        %s1087 = sand.u32 %s1086, 85
        %s1088 = sshrl.u32 %s1087, 1
        %s1089 = sor.u32 %s1087, %s1088
        %s1090 = sand.u32 51, %s1089
        %s1091 = sshrl.u32 %s1090, 2
        %s1092 = sor.u32 %s1090, %s1091
        %s1093 = sand.u32 15, %s1092
        %v1094 = vld [vmem:[%s1084] sm:%s1093]
        %v1095 = vunpack.c.l.bf16 %v1094
        %v1096 = vunpack.c.h.bf16 %v1094
        %v1097 = vlaneseq
        %v1098 = vand.u32 %v1097, 127
        %vm1100 = vcmp.lt.s32.totalorder %v1098, 39
        %v1101 = vsel %vm1100, %v1095, %v18
        %1102 = xla_tuple %v1101, %v448
        %1103 = xla_tuple %1102
        %v1104 = vmax.f32 %v1101, %v448
        %1105 = xla_tuple %v1104
        %1106 = xla_tuple %v1104, %v443
        %1107 = xla_tuple %1106
        %v1108 = vmax.f32 %v1104, %v443
        %1109 = xla_tuple %v1108
        %s1110 = scalar_lea.vmem [#allocation9], 84
        %v1111 = vpack.c.bf16 0.0, %v1108
        %s1113 = ssub.s32 16, 1
        %1114 = vst [vmem:[%s1110] sm:%s1113] %v1111
        %s1115 = scalar_lea.vmem %s418, 88
        %s1117 = sor.u32 255, 127
        %s1118 = sand.u32 %s1117, 85
        %s1119 = sshrl.u32 %s1118, 1
        %s1120 = sor.u32 %s1118, %s1119
        %s1121 = sand.u32 51, %s1120
        %s1122 = sshrl.u32 %s1121, 2
        %s1123 = sor.u32 %s1121, %s1122
        %s1124 = sand.u32 15, %s1123
        %v1125 = vld [vmem:[%s1115] sm:%s1124]
        %v1126 = vunpack.c.l.bf16 %v1125
        %v1127 = vunpack.c.h.bf16 %v1125
        %v1128 = vlaneseq
        %v1129 = vand.u32 %v1128, 127
        %vm1131 = vcmp.lt.s32.totalorder %v1129, 39
        %v1132 = vsel %vm1131, %v1126, %v18
        %1133 = xla_tuple %v1132, %v448
        %1134 = xla_tuple %1133
        %v1135 = vmax.f32 %v1132, %v448
        %1136 = xla_tuple %v1135
        %1137 = xla_tuple %v1135, %v443
        %1138 = xla_tuple %1137
        %v1139 = vmax.f32 %v1135, %v443
        %1140 = xla_tuple %v1139
        %s1141 = scalar_lea.vmem [#allocation9], 88
        %v1142 = vpack.c.bf16 0.0, %v1139
        %s1144 = ssub.s32 16, 1
        %1145 = vst [vmem:[%s1141] sm:%s1144] %v1142
        %s1146 = scalar_lea.vmem %s418, 92
        %s1148 = sor.u32 255, 127
        %s1149 = sand.u32 %s1148, 85
        %s1150 = sshrl.u32 %s1149, 1
        %s1151 = sor.u32 %s1149, %s1150
        %s1152 = sand.u32 51, %s1151
        %s1153 = sshrl.u32 %s1152, 2
        %s1154 = sor.u32 %s1152, %s1153
        %s1155 = sand.u32 15, %s1154
        %v1156 = vld [vmem:[%s1146] sm:%s1155]
        %v1157 = vunpack.c.l.bf16 %v1156
        %v1158 = vunpack.c.h.bf16 %v1156
        %v1159 = vlaneseq
        %v1160 = vand.u32 %v1159, 127
        %vm1162 = vcmp.lt.s32.totalorder %v1160, 39
        %v1163 = vsel %vm1162, %v1157, %v18
        %1164 = xla_tuple %v1163, %v448
        %1165 = xla_tuple %1164
        %v1166 = vmax.f32 %v1163, %v448
        %1167 = xla_tuple %v1166
        %1168 = xla_tuple %v1166, %v443
        %1169 = xla_tuple %1168
        %v1170 = vmax.f32 %v1166, %v443
        %1171 = xla_tuple %v1170
        %s1172 = scalar_lea.vmem [#allocation9], 92
        %v1173 = vpack.c.bf16 0.0, %v1170
        %s1175 = ssub.s32 16, 1
        %1176 = vst [vmem:[%s1172] sm:%s1175] %v1173
        %s1177 = scalar_lea.vmem %s418, 96
        %s1179 = sor.u32 255, 127
        %s1180 = sand.u32 %s1179, 85
        %s1181 = sshrl.u32 %s1180, 1
        %s1182 = sor.u32 %s1180, %s1181
        %s1183 = sand.u32 51, %s1182
        %s1184 = sshrl.u32 %s1183, 2
        %s1185 = sor.u32 %s1183, %s1184
        %s1186 = sand.u32 15, %s1185
        %v1187 = vld [vmem:[%s1177] sm:%s1186]
        %v1188 = vunpack.c.l.bf16 %v1187
        %v1189 = vunpack.c.h.bf16 %v1187
        %v1190 = vlaneseq
        %v1191 = vand.u32 %v1190, 127
        %vm1193 = vcmp.lt.s32.totalorder %v1191, 39
        %v1194 = vsel %vm1193, %v1188, %v18
        %1195 = xla_tuple %v1194, %v448
        %1196 = xla_tuple %1195
        %v1197 = vmax.f32 %v1194, %v448
        %1198 = xla_tuple %v1197
        %1199 = xla_tuple %v1197, %v443
        %1200 = xla_tuple %1199
        %v1201 = vmax.f32 %v1197, %v443
        %1202 = xla_tuple %v1201
        %s1203 = scalar_lea.vmem [#allocation9], 96
        %v1204 = vpack.c.bf16 0.0, %v1201
        %s1206 = ssub.s32 16, 1
        %1207 = vst [vmem:[%s1203] sm:%s1206] %v1204
        %s1208 = scalar_lea.vmem %s418, 100
        %s1210 = sor.u32 255, 127
        %s1211 = sand.u32 %s1210, 85
        %s1212 = sshrl.u32 %s1211, 1
        %s1213 = sor.u32 %s1211, %s1212
        %s1214 = sand.u32 51, %s1213
        %s1215 = sshrl.u32 %s1214, 2
        %s1216 = sor.u32 %s1214, %s1215
        %s1217 = sand.u32 15, %s1216
        %v1218 = vld [vmem:[%s1208] sm:%s1217]
        %v1219 = vunpack.c.l.bf16 %v1218
        %v1220 = vunpack.c.h.bf16 %v1218
        %v1221 = vlaneseq
        %v1222 = vand.u32 %v1221, 127
        %vm1224 = vcmp.lt.s32.totalorder %v1222, 39
        %v1225 = vsel %vm1224, %v1219, %v18
        %1226 = xla_tuple %v1225, %v448
        %1227 = xla_tuple %1226
        %v1228 = vmax.f32 %v1225, %v448
        %1229 = xla_tuple %v1228
        %1230 = xla_tuple %v1228, %v443
        %1231 = xla_tuple %1230
        %v1232 = vmax.f32 %v1228, %v443
        %1233 = xla_tuple %v1232
        %s1234 = scalar_lea.vmem [#allocation9], 100
        %v1235 = vpack.c.bf16 0.0, %v1232
        %s1237 = ssub.s32 16, 1
        %1238 = vst [vmem:[%s1234] sm:%s1237] %v1235
        %s1239 = scalar_lea.vmem %s418, 104
        %s1241 = sor.u32 255, 127
        %s1242 = sand.u32 %s1241, 85
        %s1243 = sshrl.u32 %s1242, 1
        %s1244 = sor.u32 %s1242, %s1243
        %s1245 = sand.u32 51, %s1244
        %s1246 = sshrl.u32 %s1245, 2
        %s1247 = sor.u32 %s1245, %s1246
        %s1248 = sand.u32 15, %s1247
        %v1249 = vld [vmem:[%s1239] sm:%s1248]
        %v1250 = vunpack.c.l.bf16 %v1249
        %v1251 = vunpack.c.h.bf16 %v1249
        %v1252 = vlaneseq
        %v1253 = vand.u32 %v1252, 127
        %vm1255 = vcmp.lt.s32.totalorder %v1253, 39
        %v1256 = vsel %vm1255, %v1250, %v18
        %1257 = xla_tuple %v1256, %v448
        %1258 = xla_tuple %1257
        %v1259 = vmax.f32 %v1256, %v448
        %1260 = xla_tuple %v1259
        %1261 = xla_tuple %v1259, %v443
        %1262 = xla_tuple %1261
        %v1263 = vmax.f32 %v1259, %v443
        %1264 = xla_tuple %v1263
        %s1265 = scalar_lea.vmem [#allocation9], 104
        %v1266 = vpack.c.bf16 0.0, %v1263
        %s1268 = ssub.s32 16, 1
        %1269 = vst [vmem:[%s1265] sm:%s1268] %v1266
        %s1270 = scalar_lea.vmem %s418, 108
        %s1272 = sor.u32 255, 127
        %s1273 = sand.u32 %s1272, 85
        %s1274 = sshrl.u32 %s1273, 1
        %s1275 = sor.u32 %s1273, %s1274
        %s1276 = sand.u32 51, %s1275
        %s1277 = sshrl.u32 %s1276, 2
        %s1278 = sor.u32 %s1276, %s1277
        %s1279 = sand.u32 15, %s1278
        %v1280 = vld [vmem:[%s1270] sm:%s1279]
        %v1281 = vunpack.c.l.bf16 %v1280
        %v1282 = vunpack.c.h.bf16 %v1280
        %v1283 = vlaneseq
        %v1284 = vand.u32 %v1283, 127
        %vm1286 = vcmp.lt.s32.totalorder %v1284, 39
        %v1287 = vsel %vm1286, %v1281, %v18
        %1288 = xla_tuple %v1287, %v448
        %1289 = xla_tuple %1288
        %v1290 = vmax.f32 %v1287, %v448
        %1291 = xla_tuple %v1290
        %1292 = xla_tuple %v1290, %v443
        %1293 = xla_tuple %1292
        %v1294 = vmax.f32 %v1290, %v443
        %1295 = xla_tuple %v1294
        %s1296 = scalar_lea.vmem [#allocation9], 108
        %v1297 = vpack.c.bf16 0.0, %v1294
        %s1299 = ssub.s32 16, 1
        %1300 = vst [vmem:[%s1296] sm:%s1299] %v1297
        %s1301 = scalar_lea.vmem %s418, 112
        %s1303 = sor.u32 255, 127
        %s1304 = sand.u32 %s1303, 85
        %s1305 = sshrl.u32 %s1304, 1
        %s1306 = sor.u32 %s1304, %s1305
        %s1307 = sand.u32 51, %s1306
        %s1308 = sshrl.u32 %s1307, 2
        %s1309 = sor.u32 %s1307, %s1308
        %s1310 = sand.u32 15, %s1309
        %v1311 = vld [vmem:[%s1301] sm:%s1310]
        %v1312 = vunpack.c.l.bf16 %v1311
        %v1313 = vunpack.c.h.bf16 %v1311
        %v1314 = vlaneseq
        %v1315 = vand.u32 %v1314, 127
        %vm1317 = vcmp.lt.s32.totalorder %v1315, 39
        %v1318 = vsel %vm1317, %v1312, %v18
        %1319 = xla_tuple %v1318, %v448
        %1320 = xla_tuple %1319
        %v1321 = vmax.f32 %v1318, %v448
        %1322 = xla_tuple %v1321
        %1323 = xla_tuple %v1321, %v443
        %1324 = xla_tuple %1323
        %v1325 = vmax.f32 %v1321, %v443
        %1326 = xla_tuple %v1325
        %s1327 = scalar_lea.vmem [#allocation9], 112
        %v1328 = vpack.c.bf16 0.0, %v1325
        %s1330 = ssub.s32 16, 1
        %1331 = vst [vmem:[%s1327] sm:%s1330] %v1328
        %s1332 = scalar_lea.vmem %s418, 116
        %s1334 = sor.u32 255, 127
        %s1335 = sand.u32 %s1334, 85
        %s1336 = sshrl.u32 %s1335, 1
        %s1337 = sor.u32 %s1335, %s1336
        %s1338 = sand.u32 51, %s1337
        %s1339 = sshrl.u32 %s1338, 2
        %s1340 = sor.u32 %s1338, %s1339
        %s1341 = sand.u32 15, %s1340
        %v1342 = vld [vmem:[%s1332] sm:%s1341]
        %v1343 = vunpack.c.l.bf16 %v1342
        %v1344 = vunpack.c.h.bf16 %v1342
        %v1345 = vlaneseq
        %v1346 = vand.u32 %v1345, 127
        %vm1348 = vcmp.lt.s32.totalorder %v1346, 39
        %v1349 = vsel %vm1348, %v1343, %v18
        %1350 = xla_tuple %v1349, %v448
        %1351 = xla_tuple %1350
        %v1352 = vmax.f32 %v1349, %v448
        %1353 = xla_tuple %v1352
        %1354 = xla_tuple %v1352, %v443
        %1355 = xla_tuple %1354
        %v1356 = vmax.f32 %v1352, %v443
        %1357 = xla_tuple %v1356
        %s1358 = scalar_lea.vmem [#allocation9], 116
        %v1359 = vpack.c.bf16 0.0, %v1356
        %s1361 = ssub.s32 16, 1
        %1362 = vst [vmem:[%s1358] sm:%s1361] %v1359
        %s1363 = scalar_lea.vmem %s418, 120
        %s1365 = sor.u32 255, 127
        %s1366 = sand.u32 %s1365, 85
        %s1367 = sshrl.u32 %s1366, 1
        %s1368 = sor.u32 %s1366, %s1367
        %s1369 = sand.u32 51, %s1368
        %s1370 = sshrl.u32 %s1369, 2
        %s1371 = sor.u32 %s1369, %s1370
        %s1372 = sand.u32 15, %s1371
        %v1373 = vld [vmem:[%s1363] sm:%s1372]
        %v1374 = vunpack.c.l.bf16 %v1373
        %v1375 = vunpack.c.h.bf16 %v1373
        %v1376 = vlaneseq
        %v1377 = vand.u32 %v1376, 127
        %vm1379 = vcmp.lt.s32.totalorder %v1377, 39
        %v1380 = vsel %vm1379, %v1374, %v18
        %1381 = xla_tuple %v1380, %v448
        %1382 = xla_tuple %1381
        %v1383 = vmax.f32 %v1380, %v448
        %1384 = xla_tuple %v1383
        %1385 = xla_tuple %v1383, %v443
        %1386 = xla_tuple %1385
        %v1387 = vmax.f32 %v1383, %v443
        %1388 = xla_tuple %v1387
        %s1389 = scalar_lea.vmem [#allocation9], 120
        %v1390 = vpack.c.bf16 0.0, %v1387
        %s1392 = ssub.s32 16, 1
        %1393 = vst [vmem:[%s1389] sm:%s1392] %v1390
        %s1394 = scalar_lea.vmem %s418, 124
        %s1396 = sor.u32 255, 127
        %s1397 = sand.u32 %s1396, 85
        %s1398 = sshrl.u32 %s1397, 1
        %s1399 = sor.u32 %s1397, %s1398
        %s1400 = sand.u32 51, %s1399
        %s1401 = sshrl.u32 %s1400, 2
        %s1402 = sor.u32 %s1400, %s1401
        %s1403 = sand.u32 15, %s1402
        %v1404 = vld [vmem:[%s1394] sm:%s1403]
        %v1405 = vunpack.c.l.bf16 %v1404
        %v1406 = vunpack.c.h.bf16 %v1404
        %v1407 = vlaneseq
        %v1408 = vand.u32 %v1407, 127
        %vm1410 = vcmp.lt.s32.totalorder %v1408, 39
        %v1411 = vsel %vm1410, %v1405, %v18
        %1412 = xla_tuple %v1411, %v448
        %1413 = xla_tuple %1412
        %v1414 = vmax.f32 %v1411, %v448
        %1415 = xla_tuple %v1414
        %1416 = xla_tuple %v1414, %v443
        %1417 = xla_tuple %1416
        %v1418 = vmax.f32 %v1414, %v443
        %1419 = xla_tuple %v1418
        %s1420 = scalar_lea.vmem [#allocation9], 124
        %v1421 = vpack.c.bf16 0.0, %v1418
        %s1423 = ssub.s32 16, 1
        %1424 = vst [vmem:[%s1420] sm:%s1423] %v1421
        %s1425 = scalar_lea.vmem %s418, 128
        %s1427 = sor.u32 255, 127
        %s1428 = sand.u32 %s1427, 85
        %s1429 = sshrl.u32 %s1428, 1
        %s1430 = sor.u32 %s1428, %s1429
        %s1431 = sand.u32 51, %s1430
        %s1432 = sshrl.u32 %s1431, 2
        %s1433 = sor.u32 %s1431, %s1432
        %s1434 = sand.u32 15, %s1433
        %v1435 = vld [vmem:[%s1425] sm:%s1434]
        %v1436 = vunpack.c.l.bf16 %v1435
        %v1437 = vunpack.c.h.bf16 %v1435
        %v1438 = vlaneseq
        %v1439 = vand.u32 %v1438, 127
        %vm1441 = vcmp.lt.s32.totalorder %v1439, 39
        %v1442 = vsel %vm1441, %v1436, %v18
        %1443 = xla_tuple %v1442, %v448
        %1444 = xla_tuple %1443
        %v1445 = vmax.f32 %v1442, %v448
        %1446 = xla_tuple %v1445
        %1447 = xla_tuple %v1445, %v443
        %1448 = xla_tuple %1447
        %v1449 = vmax.f32 %v1445, %v443
        %1450 = xla_tuple %v1449
        %s1451 = scalar_lea.vmem [#allocation9], 128
        %v1452 = vpack.c.bf16 0.0, %v1449
        %s1454 = ssub.s32 16, 1
        %1455 = vst [vmem:[%s1451] sm:%s1454] %v1452
        %s1456 = scalar_lea.vmem %s418, 132
        %s1458 = sor.u32 255, 127
        %s1459 = sand.u32 %s1458, 85
        %s1460 = sshrl.u32 %s1459, 1
        %s1461 = sor.u32 %s1459, %s1460
        %s1462 = sand.u32 51, %s1461
        %s1463 = sshrl.u32 %s1462, 2
        %s1464 = sor.u32 %s1462, %s1463
        %s1465 = sand.u32 15, %s1464
        %v1466 = vld [vmem:[%s1456] sm:%s1465]
        %v1467 = vunpack.c.l.bf16 %v1466
        %v1468 = vunpack.c.h.bf16 %v1466
        %v1469 = vlaneseq
        %v1470 = vand.u32 %v1469, 127
        %vm1472 = vcmp.lt.s32.totalorder %v1470, 39
        %v1473 = vsel %vm1472, %v1467, %v18
        %1474 = xla_tuple %v1473, %v448
        %1475 = xla_tuple %1474
        %v1476 = vmax.f32 %v1473, %v448
        %1477 = xla_tuple %v1476
        %1478 = xla_tuple %v1476, %v443
        %1479 = xla_tuple %1478
        %v1480 = vmax.f32 %v1476, %v443
        %1481 = xla_tuple %v1480
        %s1482 = scalar_lea.vmem [#allocation9], 132
        %v1483 = vpack.c.bf16 0.0, %v1480
        %s1485 = ssub.s32 16, 1
        %1486 = vst [vmem:[%s1482] sm:%s1485] %v1483
        %s1487 = scalar_lea.vmem %s418, 136
        %s1489 = sor.u32 255, 127
        %s1490 = sand.u32 %s1489, 85
        %s1491 = sshrl.u32 %s1490, 1
        %s1492 = sor.u32 %s1490, %s1491
        %s1493 = sand.u32 51, %s1492
        %s1494 = sshrl.u32 %s1493, 2
        %s1495 = sor.u32 %s1493, %s1494
        %s1496 = sand.u32 15, %s1495
        %v1497 = vld [vmem:[%s1487] sm:%s1496]
        %v1498 = vunpack.c.l.bf16 %v1497
        %v1499 = vunpack.c.h.bf16 %v1497
        %v1500 = vlaneseq
        %v1501 = vand.u32 %v1500, 127
        %vm1503 = vcmp.lt.s32.totalorder %v1501, 39
        %v1504 = vsel %vm1503, %v1498, %v18
        %1505 = xla_tuple %v1504, %v448
        %1506 = xla_tuple %1505
        %v1507 = vmax.f32 %v1504, %v448
        %1508 = xla_tuple %v1507
        %1509 = xla_tuple %v1507, %v443
        %1510 = xla_tuple %1509
        %v1511 = vmax.f32 %v1507, %v443
        %1512 = xla_tuple %v1511
        %s1513 = scalar_lea.vmem [#allocation9], 136
        %v1514 = vpack.c.bf16 0.0, %v1511
        %s1516 = ssub.s32 16, 1
        %1517 = vst [vmem:[%s1513] sm:%s1516] %v1514
        %s1518 = scalar_lea.vmem %s418, 140
        %s1520 = sor.u32 255, 127
        %s1521 = sand.u32 %s1520, 85
        %s1522 = sshrl.u32 %s1521, 1
        %s1523 = sor.u32 %s1521, %s1522
        %s1524 = sand.u32 51, %s1523
        %s1525 = sshrl.u32 %s1524, 2
        %s1526 = sor.u32 %s1524, %s1525
        %s1527 = sand.u32 15, %s1526
        %v1528 = vld [vmem:[%s1518] sm:%s1527]
        %v1529 = vunpack.c.l.bf16 %v1528
        %v1530 = vunpack.c.h.bf16 %v1528
        %v1531 = vlaneseq
        %v1532 = vand.u32 %v1531, 127
        %vm1534 = vcmp.lt.s32.totalorder %v1532, 39
        %v1535 = vsel %vm1534, %v1529, %v18
        %1536 = xla_tuple %v1535, %v448
        %1537 = xla_tuple %1536
        %v1538 = vmax.f32 %v1535, %v448
        %1539 = xla_tuple %v1538
        %1540 = xla_tuple %v1538, %v443
        %1541 = xla_tuple %1540
        %v1542 = vmax.f32 %v1538, %v443
        %1543 = xla_tuple %v1542
        %s1544 = scalar_lea.vmem [#allocation9], 140
        %v1545 = vpack.c.bf16 0.0, %v1542
        %s1547 = ssub.s32 16, 1
        %1548 = vst [vmem:[%s1544] sm:%s1547] %v1545
        %s1549 = scalar_lea.vmem %s418, 144
        %s1551 = sor.u32 255, 127
        %s1552 = sand.u32 %s1551, 85
        %s1553 = sshrl.u32 %s1552, 1
        %s1554 = sor.u32 %s1552, %s1553
        %s1555 = sand.u32 51, %s1554
        %s1556 = sshrl.u32 %s1555, 2
        %s1557 = sor.u32 %s1555, %s1556
        %s1558 = sand.u32 15, %s1557
        %v1559 = vld [vmem:[%s1549] sm:%s1558]
        %v1560 = vunpack.c.l.bf16 %v1559
        %v1561 = vunpack.c.h.bf16 %v1559
        %v1562 = vlaneseq
        %v1563 = vand.u32 %v1562, 127
        %vm1565 = vcmp.lt.s32.totalorder %v1563, 39
        %v1566 = vsel %vm1565, %v1560, %v18
        %1567 = xla_tuple %v1566, %v448
        %1568 = xla_tuple %1567
        %v1569 = vmax.f32 %v1566, %v448
        %1570 = xla_tuple %v1569
        %1571 = xla_tuple %v1569, %v443
        %1572 = xla_tuple %1571
        %v1573 = vmax.f32 %v1569, %v443
        %1574 = xla_tuple %v1573
        %s1575 = scalar_lea.vmem [#allocation9], 144
        %v1576 = vpack.c.bf16 0.0, %v1573
        %s1578 = ssub.s32 16, 1
        %1579 = vst [vmem:[%s1575] sm:%s1578] %v1576
        %s1580 = scalar_lea.vmem %s418, 148
        %s1582 = sor.u32 255, 127
        %s1583 = sand.u32 %s1582, 85
        %s1584 = sshrl.u32 %s1583, 1
        %s1585 = sor.u32 %s1583, %s1584
        %s1586 = sand.u32 51, %s1585
        %s1587 = sshrl.u32 %s1586, 2
        %s1588 = sor.u32 %s1586, %s1587
        %s1589 = sand.u32 15, %s1588
        %v1590 = vld [vmem:[%s1580] sm:%s1589]
        %v1591 = vunpack.c.l.bf16 %v1590
        %v1592 = vunpack.c.h.bf16 %v1590
        %v1593 = vlaneseq
        %v1594 = vand.u32 %v1593, 127
        %vm1596 = vcmp.lt.s32.totalorder %v1594, 39
        %v1597 = vsel %vm1596, %v1591, %v18
        %1598 = xla_tuple %v1597, %v448
        %1599 = xla_tuple %1598
        %v1600 = vmax.f32 %v1597, %v448
        %1601 = xla_tuple %v1600
        %1602 = xla_tuple %v1600, %v443
        %1603 = xla_tuple %1602
        %v1604 = vmax.f32 %v1600, %v443
        %1605 = xla_tuple %v1604
        %s1606 = scalar_lea.vmem [#allocation9], 148
        %v1607 = vpack.c.bf16 0.0, %v1604
        %s1609 = ssub.s32 16, 1
        %1610 = vst [vmem:[%s1606] sm:%s1609] %v1607
        %s1611 = scalar_lea.vmem %s418, 152
        %s1613 = sor.u32 255, 127
        %s1614 = sand.u32 %s1613, 85
        %s1615 = sshrl.u32 %s1614, 1
        %s1616 = sor.u32 %s1614, %s1615
        %s1617 = sand.u32 51, %s1616
        %s1618 = sshrl.u32 %s1617, 2
        %s1619 = sor.u32 %s1617, %s1618
        %s1620 = sand.u32 15, %s1619
        %v1621 = vld [vmem:[%s1611] sm:%s1620]
        %v1622 = vunpack.c.l.bf16 %v1621
        %v1623 = vunpack.c.h.bf16 %v1621
        %v1624 = vlaneseq
        %v1625 = vand.u32 %v1624, 127
        %vm1627 = vcmp.lt.s32.totalorder %v1625, 39
        %v1628 = vsel %vm1627, %v1622, %v18
        %1629 = xla_tuple %v1628, %v448
        %1630 = xla_tuple %1629
        %v1631 = vmax.f32 %v1628, %v448
        %1632 = xla_tuple %v1631
        %1633 = xla_tuple %v1631, %v443
        %1634 = xla_tuple %1633
        %v1635 = vmax.f32 %v1631, %v443
        %1636 = xla_tuple %v1635
        %s1637 = scalar_lea.vmem [#allocation9], 152
        %v1638 = vpack.c.bf16 0.0, %v1635
        %s1640 = ssub.s32 16, 1
        %1641 = vst [vmem:[%s1637] sm:%s1640] %v1638
        %s1642 = scalar_lea.vmem %s418, 156
        %s1644 = sor.u32 255, 127
        %s1645 = sand.u32 %s1644, 85
        %s1646 = sshrl.u32 %s1645, 1
        %s1647 = sor.u32 %s1645, %s1646
        %s1648 = sand.u32 51, %s1647
        %s1649 = sshrl.u32 %s1648, 2
        %s1650 = sor.u32 %s1648, %s1649
        %s1651 = sand.u32 15, %s1650
        %v1652 = vld [vmem:[%s1642] sm:%s1651]
        %v1653 = vunpack.c.l.bf16 %v1652
        %v1654 = vunpack.c.h.bf16 %v1652
        %v1655 = vlaneseq
        %v1656 = vand.u32 %v1655, 127
        %vm1658 = vcmp.lt.s32.totalorder %v1656, 39
        %v1659 = vsel %vm1658, %v1653, %v18
        %1660 = xla_tuple %v1659, %v448
        %1661 = xla_tuple %1660
        %v1662 = vmax.f32 %v1659, %v448
        %1663 = xla_tuple %v1662
        %1664 = xla_tuple %v1662, %v443
        %1665 = xla_tuple %1664
        %v1666 = vmax.f32 %v1662, %v443
        %1667 = xla_tuple %v1666
        %s1668 = scalar_lea.vmem [#allocation9], 156
        %v1669 = vpack.c.bf16 0.0, %v1666
        %s1671 = ssub.s32 16, 1
        %1672 = vst [vmem:[%s1668] sm:%s1671] %v1669
        %s1673 = scalar_lea.vmem %s418, 160
        %s1675 = sor.u32 255, 127
        %s1676 = sand.u32 %s1675, 85
        %s1677 = sshrl.u32 %s1676, 1
        %s1678 = sor.u32 %s1676, %s1677
        %s1679 = sand.u32 51, %s1678
        %s1680 = sshrl.u32 %s1679, 2
        %s1681 = sor.u32 %s1679, %s1680
        %s1682 = sand.u32 15, %s1681
        %v1683 = vld [vmem:[%s1673] sm:%s1682]
        %v1684 = vunpack.c.l.bf16 %v1683
        %v1685 = vunpack.c.h.bf16 %v1683
        %v1686 = vlaneseq
        %v1687 = vand.u32 %v1686, 127
        %vm1689 = vcmp.lt.s32.totalorder %v1687, 39
        %v1690 = vsel %vm1689, %v1684, %v18
        %1691 = xla_tuple %v1690, %v448
        %1692 = xla_tuple %1691
        %v1693 = vmax.f32 %v1690, %v448
        %1694 = xla_tuple %v1693
        %1695 = xla_tuple %v1693, %v443
        %1696 = xla_tuple %1695
        %v1697 = vmax.f32 %v1693, %v443
        %1698 = xla_tuple %v1697
        %s1699 = scalar_lea.vmem [#allocation9], 160
        %v1700 = vpack.c.bf16 0.0, %v1697
        %s1702 = ssub.s32 16, 1
        %1703 = vst [vmem:[%s1699] sm:%s1702] %v1700
        %s1704 = scalar_lea.vmem %s418, 164
        %s1706 = sor.u32 255, 127
        %s1707 = sand.u32 %s1706, 85
        %s1708 = sshrl.u32 %s1707, 1
        %s1709 = sor.u32 %s1707, %s1708
        %s1710 = sand.u32 51, %s1709
        %s1711 = sshrl.u32 %s1710, 2
        %s1712 = sor.u32 %s1710, %s1711
        %s1713 = sand.u32 15, %s1712
        %v1714 = vld [vmem:[%s1704] sm:%s1713]
        %v1715 = vunpack.c.l.bf16 %v1714
        %v1716 = vunpack.c.h.bf16 %v1714
        %v1717 = vlaneseq
        %v1718 = vand.u32 %v1717, 127
        %vm1720 = vcmp.lt.s32.totalorder %v1718, 39
        %v1721 = vsel %vm1720, %v1715, %v18
        %1722 = xla_tuple %v1721, %v448
        %1723 = xla_tuple %1722
        %v1724 = vmax.f32 %v1721, %v448
        %1725 = xla_tuple %v1724
        %1726 = xla_tuple %v1724, %v443
        %1727 = xla_tuple %1726
        %v1728 = vmax.f32 %v1724, %v443
        %1729 = xla_tuple %v1728
        %s1730 = scalar_lea.vmem [#allocation9], 164
        %v1731 = vpack.c.bf16 0.0, %v1728
        %s1733 = ssub.s32 16, 1
        %1734 = vst [vmem:[%s1730] sm:%s1733] %v1731
        %s1735 = scalar_lea.vmem %s418, 168
        %s1737 = sor.u32 255, 127
        %s1738 = sand.u32 %s1737, 85
        %s1739 = sshrl.u32 %s1738, 1
        %s1740 = sor.u32 %s1738, %s1739
        %s1741 = sand.u32 51, %s1740
        %s1742 = sshrl.u32 %s1741, 2
        %s1743 = sor.u32 %s1741, %s1742
        %s1744 = sand.u32 15, %s1743
        %v1745 = vld [vmem:[%s1735] sm:%s1744]
        %v1746 = vunpack.c.l.bf16 %v1745
        %v1747 = vunpack.c.h.bf16 %v1745
        %v1748 = vlaneseq
        %v1749 = vand.u32 %v1748, 127
        %vm1751 = vcmp.lt.s32.totalorder %v1749, 39
        %v1752 = vsel %vm1751, %v1746, %v18
        %1753 = xla_tuple %v1752, %v448
        %1754 = xla_tuple %1753
        %v1755 = vmax.f32 %v1752, %v448
        %1756 = xla_tuple %v1755
        %1757 = xla_tuple %v1755, %v443
        %1758 = xla_tuple %1757
        %v1759 = vmax.f32 %v1755, %v443
        %1760 = xla_tuple %v1759
        %s1761 = scalar_lea.vmem [#allocation9], 168
        %v1762 = vpack.c.bf16 0.0, %v1759
        %s1764 = ssub.s32 16, 1
        %1765 = vst [vmem:[%s1761] sm:%s1764] %v1762
        %s1766 = scalar_lea.vmem %s418, 172
        %s1768 = sor.u32 255, 127
        %s1769 = sand.u32 %s1768, 85
        %s1770 = sshrl.u32 %s1769, 1
        %s1771 = sor.u32 %s1769, %s1770
        %s1772 = sand.u32 51, %s1771
        %s1773 = sshrl.u32 %s1772, 2
        %s1774 = sor.u32 %s1772, %s1773
        %s1775 = sand.u32 15, %s1774
        %v1776 = vld [vmem:[%s1766] sm:%s1775]
        %v1777 = vunpack.c.l.bf16 %v1776
        %v1778 = vunpack.c.h.bf16 %v1776
        %v1779 = vlaneseq
        %v1780 = vand.u32 %v1779, 127
        %vm1782 = vcmp.lt.s32.totalorder %v1780, 39
        %v1783 = vsel %vm1782, %v1777, %v18
        %1784 = xla_tuple %v1783, %v448
        %1785 = xla_tuple %1784
        %v1786 = vmax.f32 %v1783, %v448
        %1787 = xla_tuple %v1786
        %1788 = xla_tuple %v1786, %v443
        %1789 = xla_tuple %1788
        %v1790 = vmax.f32 %v1786, %v443
        %1791 = xla_tuple %v1790
        %s1792 = scalar_lea.vmem [#allocation9], 172
        %v1793 = vpack.c.bf16 0.0, %v1790
        %s1795 = ssub.s32 16, 1
        %1796 = vst [vmem:[%s1792] sm:%s1795] %v1793
        %s1797 = scalar_lea.vmem %s418, 176
        %s1799 = sor.u32 255, 127
        %s1800 = sand.u32 %s1799, 85
        %s1801 = sshrl.u32 %s1800, 1
        %s1802 = sor.u32 %s1800, %s1801
        %s1803 = sand.u32 51, %s1802
        %s1804 = sshrl.u32 %s1803, 2
        %s1805 = sor.u32 %s1803, %s1804
        %s1806 = sand.u32 15, %s1805
        %v1807 = vld [vmem:[%s1797] sm:%s1806]
        %v1808 = vunpack.c.l.bf16 %v1807
        %v1809 = vunpack.c.h.bf16 %v1807
        %v1810 = vlaneseq
        %v1811 = vand.u32 %v1810, 127
        %vm1813 = vcmp.lt.s32.totalorder %v1811, 39
        %v1814 = vsel %vm1813, %v1808, %v18
        %1815 = xla_tuple %v1814, %v448
        %1816 = xla_tuple %1815
        %v1817 = vmax.f32 %v1814, %v448
        %1818 = xla_tuple %v1817
        %1819 = xla_tuple %v1817, %v443
        %1820 = xla_tuple %1819
        %v1821 = vmax.f32 %v1817, %v443
        %1822 = xla_tuple %v1821
        %s1823 = scalar_lea.vmem [#allocation9], 176
        %v1824 = vpack.c.bf16 0.0, %v1821
        %s1826 = ssub.s32 16, 1
        %1827 = vst [vmem:[%s1823] sm:%s1826] %v1824
        %s1828 = scalar_lea.vmem %s418, 180
        %s1830 = sor.u32 255, 127
        %s1831 = sand.u32 %s1830, 85
        %s1832 = sshrl.u32 %s1831, 1
        %s1833 = sor.u32 %s1831, %s1832
        %s1834 = sand.u32 51, %s1833
        %s1835 = sshrl.u32 %s1834, 2
        %s1836 = sor.u32 %s1834, %s1835
        %s1837 = sand.u32 15, %s1836
        %v1838 = vld [vmem:[%s1828] sm:%s1837]
        %v1839 = vunpack.c.l.bf16 %v1838
        %v1840 = vunpack.c.h.bf16 %v1838
        %v1841 = vlaneseq
        %v1842 = vand.u32 %v1841, 127
        %vm1844 = vcmp.lt.s32.totalorder %v1842, 39
        %v1845 = vsel %vm1844, %v1839, %v18
        %1846 = xla_tuple %v1845, %v448
        %1847 = xla_tuple %1846
        %v1848 = vmax.f32 %v1845, %v448
        %1849 = xla_tuple %v1848
        %1850 = xla_tuple %v1848, %v443
        %1851 = xla_tuple %1850
        %v1852 = vmax.f32 %v1848, %v443
        %1853 = xla_tuple %v1852
        %s1854 = scalar_lea.vmem [#allocation9], 180
        %v1855 = vpack.c.bf16 0.0, %v1852
        %s1857 = ssub.s32 16, 1
        %1858 = vst [vmem:[%s1854] sm:%s1857] %v1855
        %s1859 = scalar_lea.vmem %s418, 184
        %s1861 = sor.u32 255, 127
        %s1862 = sand.u32 %s1861, 85
        %s1863 = sshrl.u32 %s1862, 1
        %s1864 = sor.u32 %s1862, %s1863
        %s1865 = sand.u32 51, %s1864
        %s1866 = sshrl.u32 %s1865, 2
        %s1867 = sor.u32 %s1865, %s1866
        %s1868 = sand.u32 15, %s1867
        %v1869 = vld [vmem:[%s1859] sm:%s1868]
        %v1870 = vunpack.c.l.bf16 %v1869
        %v1871 = vunpack.c.h.bf16 %v1869
        %v1872 = vlaneseq
        %v1873 = vand.u32 %v1872, 127
        %vm1875 = vcmp.lt.s32.totalorder %v1873, 39
        %v1876 = vsel %vm1875, %v1870, %v18
        %1877 = xla_tuple %v1876, %v448
        %1878 = xla_tuple %1877
        %v1879 = vmax.f32 %v1876, %v448
        %1880 = xla_tuple %v1879
        %1881 = xla_tuple %v1879, %v443
        %1882 = xla_tuple %1881
        %v1883 = vmax.f32 %v1879, %v443
        %1884 = xla_tuple %v1883
        %s1885 = scalar_lea.vmem [#allocation9], 184
        %v1886 = vpack.c.bf16 0.0, %v1883
        %s1888 = ssub.s32 16, 1
        %1889 = vst [vmem:[%s1885] sm:%s1888] %v1886
        %s1890 = scalar_lea.vmem %s418, 188
        %s1892 = sor.u32 255, 127
        %s1893 = sand.u32 %s1892, 85
        %s1894 = sshrl.u32 %s1893, 1
        %s1895 = sor.u32 %s1893, %s1894
        %s1896 = sand.u32 51, %s1895
        %s1897 = sshrl.u32 %s1896, 2
        %s1898 = sor.u32 %s1896, %s1897
        %s1899 = sand.u32 15, %s1898
        %v1900 = vld [vmem:[%s1890] sm:%s1899]
        %v1901 = vunpack.c.l.bf16 %v1900
        %v1902 = vunpack.c.h.bf16 %v1900
        %v1903 = vlaneseq
        %v1904 = vand.u32 %v1903, 127
        %vm1906 = vcmp.lt.s32.totalorder %v1904, 39
        %v1907 = vsel %vm1906, %v1901, %v18
        %1908 = xla_tuple %v1907, %v448
        %1909 = xla_tuple %1908
        %v1910 = vmax.f32 %v1907, %v448
        %1911 = xla_tuple %v1910
        %1912 = xla_tuple %v1910, %v443
        %1913 = xla_tuple %1912
        %v1914 = vmax.f32 %v1910, %v443
        %1915 = xla_tuple %v1914
        %s1916 = scalar_lea.vmem [#allocation9], 188
        %v1917 = vpack.c.bf16 0.0, %v1914
        %s1919 = ssub.s32 16, 1
        %1920 = vst [vmem:[%s1916] sm:%s1919] %v1917
        %s1921 = scalar_lea.vmem %s418, 192
        %s1923 = sor.u32 255, 127
        %s1924 = sand.u32 %s1923, 85
        %s1925 = sshrl.u32 %s1924, 1
        %s1926 = sor.u32 %s1924, %s1925
        %s1927 = sand.u32 51, %s1926
        %s1928 = sshrl.u32 %s1927, 2
        %s1929 = sor.u32 %s1927, %s1928
        %s1930 = sand.u32 15, %s1929
        %v1931 = vld [vmem:[%s1921] sm:%s1930]
        %v1932 = vunpack.c.l.bf16 %v1931
        %v1933 = vunpack.c.h.bf16 %v1931
        %v1934 = vlaneseq
        %v1935 = vand.u32 %v1934, 127
        %vm1937 = vcmp.lt.s32.totalorder %v1935, 39
        %v1938 = vsel %vm1937, %v1932, %v18
        %1939 = xla_tuple %v1938, %v448
        %1940 = xla_tuple %1939
        %v1941 = vmax.f32 %v1938, %v448
        %1942 = xla_tuple %v1941
        %1943 = xla_tuple %v1941, %v443
        %1944 = xla_tuple %1943
        %v1945 = vmax.f32 %v1941, %v443
        %1946 = xla_tuple %v1945
        %s1947 = scalar_lea.vmem [#allocation9], 192
        %v1948 = vpack.c.bf16 0.0, %v1945
        %s1950 = ssub.s32 16, 1
        %1951 = vst [vmem:[%s1947] sm:%s1950] %v1948
        %s1952 = scalar_lea.vmem %s418, 196
        %s1954 = sor.u32 255, 127
        %s1955 = sand.u32 %s1954, 85
        %s1956 = sshrl.u32 %s1955, 1
        %s1957 = sor.u32 %s1955, %s1956
        %s1958 = sand.u32 51, %s1957
        %s1959 = sshrl.u32 %s1958, 2
        %s1960 = sor.u32 %s1958, %s1959
        %s1961 = sand.u32 15, %s1960
        %v1962 = vld [vmem:[%s1952] sm:%s1961]
        %v1963 = vunpack.c.l.bf16 %v1962
        %v1964 = vunpack.c.h.bf16 %v1962
        %v1965 = vlaneseq
        %v1966 = vand.u32 %v1965, 127
        %vm1968 = vcmp.lt.s32.totalorder %v1966, 39
        %v1969 = vsel %vm1968, %v1963, %v18
        %1970 = xla_tuple %v1969, %v448
        %1971 = xla_tuple %1970
        %v1972 = vmax.f32 %v1969, %v448
        %1973 = xla_tuple %v1972
        %1974 = xla_tuple %v1972, %v443
        %1975 = xla_tuple %1974
        %v1976 = vmax.f32 %v1972, %v443
        %1977 = xla_tuple %v1976
        %s1978 = scalar_lea.vmem [#allocation9], 196
        %v1979 = vpack.c.bf16 0.0, %v1976
        %s1981 = ssub.s32 16, 1
        %1982 = vst [vmem:[%s1978] sm:%s1981] %v1979
        %s1983 = scalar_lea.vmem %s418, 200
        %s1985 = sor.u32 255, 127
        %s1986 = sand.u32 %s1985, 85
        %s1987 = sshrl.u32 %s1986, 1
        %s1988 = sor.u32 %s1986, %s1987
        %s1989 = sand.u32 51, %s1988
        %s1990 = sshrl.u32 %s1989, 2
        %s1991 = sor.u32 %s1989, %s1990
        %s1992 = sand.u32 15, %s1991
        %v1993 = vld [vmem:[%s1983] sm:%s1992]
        %v1994 = vunpack.c.l.bf16 %v1993
        %v1995 = vunpack.c.h.bf16 %v1993
        %v1996 = vlaneseq
        %v1997 = vand.u32 %v1996, 127
        %vm1999 = vcmp.lt.s32.totalorder %v1997, 39
        %v2000 = vsel %vm1999, %v1994, %v18
        %2001 = xla_tuple %v2000, %v448
        %2002 = xla_tuple %2001
        %v2003 = vmax.f32 %v2000, %v448
        %2004 = xla_tuple %v2003
        %2005 = xla_tuple %v2003, %v443
        %2006 = xla_tuple %2005
        %v2007 = vmax.f32 %v2003, %v443
        %2008 = xla_tuple %v2007
        %s2009 = scalar_lea.vmem [#allocation9], 200
        %v2010 = vpack.c.bf16 0.0, %v2007
        %s2012 = ssub.s32 16, 1
        %2013 = vst [vmem:[%s2009] sm:%s2012] %v2010
        %s2014 = scalar_lea.vmem %s418, 204
        %s2016 = sor.u32 255, 127
        %s2017 = sand.u32 %s2016, 85
        %s2018 = sshrl.u32 %s2017, 1
        %s2019 = sor.u32 %s2017, %s2018
        %s2020 = sand.u32 51, %s2019
        %s2021 = sshrl.u32 %s2020, 2
        %s2022 = sor.u32 %s2020, %s2021
        %s2023 = sand.u32 15, %s2022
        %v2024 = vld [vmem:[%s2014] sm:%s2023]
        %v2025 = vunpack.c.l.bf16 %v2024
        %v2026 = vunpack.c.h.bf16 %v2024
        %v2027 = vlaneseq
        %v2028 = vand.u32 %v2027, 127
        %vm2030 = vcmp.lt.s32.totalorder %v2028, 39
        %v2031 = vsel %vm2030, %v2025, %v18
        %2032 = xla_tuple %v2031, %v448
        %2033 = xla_tuple %2032
        %v2034 = vmax.f32 %v2031, %v448
        %2035 = xla_tuple %v2034
        %2036 = xla_tuple %v2034, %v443
        %2037 = xla_tuple %2036
        %v2038 = vmax.f32 %v2034, %v443
        %2039 = xla_tuple %v2038
        %s2040 = scalar_lea.vmem [#allocation9], 204
        %v2041 = vpack.c.bf16 0.0, %v2038
        %s2043 = ssub.s32 16, 1
        %2044 = vst [vmem:[%s2040] sm:%s2043] %v2041
        %s2045 = scalar_lea.vmem %s418, 208
        %s2047 = sor.u32 255, 127
        %s2048 = sand.u32 %s2047, 85
        %s2049 = sshrl.u32 %s2048, 1
        %s2050 = sor.u32 %s2048, %s2049
        %s2051 = sand.u32 51, %s2050
        %s2052 = sshrl.u32 %s2051, 2
        %s2053 = sor.u32 %s2051, %s2052
        %s2054 = sand.u32 15, %s2053
        %v2055 = vld [vmem:[%s2045] sm:%s2054]
        %v2056 = vunpack.c.l.bf16 %v2055
        %v2057 = vunpack.c.h.bf16 %v2055
        %v2058 = vlaneseq
        %v2059 = vand.u32 %v2058, 127
        %vm2061 = vcmp.lt.s32.totalorder %v2059, 39
        %v2062 = vsel %vm2061, %v2056, %v18
        %2063 = xla_tuple %v2062, %v448
        %2064 = xla_tuple %2063
        %v2065 = vmax.f32 %v2062, %v448
        %2066 = xla_tuple %v2065
        %2067 = xla_tuple %v2065, %v443
        %2068 = xla_tuple %2067
        %v2069 = vmax.f32 %v2065, %v443
        %2070 = xla_tuple %v2069
        %s2071 = scalar_lea.vmem [#allocation9], 208
        %v2072 = vpack.c.bf16 0.0, %v2069
        %s2074 = ssub.s32 16, 1
        %2075 = vst [vmem:[%s2071] sm:%s2074] %v2072
        %s2076 = scalar_lea.vmem %s418, 212
        %s2078 = sor.u32 255, 127
        %s2079 = sand.u32 %s2078, 85
        %s2080 = sshrl.u32 %s2079, 1
        %s2081 = sor.u32 %s2079, %s2080
        %s2082 = sand.u32 51, %s2081
        %s2083 = sshrl.u32 %s2082, 2
        %s2084 = sor.u32 %s2082, %s2083
        %s2085 = sand.u32 15, %s2084
        %v2086 = vld [vmem:[%s2076] sm:%s2085]
        %v2087 = vunpack.c.l.bf16 %v2086
        %v2088 = vunpack.c.h.bf16 %v2086
        %v2089 = vlaneseq
        %v2090 = vand.u32 %v2089, 127
        %vm2092 = vcmp.lt.s32.totalorder %v2090, 39
        %v2093 = vsel %vm2092, %v2087, %v18
        %2094 = xla_tuple %v2093, %v448
        %2095 = xla_tuple %2094
        %v2096 = vmax.f32 %v2093, %v448
        %2097 = xla_tuple %v2096
        %2098 = xla_tuple %v2096, %v443
        %2099 = xla_tuple %2098
        %v2100 = vmax.f32 %v2096, %v443
        %2101 = xla_tuple %v2100
        %s2102 = scalar_lea.vmem [#allocation9], 212
        %v2103 = vpack.c.bf16 0.0, %v2100
        %s2105 = ssub.s32 16, 1
        %2106 = vst [vmem:[%s2102] sm:%s2105] %v2103
        %s2107 = scalar_lea.vmem %s418, 216
        %s2109 = sor.u32 255, 127
        %s2110 = sand.u32 %s2109, 85
        %s2111 = sshrl.u32 %s2110, 1
        %s2112 = sor.u32 %s2110, %s2111
        %s2113 = sand.u32 51, %s2112
        %s2114 = sshrl.u32 %s2113, 2
        %s2115 = sor.u32 %s2113, %s2114
        %s2116 = sand.u32 15, %s2115
        %v2117 = vld [vmem:[%s2107] sm:%s2116]
        %v2118 = vunpack.c.l.bf16 %v2117
        %v2119 = vunpack.c.h.bf16 %v2117
        %v2120 = vlaneseq
        %v2121 = vand.u32 %v2120, 127
        %vm2123 = vcmp.lt.s32.totalorder %v2121, 39
        %v2124 = vsel %vm2123, %v2118, %v18
        %2125 = xla_tuple %v2124, %v448
        %2126 = xla_tuple %2125
        %v2127 = vmax.f32 %v2124, %v448
        %2128 = xla_tuple %v2127
        %2129 = xla_tuple %v2127, %v443
        %2130 = xla_tuple %2129
        %v2131 = vmax.f32 %v2127, %v443
        %2132 = xla_tuple %v2131
        %s2133 = scalar_lea.vmem [#allocation9], 216
        %v2134 = vpack.c.bf16 0.0, %v2131
        %s2136 = ssub.s32 16, 1
        %2137 = vst [vmem:[%s2133] sm:%s2136] %v2134
        %s2138 = scalar_lea.vmem %s418, 220
        %s2140 = sor.u32 255, 127
        %s2141 = sand.u32 %s2140, 85
        %s2142 = sshrl.u32 %s2141, 1
        %s2143 = sor.u32 %s2141, %s2142
        %s2144 = sand.u32 51, %s2143
        %s2145 = sshrl.u32 %s2144, 2
        %s2146 = sor.u32 %s2144, %s2145
        %s2147 = sand.u32 15, %s2146
        %v2148 = vld [vmem:[%s2138] sm:%s2147]
        %v2149 = vunpack.c.l.bf16 %v2148
        %v2150 = vunpack.c.h.bf16 %v2148
        %v2151 = vlaneseq
        %v2152 = vand.u32 %v2151, 127
        %vm2154 = vcmp.lt.s32.totalorder %v2152, 39
        %v2155 = vsel %vm2154, %v2149, %v18
        %2156 = xla_tuple %v2155, %v448
        %2157 = xla_tuple %2156
        %v2158 = vmax.f32 %v2155, %v448
        %2159 = xla_tuple %v2158
        %2160 = xla_tuple %v2158, %v443
        %2161 = xla_tuple %2160
        %v2162 = vmax.f32 %v2158, %v443
        %2163 = xla_tuple %v2162
        %s2164 = scalar_lea.vmem [#allocation9], 220
        %v2165 = vpack.c.bf16 0.0, %v2162
        %s2167 = ssub.s32 16, 1
        %2168 = vst [vmem:[%s2164] sm:%s2167] %v2165
        %s2169 = scalar_lea.vmem %s418, 224
        %s2171 = sor.u32 255, 127
        %s2172 = sand.u32 %s2171, 85
        %s2173 = sshrl.u32 %s2172, 1
        %s2174 = sor.u32 %s2172, %s2173
        %s2175 = sand.u32 51, %s2174
        %s2176 = sshrl.u32 %s2175, 2
        %s2177 = sor.u32 %s2175, %s2176
        %s2178 = sand.u32 15, %s2177
        %v2179 = vld [vmem:[%s2169] sm:%s2178]
        %v2180 = vunpack.c.l.bf16 %v2179
        %v2181 = vunpack.c.h.bf16 %v2179
        %v2182 = vlaneseq
        %v2183 = vand.u32 %v2182, 127
        %vm2185 = vcmp.lt.s32.totalorder %v2183, 39
        %v2186 = vsel %vm2185, %v2180, %v18
        %2187 = xla_tuple %v2186, %v448
        %2188 = xla_tuple %2187
        %v2189 = vmax.f32 %v2186, %v448
        %2190 = xla_tuple %v2189
        %2191 = xla_tuple %v2189, %v443
        %2192 = xla_tuple %2191
        %v2193 = vmax.f32 %v2189, %v443
        %2194 = xla_tuple %v2193
        %s2195 = scalar_lea.vmem [#allocation9], 224
        %v2196 = vpack.c.bf16 0.0, %v2193
        %s2198 = ssub.s32 16, 1
        %2199 = vst [vmem:[%s2195] sm:%s2198] %v2196
        %s2200 = scalar_lea.vmem %s418, 228
        %s2202 = sor.u32 255, 127
        %s2203 = sand.u32 %s2202, 85
        %s2204 = sshrl.u32 %s2203, 1
        %s2205 = sor.u32 %s2203, %s2204
        %s2206 = sand.u32 51, %s2205
        %s2207 = sshrl.u32 %s2206, 2
        %s2208 = sor.u32 %s2206, %s2207
        %s2209 = sand.u32 15, %s2208
        %v2210 = vld [vmem:[%s2200] sm:%s2209]
        %v2211 = vunpack.c.l.bf16 %v2210
        %v2212 = vunpack.c.h.bf16 %v2210
        %v2213 = vlaneseq
        %v2214 = vand.u32 %v2213, 127
        %vm2216 = vcmp.lt.s32.totalorder %v2214, 39
        %v2217 = vsel %vm2216, %v2211, %v18
        %2218 = xla_tuple %v2217, %v448
        %2219 = xla_tuple %2218
        %v2220 = vmax.f32 %v2217, %v448
        %2221 = xla_tuple %v2220
        %2222 = xla_tuple %v2220, %v443
        %2223 = xla_tuple %2222
        %v2224 = vmax.f32 %v2220, %v443
        %2225 = xla_tuple %v2224
        %s2226 = scalar_lea.vmem [#allocation9], 228
        %v2227 = vpack.c.bf16 0.0, %v2224
        %s2229 = ssub.s32 16, 1
        %2230 = vst [vmem:[%s2226] sm:%s2229] %v2227
        %s2231 = scalar_lea.vmem %s418, 232
        %s2233 = sor.u32 255, 127
        %s2234 = sand.u32 %s2233, 85
        %s2235 = sshrl.u32 %s2234, 1
        %s2236 = sor.u32 %s2234, %s2235
        %s2237 = sand.u32 51, %s2236
        %s2238 = sshrl.u32 %s2237, 2
        %s2239 = sor.u32 %s2237, %s2238
        %s2240 = sand.u32 15, %s2239
        %v2241 = vld [vmem:[%s2231] sm:%s2240]
        %v2242 = vunpack.c.l.bf16 %v2241
        %v2243 = vunpack.c.h.bf16 %v2241
        %v2244 = vlaneseq
        %v2245 = vand.u32 %v2244, 127
        %vm2247 = vcmp.lt.s32.totalorder %v2245, 39
        %v2248 = vsel %vm2247, %v2242, %v18
        %2249 = xla_tuple %v2248, %v448
        %2250 = xla_tuple %2249
        %v2251 = vmax.f32 %v2248, %v448
        %2252 = xla_tuple %v2251
        %2253 = xla_tuple %v2251, %v443
        %2254 = xla_tuple %2253
        %v2255 = vmax.f32 %v2251, %v443
        %2256 = xla_tuple %v2255
        %s2257 = scalar_lea.vmem [#allocation9], 232
        %v2258 = vpack.c.bf16 0.0, %v2255
        %s2260 = ssub.s32 16, 1
        %2261 = vst [vmem:[%s2257] sm:%s2260] %v2258
        %s2262 = scalar_lea.vmem %s418, 236
        %s2264 = sor.u32 255, 127
        %s2265 = sand.u32 %s2264, 85
        %s2266 = sshrl.u32 %s2265, 1
        %s2267 = sor.u32 %s2265, %s2266
        %s2268 = sand.u32 51, %s2267
        %s2269 = sshrl.u32 %s2268, 2
        %s2270 = sor.u32 %s2268, %s2269
        %s2271 = sand.u32 15, %s2270
        %v2272 = vld [vmem:[%s2262] sm:%s2271]
        %v2273 = vunpack.c.l.bf16 %v2272
        %v2274 = vunpack.c.h.bf16 %v2272
        %v2275 = vlaneseq
        %v2276 = vand.u32 %v2275, 127
        %vm2278 = vcmp.lt.s32.totalorder %v2276, 39
        %v2279 = vsel %vm2278, %v2273, %v18
        %2280 = xla_tuple %v2279, %v448
        %2281 = xla_tuple %2280
        %v2282 = vmax.f32 %v2279, %v448
        %2283 = xla_tuple %v2282
        %2284 = xla_tuple %v2282, %v443
        %2285 = xla_tuple %2284
        %v2286 = vmax.f32 %v2282, %v443
        %2287 = xla_tuple %v2286
        %s2288 = scalar_lea.vmem [#allocation9], 236
        %v2289 = vpack.c.bf16 0.0, %v2286
        %s2291 = ssub.s32 16, 1
        %2292 = vst [vmem:[%s2288] sm:%s2291] %v2289
        %s2293 = scalar_lea.vmem %s418, 240
        %s2295 = sor.u32 255, 127
        %s2296 = sand.u32 %s2295, 85
        %s2297 = sshrl.u32 %s2296, 1
        %s2298 = sor.u32 %s2296, %s2297
        %s2299 = sand.u32 51, %s2298
        %s2300 = sshrl.u32 %s2299, 2
        %s2301 = sor.u32 %s2299, %s2300
        %s2302 = sand.u32 15, %s2301
        %v2303 = vld [vmem:[%s2293] sm:%s2302]
        %v2304 = vunpack.c.l.bf16 %v2303
        %v2305 = vunpack.c.h.bf16 %v2303
        %v2306 = vlaneseq
        %v2307 = vand.u32 %v2306, 127
        %vm2309 = vcmp.lt.s32.totalorder %v2307, 39
        %v2310 = vsel %vm2309, %v2304, %v18
        %2311 = xla_tuple %v2310, %v448
        %2312 = xla_tuple %2311
        %v2313 = vmax.f32 %v2310, %v448
        %2314 = xla_tuple %v2313
        %2315 = xla_tuple %v2313, %v443
        %2316 = xla_tuple %2315
        %v2317 = vmax.f32 %v2313, %v443
        %2318 = xla_tuple %v2317
        %s2319 = scalar_lea.vmem [#allocation9], 240
        %v2320 = vpack.c.bf16 0.0, %v2317
        %s2322 = ssub.s32 16, 1
        %2323 = vst [vmem:[%s2319] sm:%s2322] %v2320
        %s2324 = scalar_lea.vmem %s418, 244
        %s2326 = sor.u32 255, 127
        %s2327 = sand.u32 %s2326, 85
        %s2328 = sshrl.u32 %s2327, 1
        %s2329 = sor.u32 %s2327, %s2328
        %s2330 = sand.u32 51, %s2329
        %s2331 = sshrl.u32 %s2330, 2
        %s2332 = sor.u32 %s2330, %s2331
        %s2333 = sand.u32 15, %s2332
        %v2334 = vld [vmem:[%s2324] sm:%s2333]
        %v2335 = vunpack.c.l.bf16 %v2334
        %v2336 = vunpack.c.h.bf16 %v2334
        %v2337 = vlaneseq
        %v2338 = vand.u32 %v2337, 127
        %vm2340 = vcmp.lt.s32.totalorder %v2338, 39
        %v2341 = vsel %vm2340, %v2335, %v18
        %2342 = xla_tuple %v2341, %v448
        %2343 = xla_tuple %2342
        %v2344 = vmax.f32 %v2341, %v448
        %2345 = xla_tuple %v2344
        %2346 = xla_tuple %v2344, %v443
        %2347 = xla_tuple %2346
        %v2348 = vmax.f32 %v2344, %v443
        %2349 = xla_tuple %v2348
        %s2350 = scalar_lea.vmem [#allocation9], 244
        %v2351 = vpack.c.bf16 0.0, %v2348
        %s2353 = ssub.s32 16, 1
        %2354 = vst [vmem:[%s2350] sm:%s2353] %v2351
        %s2355 = scalar_lea.vmem %s418, 248
        %s2357 = sor.u32 255, 127
        %s2358 = sand.u32 %s2357, 85
        %s2359 = sshrl.u32 %s2358, 1
        %s2360 = sor.u32 %s2358, %s2359
        %s2361 = sand.u32 51, %s2360
        %s2362 = sshrl.u32 %s2361, 2
        %s2363 = sor.u32 %s2361, %s2362
        %s2364 = sand.u32 15, %s2363
        %v2365 = vld [vmem:[%s2355] sm:%s2364]
        %v2366 = vunpack.c.l.bf16 %v2365
        %v2367 = vunpack.c.h.bf16 %v2365
        %v2368 = vlaneseq
        %v2369 = vand.u32 %v2368, 127
        %vm2371 = vcmp.lt.s32.totalorder %v2369, 39
        %v2372 = vsel %vm2371, %v2366, %v18
        %2373 = xla_tuple %v2372, %v448
        %2374 = xla_tuple %2373
        %v2375 = vmax.f32 %v2372, %v448
        %2376 = xla_tuple %v2375
        %2377 = xla_tuple %v2375, %v443
        %2378 = xla_tuple %2377
        %v2379 = vmax.f32 %v2375, %v443
        %2380 = xla_tuple %v2379
        %s2381 = scalar_lea.vmem [#allocation9], 248
        %v2382 = vpack.c.bf16 0.0, %v2379
        %s2384 = ssub.s32 16, 1
        %2385 = vst [vmem:[%s2381] sm:%s2384] %v2382
        %s2386 = scalar_lea.vmem %s418, 252
        %s2388 = sor.u32 255, 127
        %s2389 = sand.u32 %s2388, 85
        %s2390 = sshrl.u32 %s2389, 1
        %s2391 = sor.u32 %s2389, %s2390
        %s2392 = sand.u32 51, %s2391
        %s2393 = sshrl.u32 %s2392, 2
        %s2394 = sor.u32 %s2392, %s2393
        %s2395 = sand.u32 15, %s2394
        %v2396 = vld [vmem:[%s2386] sm:%s2395]
        %v2397 = vunpack.c.l.bf16 %v2396
        %v2398 = vunpack.c.h.bf16 %v2396
        %v2399 = vlaneseq
        %v2400 = vand.u32 %v2399, 127
        %vm2402 = vcmp.lt.s32.totalorder %v2400, 39
        %v2403 = vsel %vm2402, %v2397, %v18
        %2404 = xla_tuple %v2403, %v448
        %2405 = xla_tuple %2404
        %v2406 = vmax.f32 %v2403, %v448
        %2407 = xla_tuple %v2406
        %2408 = xla_tuple %v2406, %v443
        %2409 = xla_tuple %2408
        %v2410 = vmax.f32 %v2406, %v443
        %2411 = xla_tuple %v2410
        %s2412 = scalar_lea.vmem [#allocation9], 252
        %v2413 = vpack.c.bf16 0.0, %v2410
        %s2415 = ssub.s32 16, 1
        %2416 = vst [vmem:[%s2412] sm:%s2415] %v2413
        %v2417 = vld [vmem:[#allocation9] sm:$0xf]
        %v2418 = vld [vmem:[#allocation9 + $0x4] sm:$0xf]
        %v2419 = vld [vmem:[#allocation9 + $0x8] sm:$0xf]
        %v2420 = vld [vmem:[#allocation9 + $0xc] sm:$0xf]
        %v2421 = vld [vmem:[#allocation9 + $0x10] sm:$0xf]
        %v2422 = vld [vmem:[#allocation9 + $0x14] sm:$0xf]
        %v2423 = vld [vmem:[#allocation9 + $0x18] sm:$0xf]
        %v2424 = vld [vmem:[#allocation9 + $0x1c] sm:$0xf]
        %v2425 = vld [vmem:[#allocation9 + $0x20] sm:$0xf]
        %v2426 = vld [vmem:[#allocation9 + $0x24] sm:$0xf]
        %v2427 = vld [vmem:[#allocation9 + $0x28] sm:$0xf]
        %v2428 = vld [vmem:[#allocation9 + $0x2c] sm:$0xf]
        %v2429 = vld [vmem:[#allocation9 + $0x30] sm:$0xf]
        %v2430 = vld [vmem:[#allocation9 + $0x34] sm:$0xf]
        %v2431 = vld [vmem:[#allocation9 + $0x38] sm:$0xf]
        %v2432 = vld [vmem:[#allocation9 + $0x3c] sm:$0xf]
        %v2433 = vld [vmem:[#allocation9 + $0x40] sm:$0xf]
        %v2434 = vld [vmem:[#allocation9 + $0x44] sm:$0xf]
        %v2435 = vld [vmem:[#allocation9 + $0x48] sm:$0xf]
        %v2436 = vld [vmem:[#allocation9 + $0x4c] sm:$0xf]
        %v2437 = vld [vmem:[#allocation9 + $0x50] sm:$0xf]
        %v2438 = vld [vmem:[#allocation9 + $0x54] sm:$0xf]
        %v2439 = vld [vmem:[#allocation9 + $0x58] sm:$0xf]
        %v2440 = vld [vmem:[#allocation9 + $0x5c] sm:$0xf]
        %v2441 = vld [vmem:[#allocation9 + $0x60] sm:$0xf]
        %v2442 = vld [vmem:[#allocation9 + $0x64] sm:$0xf]
        %v2443 = vld [vmem:[#allocation9 + $0x68] sm:$0xf]
        %v2444 = vld [vmem:[#allocation9 + $0x6c] sm:$0xf]
        %v2445 = vld [vmem:[#allocation9 + $0x70] sm:$0xf]
        %v2446 = vld [vmem:[#allocation9 + $0x74] sm:$0xf]
        %v2447 = vld [vmem:[#allocation9 + $0x78] sm:$0xf]
        %v2448 = vld [vmem:[#allocation9 + $0x7c] sm:$0xf]
        %v2449 = vld [vmem:[#allocation9 + $0x80] sm:$0xf]
        %v2450 = vld [vmem:[#allocation9 + $0x84] sm:$0xf]
        %v2451 = vld [vmem:[#allocation9 + $0x88] sm:$0xf]
        %v2452 = vld [vmem:[#allocation9 + $0x8c] sm:$0xf]
        %v2453 = vld [vmem:[#allocation9 + $0x90] sm:$0xf]
        %v2454 = vld [vmem:[#allocation9 + $0x94] sm:$0xf]
        %v2455 = vld [vmem:[#allocation9 + $0x98] sm:$0xf]
        %v2456 = vld [vmem:[#allocation9 + $0x9c] sm:$0xf]
        %v2457 = vld [vmem:[#allocation9 + $0xa0] sm:$0xf]
        %v2458 = vld [vmem:[#allocation9 + $0xa4] sm:$0xf]
        %v2459 = vld [vmem:[#allocation9 + $0xa8] sm:$0xf]
        %v2460 = vld [vmem:[#allocation9 + $0xac] sm:$0xf]
        %v2461 = vld [vmem:[#allocation9 + $0xb0] sm:$0xf]
        %v2462 = vld [vmem:[#allocation9 + $0xb4] sm:$0xf]
        %v2463 = vld [vmem:[#allocation9 + $0xb8] sm:$0xf]
        %v2464 = vld [vmem:[#allocation9 + $0xbc] sm:$0xf]
        %v2465 = vld [vmem:[#allocation9 + $0xc0] sm:$0xf]
        %v2466 = vld [vmem:[#allocation9 + $0xc4] sm:$0xf]
        %v2467 = vld [vmem:[#allocation9 + $0xc8] sm:$0xf]
        %v2468 = vld [vmem:[#allocation9 + $0xcc] sm:$0xf]
        %v2469 = vld [vmem:[#allocation9 + $0xd0] sm:$0xf]
        %v2470 = vld [vmem:[#allocation9 + $0xd4] sm:$0xf]
        %v2471 = vld [vmem:[#allocation9 + $0xd8] sm:$0xf]
        %v2472 = vld [vmem:[#allocation9 + $0xdc] sm:$0xf]
        %v2473 = vld [vmem:[#allocation9 + $0xe0] sm:$0xf]
        %v2474 = vld [vmem:[#allocation9 + $0xe4] sm:$0xf]
        %v2475 = vld [vmem:[#allocation9 + $0xe8] sm:$0xf]
        %v2476 = vld [vmem:[#allocation9 + $0xec] sm:$0xf]
        %v2477 = vld [vmem:[#allocation9 + $0xf0] sm:$0xf]
        %v2478 = vld [vmem:[#allocation9 + $0xf4] sm:$0xf]
        %v2479 = vld [vmem:[#allocation9 + $0xf8] sm:$0xf]
        %v2480 = vld [vmem:[#allocation9 + $0xfc] sm:$0xf]
        %v2481 = vld [vmem:[%s0] sm:$0xf]
        %v2482 = vld [vmem:[%s0 + $0x4] sm:$0xf]
        %v2483 = vld [vmem:[%s0 + $0x8] sm:$0xf]
        %v2484 = vld [vmem:[%s0 + $0xc] sm:$0xf]
        %v2485 = vld [vmem:[%s0 + $0x10] sm:$0xf]
        %v2486 = vld [vmem:[%s0 + $0x14] sm:$0xf]
        %v2487 = vld [vmem:[%s0 + $0x18] sm:$0xf]
        %v2488 = vld [vmem:[%s0 + $0x1c] sm:$0xf]
        %v2489 = vld [vmem:[%s0 + $0x20] sm:$0xf]
        %v2490 = vld [vmem:[%s0 + $0x24] sm:$0xf]
        %v2491 = vld [vmem:[%s0 + $0x28] sm:$0xf]
        %v2492 = vld [vmem:[%s0 + $0x2c] sm:$0xf]
        %v2493 = vld [vmem:[%s0 + $0x30] sm:$0xf]
        %v2494 = vld [vmem:[%s0 + $0x34] sm:$0xf]
        %v2495 = vld [vmem:[%s0 + $0x38] sm:$0xf]
        %v2496 = vld [vmem:[%s0 + $0x3c] sm:$0xf]
        %v2561 = vunpack.c.l.b16 %v2417
        %v2562 = vunpack.c.l.b16 %v2418
        %v2563 = vunpack.c.l.b16 %v2419
        %v2564 = vunpack.c.l.b16 %v2420
        %v2565 = vunpack.c.l.b16 %v2421
        %v2566 = vunpack.c.l.b16 %v2422
        %v2567 = vunpack.c.l.b16 %v2423
        %v2568 = vunpack.c.l.b16 %v2424
        %v2569 = vunpack.c.l.b16 %v2425
        %v2570 = vunpack.c.l.b16 %v2426
        %v2571 = vunpack.c.l.b16 %v2427
        %v2572 = vunpack.c.l.b16 %v2428
        %v2573 = vunpack.c.l.b16 %v2429
        %v2574 = vunpack.c.l.b16 %v2430
        %v2575 = vunpack.c.l.b16 %v2431
        %v2576 = vunpack.c.l.b16 %v2432
        %v2577 = vunpack.c.l.b16 %v2433
        %v2578 = vunpack.c.l.b16 %v2434
        %v2579 = vunpack.c.l.b16 %v2435
        %v2580 = vunpack.c.l.b16 %v2436
        %v2581 = vunpack.c.l.b16 %v2437
        %v2582 = vunpack.c.l.b16 %v2438
        %v2583 = vunpack.c.l.b16 %v2439
        %v2584 = vunpack.c.l.b16 %v2440
        %v2585 = vunpack.c.l.b16 %v2441
        %v2586 = vunpack.c.l.b16 %v2442
        %v2587 = vunpack.c.l.b16 %v2443
        %v2588 = vunpack.c.l.b16 %v2444
        %v2589 = vunpack.c.l.b16 %v2445
        %v2590 = vunpack.c.l.b16 %v2446
        %v2591 = vunpack.c.l.b16 %v2447
        %v2592 = vunpack.c.l.b16 %v2448
        %v2593 = vunpack.c.l.b16 %v2449
        %v2594 = vunpack.c.l.b16 %v2450
        %v2595 = vunpack.c.l.b16 %v2451
        %v2596 = vunpack.c.l.b16 %v2452
        %v2597 = vunpack.c.l.b16 %v2453
        %v2598 = vunpack.c.l.b16 %v2454
        %v2599 = vunpack.c.l.b16 %v2455
        %v2600 = vunpack.c.l.b16 %v2456
        %v2601 = vunpack.c.l.b16 %v2457
        %v2602 = vunpack.c.l.b16 %v2458
        %v2603 = vunpack.c.l.b16 %v2459
        %v2604 = vunpack.c.l.b16 %v2460
        %v2605 = vunpack.c.l.b16 %v2461
        %v2606 = vunpack.c.l.b16 %v2462
        %v2607 = vunpack.c.l.b16 %v2463
        %v2608 = vunpack.c.l.b16 %v2464
        %v2609 = vunpack.c.l.b16 %v2465
        %v2610 = vunpack.c.l.b16 %v2466
        %v2611 = vunpack.c.l.b16 %v2467
        %v2612 = vunpack.c.l.b16 %v2468
        %v2613 = vunpack.c.l.b16 %v2469
        %v2614 = vunpack.c.l.b16 %v2470
        %v2615 = vunpack.c.l.b16 %v2471
        %v2616 = vunpack.c.l.b16 %v2472
        %v2617 = vunpack.c.l.b16 %v2473
        %v2618 = vunpack.c.l.b16 %v2474
        %v2619 = vunpack.c.l.b16 %v2475
        %v2620 = vunpack.c.l.b16 %v2476
        %v2621 = vunpack.c.l.b16 %v2477
        %v2622 = vunpack.c.l.b16 %v2478
        %v2623 = vunpack.c.l.b16 %v2479
        %v2624 = vunpack.c.l.b16 %v2480
        %v2625 = vpack.c.b16 %v2562, %v2561
        %v2626 = vpack.c.b16 %v2564, %v2563
        %v2627 = vpack.c.b16 %v2566, %v2565
        %v2628 = vpack.c.b16 %v2568, %v2567
        %v2629 = vpack.c.b16 %v2570, %v2569
        %v2630 = vpack.c.b16 %v2572, %v2571
        %v2631 = vpack.c.b16 %v2574, %v2573
        %v2632 = vpack.c.b16 %v2576, %v2575
        %v2633 = vpack.c.b16 %v2578, %v2577
        %v2634 = vpack.c.b16 %v2580, %v2579
        %v2635 = vpack.c.b16 %v2582, %v2581
        %v2636 = vpack.c.b16 %v2584, %v2583
        %v2637 = vpack.c.b16 %v2586, %v2585
        %v2638 = vpack.c.b16 %v2588, %v2587
        %v2639 = vpack.c.b16 %v2590, %v2589
        %v2640 = vpack.c.b16 %v2592, %v2591
        %v2641 = vpack.c.b16 %v2594, %v2593
        %v2642 = vpack.c.b16 %v2596, %v2595
        %v2643 = vpack.c.b16 %v2598, %v2597
        %v2644 = vpack.c.b16 %v2600, %v2599
        %v2645 = vpack.c.b16 %v2602, %v2601
        %v2646 = vpack.c.b16 %v2604, %v2603
        %v2647 = vpack.c.b16 %v2606, %v2605
        %v2648 = vpack.c.b16 %v2608, %v2607
        %v2649 = vpack.c.b16 %v2610, %v2609
        %v2650 = vpack.c.b16 %v2612, %v2611
        %v2651 = vpack.c.b16 %v2614, %v2613
        %v2652 = vpack.c.b16 %v2616, %v2615
        %v2653 = vpack.c.b16 %v2618, %v2617
        %v2654 = vpack.c.b16 %v2620, %v2619
        %v2655 = vpack.c.b16 %v2622, %v2621
        %v2656 = vpack.c.b16 %v2624, %v2623
        %v2705 = vunpack.c.l.b16 %v2481
        %v2706 = vunpack.c.l.b16 %v2482
        %v2707 = vunpack.c.l.b16 %v2483
        %v2708 = vunpack.c.l.b16 %v2484
        %v2709 = vunpack.c.l.b16 %v2485
        %v2710 = vunpack.c.l.b16 %v2486
        %v2711 = vunpack.c.l.b16 %v2487
        %v2712 = vunpack.c.l.b16 %v2488
        %v2713 = vunpack.c.l.b16 %v2489
        %v2714 = vunpack.c.l.b16 %v2490
        %v2715 = vunpack.c.l.b16 %v2491
        %v2716 = vunpack.c.l.b16 %v2492
        %v2717 = vunpack.c.l.b16 %v2493
        %v2718 = vunpack.c.l.b16 %v2494
        %v2719 = vunpack.c.l.b16 %v2495
        %v2720 = vunpack.c.l.b16 %v2496
        %v2721 = vpack.c.b16 %v2706, %v2705
        %v2722 = vpack.c.b16 %v2708, %v2707
        %v2723 = vpack.c.b16 %v2710, %v2709
        %v2724 = vpack.c.b16 %v2712, %v2711
        %v2725 = vpack.c.b16 %v2714, %v2713
        %v2726 = vpack.c.b16 %v2716, %v2715
        %v2727 = vpack.c.b16 %v2718, %v2717
        %v2728 = vpack.c.b16 %v2720, %v2719
        %2737 = vmatpush.bf16.msra.mxu0 %v2728
        %2738 = vmatpush.bf16.msra.mxu0 %v2727
        %2739 = vmatpush.bf16.msra.mxu0 %v2726
        %2740 = vmatpush.bf16.msra.mxu0 %v2725
        %2741 = vmatpush.bf16.msra.mxu0 %v2724
        %2742 = vmatpush.bf16.msra.mxu0 %v2723
        %2743 = vmatpush.bf16.msra.mxu0 %v2722
        %2744 = vmatpush.bf16.msra.mxu0 %v2721
        %2745 = vmatmul.bf16.gmra.mxu0 %v2625
        %v2746 = vpop.f32.mrf.mxu0
        %v2747 = vadd.f32 0.0, %v2746
        %v2748 = vpop.f32.mrf.mxu0
        %v2749 = vadd.f32 0.0, %v2748
        %2750 = vmatmul.bf16.gmra.mxu0 %v2626
        %v2751 = vpop.f32.mrf.mxu0
        %v2752 = vadd.f32 0.0, %v2751
        %v2753 = vpop.f32.mrf.mxu0
        %v2754 = vadd.f32 0.0, %v2753
        %2755 = vmatmul.bf16.gmra.mxu0 %v2627
        %v2756 = vpop.f32.mrf.mxu0
        %v2757 = vadd.f32 0.0, %v2756
        %v2758 = vpop.f32.mrf.mxu0
        %v2759 = vadd.f32 0.0, %v2758
        %2760 = vmatmul.bf16.gmra.mxu0 %v2628
        %v2761 = vpop.f32.mrf.mxu0
        %v2762 = vadd.f32 0.0, %v2761
        %v2763 = vpop.f32.mrf.mxu0
        %v2764 = vadd.f32 0.0, %v2763
        %2765 = vmatmul.bf16.gmra.mxu0 %v2629
        %v2766 = vpop.f32.mrf.mxu0
        %v2767 = vadd.f32 0.0, %v2766
        %v2768 = vpop.f32.mrf.mxu0
        %v2769 = vadd.f32 0.0, %v2768
        %2770 = vmatmul.bf16.gmra.mxu0 %v2630
        %v2771 = vpop.f32.mrf.mxu0
        %v2772 = vadd.f32 0.0, %v2771
        %v2773 = vpop.f32.mrf.mxu0
        %v2774 = vadd.f32 0.0, %v2773
        %2775 = vmatmul.bf16.gmra.mxu0 %v2631
        %v2776 = vpop.f32.mrf.mxu0
        %v2777 = vadd.f32 0.0, %v2776
        %v2778 = vpop.f32.mrf.mxu0
        %v2779 = vadd.f32 0.0, %v2778
        %2780 = vmatmul.bf16.gmra.mxu0 %v2632
        %v2781 = vpop.f32.mrf.mxu0
        %v2782 = vadd.f32 0.0, %v2781
        %v2783 = vpop.f32.mrf.mxu0
        %v2784 = vadd.f32 0.0, %v2783
        %2785 = vmatmul.bf16.gmra.mxu0 %v2633
        %v2786 = vpop.f32.mrf.mxu0
        %v2787 = vadd.f32 0.0, %v2786
        %v2788 = vpop.f32.mrf.mxu0
        %v2789 = vadd.f32 0.0, %v2788
        %2790 = vmatmul.bf16.gmra.mxu0 %v2634
        %v2791 = vpop.f32.mrf.mxu0
        %v2792 = vadd.f32 0.0, %v2791
        %v2793 = vpop.f32.mrf.mxu0
        %v2794 = vadd.f32 0.0, %v2793
        %2795 = vmatmul.bf16.gmra.mxu0 %v2635
        %v2796 = vpop.f32.mrf.mxu0
        %v2797 = vadd.f32 0.0, %v2796
        %v2798 = vpop.f32.mrf.mxu0
        %v2799 = vadd.f32 0.0, %v2798
        %2800 = vmatmul.bf16.gmra.mxu0 %v2636
        %v2801 = vpop.f32.mrf.mxu0
        %v2802 = vadd.f32 0.0, %v2801
        %v2803 = vpop.f32.mrf.mxu0
        %v2804 = vadd.f32 0.0, %v2803
        %2805 = vmatmul.bf16.gmra.mxu0 %v2637
        %v2806 = vpop.f32.mrf.mxu0
        %v2807 = vadd.f32 0.0, %v2806
        %v2808 = vpop.f32.mrf.mxu0
        %v2809 = vadd.f32 0.0, %v2808
        %2810 = vmatmul.bf16.gmra.mxu0 %v2638
        %v2811 = vpop.f32.mrf.mxu0
        %v2812 = vadd.f32 0.0, %v2811
        %v2813 = vpop.f32.mrf.mxu0
        %v2814 = vadd.f32 0.0, %v2813
        %2815 = vmatmul.bf16.gmra.mxu0 %v2639
        %v2816 = vpop.f32.mrf.mxu0
        %v2817 = vadd.f32 0.0, %v2816
        %v2818 = vpop.f32.mrf.mxu0
        %v2819 = vadd.f32 0.0, %v2818
        %2820 = vmatmul.bf16.gmra.mxu0 %v2640
        %v2821 = vpop.f32.mrf.mxu0
        %v2822 = vadd.f32 0.0, %v2821
        %v2823 = vpop.f32.mrf.mxu0
        %v2824 = vadd.f32 0.0, %v2823
        %2825 = vmatmul.bf16.gmra.mxu0 %v2641
        %v2826 = vpop.f32.mrf.mxu0
        %v2827 = vadd.f32 0.0, %v2826
        %v2828 = vpop.f32.mrf.mxu0
        %v2829 = vadd.f32 0.0, %v2828
        %2830 = vmatmul.bf16.gmra.mxu0 %v2642
        %v2831 = vpop.f32.mrf.mxu0
        %v2832 = vadd.f32 0.0, %v2831
        %v2833 = vpop.f32.mrf.mxu0
        %v2834 = vadd.f32 0.0, %v2833
        %2835 = vmatmul.bf16.gmra.mxu0 %v2643
        %v2836 = vpop.f32.mrf.mxu0
        %v2837 = vadd.f32 0.0, %v2836
        %v2838 = vpop.f32.mrf.mxu0
        %v2839 = vadd.f32 0.0, %v2838
        %2840 = vmatmul.bf16.gmra.mxu0 %v2644
        %v2841 = vpop.f32.mrf.mxu0
        %v2842 = vadd.f32 0.0, %v2841
        %v2843 = vpop.f32.mrf.mxu0
        %v2844 = vadd.f32 0.0, %v2843
        %2845 = vmatmul.bf16.gmra.mxu0 %v2645
        %v2846 = vpop.f32.mrf.mxu0
        %v2847 = vadd.f32 0.0, %v2846
        %v2848 = vpop.f32.mrf.mxu0
        %v2849 = vadd.f32 0.0, %v2848
        %2850 = vmatmul.bf16.gmra.mxu0 %v2646
        %v2851 = vpop.f32.mrf.mxu0
        %v2852 = vadd.f32 0.0, %v2851
        %v2853 = vpop.f32.mrf.mxu0
        %v2854 = vadd.f32 0.0, %v2853
        %2855 = vmatmul.bf16.gmra.mxu0 %v2647
        %v2856 = vpop.f32.mrf.mxu0
        %v2857 = vadd.f32 0.0, %v2856
        %v2858 = vpop.f32.mrf.mxu0
        %v2859 = vadd.f32 0.0, %v2858
        %2860 = vmatmul.bf16.gmra.mxu0 %v2648
        %v2861 = vpop.f32.mrf.mxu0
        %v2862 = vadd.f32 0.0, %v2861
        %v2863 = vpop.f32.mrf.mxu0
        %v2864 = vadd.f32 0.0, %v2863
        %2865 = vmatmul.bf16.gmra.mxu0 %v2649
        %v2866 = vpop.f32.mrf.mxu0
        %v2867 = vadd.f32 0.0, %v2866
        %v2868 = vpop.f32.mrf.mxu0
        %v2869 = vadd.f32 0.0, %v2868
        %2870 = vmatmul.bf16.gmra.mxu0 %v2650
        %v2871 = vpop.f32.mrf.mxu0
        %v2872 = vadd.f32 0.0, %v2871
        %v2873 = vpop.f32.mrf.mxu0
        %v2874 = vadd.f32 0.0, %v2873
        %2875 = vmatmul.bf16.gmra.mxu0 %v2651
        %v2876 = vpop.f32.mrf.mxu0
        %v2877 = vadd.f32 0.0, %v2876
        %v2878 = vpop.f32.mrf.mxu0
        %v2879 = vadd.f32 0.0, %v2878
        %2880 = vmatmul.bf16.gmra.mxu0 %v2652
        %v2881 = vpop.f32.mrf.mxu0
        %v2882 = vadd.f32 0.0, %v2881
        %v2883 = vpop.f32.mrf.mxu0
        %v2884 = vadd.f32 0.0, %v2883
        %2885 = vmatmul.bf16.gmra.mxu0 %v2653
        %v2886 = vpop.f32.mrf.mxu0
        %v2887 = vadd.f32 0.0, %v2886
        %v2888 = vpop.f32.mrf.mxu0
        %v2889 = vadd.f32 0.0, %v2888
        %2890 = vmatmul.bf16.gmra.mxu0 %v2654
        %v2891 = vpop.f32.mrf.mxu0
        %v2892 = vadd.f32 0.0, %v2891
        %v2893 = vpop.f32.mrf.mxu0
        %v2894 = vadd.f32 0.0, %v2893
        %2895 = vmatmul.bf16.gmra.mxu0 %v2655
        %v2896 = vpop.f32.mrf.mxu0
        %v2897 = vadd.f32 0.0, %v2896
        %v2898 = vpop.f32.mrf.mxu0
        %v2899 = vadd.f32 0.0, %v2898
        %2900 = vmatmul.bf16.gmra.mxu0 %v2656
        %v2901 = vpop.f32.mrf.mxu0
        %v2902 = vadd.f32 0.0, %v2901
        %v2903 = vpop.f32.mrf.mxu0
        %v2904 = vadd.f32 0.0, %v2903
        %2905 = vdwg.mxu0
        %v2906 = vmul.f32 %v2747, 0.01
        %v2907 = vmul.f32 %v2749, 0.01
        %v2908 = vmul.f32 %v2752, 0.01
        %v2909 = vmul.f32 %v2754, 0.01
        %v2910 = vmul.f32 %v2757, 0.01
        %v2911 = vmul.f32 %v2759, 0.01
        %v2912 = vmul.f32 %v2762, 0.01
        %v2913 = vmul.f32 %v2764, 0.01
        %v2914 = vmul.f32 %v2767, 0.01
        %v2915 = vmul.f32 %v2769, 0.01
        %v2916 = vmul.f32 %v2772, 0.01
        %v2917 = vmul.f32 %v2774, 0.01
        %v2918 = vmul.f32 %v2777, 0.01
        %v2919 = vmul.f32 %v2779, 0.01
        %v2920 = vmul.f32 %v2782, 0.01
        %v2921 = vmul.f32 %v2784, 0.01
        %v2922 = vmul.f32 %v2787, 0.01
        %v2923 = vmul.f32 %v2789, 0.01
        %v2924 = vmul.f32 %v2792, 0.01
        %v2925 = vmul.f32 %v2794, 0.01
        %v2926 = vmul.f32 %v2797, 0.01
        %v2927 = vmul.f32 %v2799, 0.01
        %v2928 = vmul.f32 %v2802, 0.01
        %v2929 = vmul.f32 %v2804, 0.01
        %v2930 = vmul.f32 %v2807, 0.01
        %v2931 = vmul.f32 %v2809, 0.01
        %v2932 = vmul.f32 %v2812, 0.01
        %v2933 = vmul.f32 %v2814, 0.01
        %v2934 = vmul.f32 %v2817, 0.01
        %v2935 = vmul.f32 %v2819, 0.01
        %v2936 = vmul.f32 %v2822, 0.01
        %v2937 = vmul.f32 %v2824, 0.01
        %v2938 = vmul.f32 %v2827, 0.01
        %v2939 = vmul.f32 %v2829, 0.01
        %v2940 = vmul.f32 %v2832, 0.01
        %v2941 = vmul.f32 %v2834, 0.01
        %v2942 = vmul.f32 %v2837, 0.01
        %v2943 = vmul.f32 %v2839, 0.01
        %v2944 = vmul.f32 %v2842, 0.01
        %v2945 = vmul.f32 %v2844, 0.01
        %v2946 = vmul.f32 %v2847, 0.01
        %v2947 = vmul.f32 %v2849, 0.01
        %v2948 = vmul.f32 %v2852, 0.01
        %v2949 = vmul.f32 %v2854, 0.01
        %v2950 = vmul.f32 %v2857, 0.01
        %v2951 = vmul.f32 %v2859, 0.01
        %v2952 = vmul.f32 %v2862, 0.01
        %v2953 = vmul.f32 %v2864, 0.01
        %v2954 = vmul.f32 %v2867, 0.01
        %v2955 = vmul.f32 %v2869, 0.01
        %v2956 = vmul.f32 %v2872, 0.01
        %v2957 = vmul.f32 %v2874, 0.01
        %v2958 = vmul.f32 %v2877, 0.01
        %v2959 = vmul.f32 %v2879, 0.01
        %v2960 = vmul.f32 %v2882, 0.01
        %v2961 = vmul.f32 %v2884, 0.01
        %v2962 = vmul.f32 %v2887, 0.01
        %v2963 = vmul.f32 %v2889, 0.01
        %v2964 = vmul.f32 %v2892, 0.01
        %v2965 = vmul.f32 %v2894, 0.01
        %v2966 = vmul.f32 %v2897, 0.01
        %v2967 = vmul.f32 %v2899, 0.01
        %v2968 = vmul.f32 %v2902, 0.01
        %v2969 = vmul.f32 %v2904, 0.01
        %v2970 = vmax.f32 %v2747, %v2906
        %v2971 = vmax.f32 %v2749, %v2907
        %v2972 = vmax.f32 %v2752, %v2908
        %v2973 = vmax.f32 %v2754, %v2909
        %v2974 = vmax.f32 %v2757, %v2910
        %v2975 = vmax.f32 %v2759, %v2911
        %v2976 = vmax.f32 %v2762, %v2912
        %v2977 = vmax.f32 %v2764, %v2913
        %v2978 = vmax.f32 %v2767, %v2914
        %v2979 = vmax.f32 %v2769, %v2915
        %v2980 = vmax.f32 %v2772, %v2916
        %v2981 = vmax.f32 %v2774, %v2917
        %v2982 = vmax.f32 %v2777, %v2918
        %v2983 = vmax.f32 %v2779, %v2919
        %v2984 = vmax.f32 %v2782, %v2920
        %v2985 = vmax.f32 %v2784, %v2921
        %v2986 = vmax.f32 %v2787, %v2922
        %v2987 = vmax.f32 %v2789, %v2923
        %v2988 = vmax.f32 %v2792, %v2924
        %v2989 = vmax.f32 %v2794, %v2925
        %v2990 = vmax.f32 %v2797, %v2926
        %v2991 = vmax.f32 %v2799, %v2927
        %v2992 = vmax.f32 %v2802, %v2928
        %v2993 = vmax.f32 %v2804, %v2929
        %v2994 = vmax.f32 %v2807, %v2930
        %v2995 = vmax.f32 %v2809, %v2931
        %v2996 = vmax.f32 %v2812, %v2932
        %v2997 = vmax.f32 %v2814, %v2933
        %v2998 = vmax.f32 %v2817, %v2934
        %v2999 = vmax.f32 %v2819, %v2935
        %v3000 = vmax.f32 %v2822, %v2936
        %v3001 = vmax.f32 %v2824, %v2937
        %v3002 = vmax.f32 %v2827, %v2938
        %v3003 = vmax.f32 %v2829, %v2939
        %v3004 = vmax.f32 %v2832, %v2940
        %v3005 = vmax.f32 %v2834, %v2941
        %v3006 = vmax.f32 %v2837, %v2942
        %v3007 = vmax.f32 %v2839, %v2943
        %v3008 = vmax.f32 %v2842, %v2944
        %v3009 = vmax.f32 %v2844, %v2945
        %v3010 = vmax.f32 %v2847, %v2946
        %v3011 = vmax.f32 %v2849, %v2947
        %v3012 = vmax.f32 %v2852, %v2948
        %v3013 = vmax.f32 %v2854, %v2949
        %v3014 = vmax.f32 %v2857, %v2950
        %v3015 = vmax.f32 %v2859, %v2951
        %v3016 = vmax.f32 %v2862, %v2952
        %v3017 = vmax.f32 %v2864, %v2953
        %v3018 = vmax.f32 %v2867, %v2954
        %v3019 = vmax.f32 %v2869, %v2955
        %v3020 = vmax.f32 %v2872, %v2956
        %v3021 = vmax.f32 %v2874, %v2957
        %v3022 = vmax.f32 %v2877, %v2958
        %v3023 = vmax.f32 %v2879, %v2959
        %v3024 = vmax.f32 %v2882, %v2960
        %v3025 = vmax.f32 %v2884, %v2961
        %v3026 = vmax.f32 %v2887, %v2962
        %v3027 = vmax.f32 %v2889, %v2963
        %v3028 = vmax.f32 %v2892, %v2964
        %v3029 = vmax.f32 %v2894, %v2965
        %v3030 = vmax.f32 %v2897, %v2966
        %v3031 = vmax.f32 %v2899, %v2967
        %v3032 = vmax.f32 %v2902, %v2968
        %v3033 = vmax.f32 %v2904, %v2969
        %v3034 = vpack.c.bf16 %v2971, %v2970
        %v3035 = vpack.c.bf16 %v2973, %v2972
        %v3036 = vpack.c.bf16 %v2975, %v2974
        %v3037 = vpack.c.bf16 %v2977, %v2976
        %v3038 = vpack.c.bf16 %v2979, %v2978
        %v3039 = vpack.c.bf16 %v2981, %v2980
        %v3040 = vpack.c.bf16 %v2983, %v2982
        %v3041 = vpack.c.bf16 %v2985, %v2984
        %v3042 = vpack.c.bf16 %v2987, %v2986
        %v3043 = vpack.c.bf16 %v2989, %v2988
        %v3044 = vpack.c.bf16 %v2991, %v2990
        %v3045 = vpack.c.bf16 %v2993, %v2992
        %v3046 = vpack.c.bf16 %v2995, %v2994
        %v3047 = vpack.c.bf16 %v2997, %v2996
        %v3048 = vpack.c.bf16 %v2999, %v2998
        %v3049 = vpack.c.bf16 %v3001, %v3000
        %v3050 = vpack.c.bf16 %v3003, %v3002
        %v3051 = vpack.c.bf16 %v3005, %v3004
        %v3052 = vpack.c.bf16 %v3007, %v3006
        %v3053 = vpack.c.bf16 %v3009, %v3008
        %v3054 = vpack.c.bf16 %v3011, %v3010
        %v3055 = vpack.c.bf16 %v3013, %v3012
        %v3056 = vpack.c.bf16 %v3015, %v3014
        %v3057 = vpack.c.bf16 %v3017, %v3016
        %v3058 = vpack.c.bf16 %v3019, %v3018
        %v3059 = vpack.c.bf16 %v3021, %v3020
        %v3060 = vpack.c.bf16 %v3023, %v3022
        %v3061 = vpack.c.bf16 %v3025, %v3024
        %v3062 = vpack.c.bf16 %v3027, %v3026
        %v3063 = vpack.c.bf16 %v3029, %v3028
        %v3064 = vpack.c.bf16 %v3031, %v3030
        %v3065 = vpack.c.bf16 %v3033, %v3032
        %v3066 = vld [vmem:[%s1] sm:$0xf]
        %v3067 = vld [vmem:[%s1 + $0x4] sm:$0xf]
        %v3068 = vld [vmem:[%s1 + $0x8] sm:$0xf]
        %v3069 = vld [vmem:[%s1 + $0xc] sm:$0xf]
        %v3070 = vld [vmem:[%s1 + $0x10] sm:$0xf]
        %v3071 = vld [vmem:[%s1 + $0x14] sm:$0xf]
        %v3072 = vld [vmem:[%s1 + $0x18] sm:$0xf]
        %v3073 = vld [vmem:[%s1 + $0x1c] sm:$0xf]
        %v3074 = vld [vmem:[%s1 + $0x20] sm:$0xf]
        %v3075 = vld [vmem:[%s1 + $0x24] sm:$0xf]
        %v3076 = vld [vmem:[%s1 + $0x28] sm:$0xf]
        %v3077 = vld [vmem:[%s1 + $0x2c] sm:$0xf]
        %v3078 = vld [vmem:[%s1 + $0x30] sm:$0xf]
        %v3079 = vld [vmem:[%s1 + $0x34] sm:$0xf]
        %v3080 = vld [vmem:[%s1 + $0x38] sm:$0xf]
        %v3081 = vld [vmem:[%s1 + $0x3c] sm:$0xf]
        %v3098 = vunpack.c.l.b16 %v3066
        %v3099 = vunpack.c.l.b16 %v3067
        %v3100 = vunpack.c.l.b16 %v3068
        %v3101 = vunpack.c.l.b16 %v3069
        %v3102 = vunpack.c.l.b16 %v3070
        %v3103 = vunpack.c.l.b16 %v3071
        %v3104 = vunpack.c.l.b16 %v3072
        %v3105 = vunpack.c.l.b16 %v3073
        %v3106 = vunpack.c.l.b16 %v3074
        %v3107 = vunpack.c.l.b16 %v3075
        %v3108 = vunpack.c.l.b16 %v3076
        %v3109 = vunpack.c.l.b16 %v3077
        %v3110 = vunpack.c.l.b16 %v3078
        %v3111 = vunpack.c.l.b16 %v3079
        %v3112 = vunpack.c.l.b16 %v3080
        %v3113 = vunpack.c.l.b16 %v3081
        %v3114 = vpack.c.b16 %v3099, %v3098
        %v3115 = vpack.c.b16 %v3101, %v3100
        %v3116 = vpack.c.b16 %v3103, %v3102
        %v3117 = vpack.c.b16 %v3105, %v3104
        %v3118 = vpack.c.b16 %v3107, %v3106
        %v3119 = vpack.c.b16 %v3109, %v3108
        %v3120 = vpack.c.b16 %v3111, %v3110
        %v3121 = vpack.c.b16 %v3113, %v3112
        %3130 = vmatpush.bf16.msra.mxu0 %v3121
        %3131 = vmatpush.bf16.msra.mxu0 %v3120
        %3132 = vmatpush.bf16.msra.mxu0 %v3119
        %3133 = vmatpush.bf16.msra.mxu0 %v3118
        %3134 = vmatpush.bf16.msra.mxu0 %v3117
        %3135 = vmatpush.bf16.msra.mxu0 %v3116
        %3136 = vmatpush.bf16.msra.mxu0 %v3115
        %3137 = vmatpush.bf16.msra.mxu0 %v3114
        %3138 = vmatmul.bf16.gmra.mxu0 %v3034
        %v3139 = vpop.f32.mrf.mxu0
        %v3140 = vadd.f32 0.0, %v3139
        %v3141 = vpop.f32.mrf.mxu0
        %v3142 = vadd.f32 0.0, %v3141
        %3143 = vmatmul.bf16.gmra.mxu0 %v3035
        %v3144 = vpop.f32.mrf.mxu0
        %v3145 = vadd.f32 0.0, %v3144
        %v3146 = vpop.f32.mrf.mxu0
        %v3147 = vadd.f32 0.0, %v3146
        %3148 = vmatmul.bf16.gmra.mxu0 %v3036
        %v3149 = vpop.f32.mrf.mxu0
        %v3150 = vadd.f32 0.0, %v3149
        %v3151 = vpop.f32.mrf.mxu0
        %v3152 = vadd.f32 0.0, %v3151
        %3153 = vmatmul.bf16.gmra.mxu0 %v3037
        %v3154 = vpop.f32.mrf.mxu0
        %v3155 = vadd.f32 0.0, %v3154
        %v3156 = vpop.f32.mrf.mxu0
        %v3157 = vadd.f32 0.0, %v3156
        %3158 = vmatmul.bf16.gmra.mxu0 %v3038
        %v3159 = vpop.f32.mrf.mxu0
        %v3160 = vadd.f32 0.0, %v3159
        %v3161 = vpop.f32.mrf.mxu0
        %v3162 = vadd.f32 0.0, %v3161
        %3163 = vmatmul.bf16.gmra.mxu0 %v3039
        %v3164 = vpop.f32.mrf.mxu0
        %v3165 = vadd.f32 0.0, %v3164
        %v3166 = vpop.f32.mrf.mxu0
        %v3167 = vadd.f32 0.0, %v3166
        %3168 = vmatmul.bf16.gmra.mxu0 %v3040
        %v3169 = vpop.f32.mrf.mxu0
        %v3170 = vadd.f32 0.0, %v3169
        %v3171 = vpop.f32.mrf.mxu0
        %v3172 = vadd.f32 0.0, %v3171
        %3173 = vmatmul.bf16.gmra.mxu0 %v3041
        %v3174 = vpop.f32.mrf.mxu0
        %v3175 = vadd.f32 0.0, %v3174
        %v3176 = vpop.f32.mrf.mxu0
        %v3177 = vadd.f32 0.0, %v3176
        %3178 = vmatmul.bf16.gmra.mxu0 %v3042
        %v3179 = vpop.f32.mrf.mxu0
        %v3180 = vadd.f32 0.0, %v3179
        %v3181 = vpop.f32.mrf.mxu0
        %v3182 = vadd.f32 0.0, %v3181
        %3183 = vmatmul.bf16.gmra.mxu0 %v3043
        %v3184 = vpop.f32.mrf.mxu0
        %v3185 = vadd.f32 0.0, %v3184
        %v3186 = vpop.f32.mrf.mxu0
        %v3187 = vadd.f32 0.0, %v3186
        %3188 = vmatmul.bf16.gmra.mxu0 %v3044
        %v3189 = vpop.f32.mrf.mxu0
        %v3190 = vadd.f32 0.0, %v3189
        %v3191 = vpop.f32.mrf.mxu0
        %v3192 = vadd.f32 0.0, %v3191
        %3193 = vmatmul.bf16.gmra.mxu0 %v3045
        %v3194 = vpop.f32.mrf.mxu0
        %v3195 = vadd.f32 0.0, %v3194
        %v3196 = vpop.f32.mrf.mxu0
        %v3197 = vadd.f32 0.0, %v3196
        %3198 = vmatmul.bf16.gmra.mxu0 %v3046
        %v3199 = vpop.f32.mrf.mxu0
        %v3200 = vadd.f32 0.0, %v3199
        %v3201 = vpop.f32.mrf.mxu0
        %v3202 = vadd.f32 0.0, %v3201
        %3203 = vmatmul.bf16.gmra.mxu0 %v3047
        %v3204 = vpop.f32.mrf.mxu0
        %v3205 = vadd.f32 0.0, %v3204
        %v3206 = vpop.f32.mrf.mxu0
        %v3207 = vadd.f32 0.0, %v3206
        %3208 = vmatmul.bf16.gmra.mxu0 %v3048
        %v3209 = vpop.f32.mrf.mxu0
        %v3210 = vadd.f32 0.0, %v3209
        %v3211 = vpop.f32.mrf.mxu0
        %v3212 = vadd.f32 0.0, %v3211
        %3213 = vmatmul.bf16.gmra.mxu0 %v3049
        %v3214 = vpop.f32.mrf.mxu0
        %v3215 = vadd.f32 0.0, %v3214
        %v3216 = vpop.f32.mrf.mxu0
        %v3217 = vadd.f32 0.0, %v3216
        %3218 = vmatmul.bf16.gmra.mxu0 %v3050
        %v3219 = vpop.f32.mrf.mxu0
        %v3220 = vadd.f32 0.0, %v3219
        %v3221 = vpop.f32.mrf.mxu0
        %v3222 = vadd.f32 0.0, %v3221
        %3223 = vmatmul.bf16.gmra.mxu0 %v3051
        %v3224 = vpop.f32.mrf.mxu0
        %v3225 = vadd.f32 0.0, %v3224
        %v3226 = vpop.f32.mrf.mxu0
        %v3227 = vadd.f32 0.0, %v3226
        %3228 = vmatmul.bf16.gmra.mxu0 %v3052
        %v3229 = vpop.f32.mrf.mxu0
        %v3230 = vadd.f32 0.0, %v3229
        %v3231 = vpop.f32.mrf.mxu0
        %v3232 = vadd.f32 0.0, %v3231
        %3233 = vmatmul.bf16.gmra.mxu0 %v3053
        %v3234 = vpop.f32.mrf.mxu0
        %v3235 = vadd.f32 0.0, %v3234
        %v3236 = vpop.f32.mrf.mxu0
        %v3237 = vadd.f32 0.0, %v3236
        %3238 = vmatmul.bf16.gmra.mxu0 %v3054
        %v3239 = vpop.f32.mrf.mxu0
        %v3240 = vadd.f32 0.0, %v3239
        %v3241 = vpop.f32.mrf.mxu0
        %v3242 = vadd.f32 0.0, %v3241
        %3243 = vmatmul.bf16.gmra.mxu0 %v3055
        %v3244 = vpop.f32.mrf.mxu0
        %v3245 = vadd.f32 0.0, %v3244
        %v3246 = vpop.f32.mrf.mxu0
        %v3247 = vadd.f32 0.0, %v3246
        %3248 = vmatmul.bf16.gmra.mxu0 %v3056
        %v3249 = vpop.f32.mrf.mxu0
        %v3250 = vadd.f32 0.0, %v3249
        %v3251 = vpop.f32.mrf.mxu0
        %v3252 = vadd.f32 0.0, %v3251
        %3253 = vmatmul.bf16.gmra.mxu0 %v3057
        %v3254 = vpop.f32.mrf.mxu0
        %v3255 = vadd.f32 0.0, %v3254
        %v3256 = vpop.f32.mrf.mxu0
        %v3257 = vadd.f32 0.0, %v3256
        %3258 = vmatmul.bf16.gmra.mxu0 %v3058
        %v3259 = vpop.f32.mrf.mxu0
        %v3260 = vadd.f32 0.0, %v3259
        %v3261 = vpop.f32.mrf.mxu0
        %v3262 = vadd.f32 0.0, %v3261
        %3263 = vmatmul.bf16.gmra.mxu0 %v3059
        %v3264 = vpop.f32.mrf.mxu0
        %v3265 = vadd.f32 0.0, %v3264
        %v3266 = vpop.f32.mrf.mxu0
        %v3267 = vadd.f32 0.0, %v3266
        %3268 = vmatmul.bf16.gmra.mxu0 %v3060
        %v3269 = vpop.f32.mrf.mxu0
        %v3270 = vadd.f32 0.0, %v3269
        %v3271 = vpop.f32.mrf.mxu0
        %v3272 = vadd.f32 0.0, %v3271
        %3273 = vmatmul.bf16.gmra.mxu0 %v3061
        %v3274 = vpop.f32.mrf.mxu0
        %v3275 = vadd.f32 0.0, %v3274
        %v3276 = vpop.f32.mrf.mxu0
        %v3277 = vadd.f32 0.0, %v3276
        %3278 = vmatmul.bf16.gmra.mxu0 %v3062
        %v3279 = vpop.f32.mrf.mxu0
        %v3280 = vadd.f32 0.0, %v3279
        %v3281 = vpop.f32.mrf.mxu0
        %v3282 = vadd.f32 0.0, %v3281
        %3283 = vmatmul.bf16.gmra.mxu0 %v3063
        %v3284 = vpop.f32.mrf.mxu0
        %v3285 = vadd.f32 0.0, %v3284
        %v3286 = vpop.f32.mrf.mxu0
        %v3287 = vadd.f32 0.0, %v3286
        %3288 = vmatmul.bf16.gmra.mxu0 %v3064
        %v3289 = vpop.f32.mrf.mxu0
        %v3290 = vadd.f32 0.0, %v3289
        %v3291 = vpop.f32.mrf.mxu0
        %v3292 = vadd.f32 0.0, %v3291
        %3293 = vmatmul.bf16.gmra.mxu0 %v3065
        %v3294 = vpop.f32.mrf.mxu0
        %v3295 = vadd.f32 0.0, %v3294
        %v3296 = vpop.f32.mrf.mxu0
        %v3297 = vadd.f32 0.0, %v3296
        %3298 = vdwg.mxu0
        %v3299 = vmul.f32 %v3140, 0.01
        %v3300 = vmul.f32 %v3142, 0.01
        %v3301 = vmul.f32 %v3145, 0.01
        %v3302 = vmul.f32 %v3147, 0.01
        %v3303 = vmul.f32 %v3150, 0.01
        %v3304 = vmul.f32 %v3152, 0.01
        %v3305 = vmul.f32 %v3155, 0.01
        %v3306 = vmul.f32 %v3157, 0.01
        %v3307 = vmul.f32 %v3160, 0.01
        %v3308 = vmul.f32 %v3162, 0.01
        %v3309 = vmul.f32 %v3165, 0.01
        %v3310 = vmul.f32 %v3167, 0.01
        %v3311 = vmul.f32 %v3170, 0.01
        %v3312 = vmul.f32 %v3172, 0.01
        %v3313 = vmul.f32 %v3175, 0.01
        %v3314 = vmul.f32 %v3177, 0.01
        %v3315 = vmul.f32 %v3180, 0.01
        %v3316 = vmul.f32 %v3182, 0.01
        %v3317 = vmul.f32 %v3185, 0.01
        %v3318 = vmul.f32 %v3187, 0.01
        %v3319 = vmul.f32 %v3190, 0.01
        %v3320 = vmul.f32 %v3192, 0.01
        %v3321 = vmul.f32 %v3195, 0.01
        %v3322 = vmul.f32 %v3197, 0.01
        %v3323 = vmul.f32 %v3200, 0.01
        %v3324 = vmul.f32 %v3202, 0.01
        %v3325 = vmul.f32 %v3205, 0.01
        %v3326 = vmul.f32 %v3207, 0.01
        %v3327 = vmul.f32 %v3210, 0.01
        %v3328 = vmul.f32 %v3212, 0.01
        %v3329 = vmul.f32 %v3215, 0.01
        %v3330 = vmul.f32 %v3217, 0.01
        %v3331 = vmul.f32 %v3220, 0.01
        %v3332 = vmul.f32 %v3222, 0.01
        %v3333 = vmul.f32 %v3225, 0.01
        %v3334 = vmul.f32 %v3227, 0.01
        %v3335 = vmul.f32 %v3230, 0.01
        %v3336 = vmul.f32 %v3232, 0.01
        %v3337 = vmul.f32 %v3235, 0.01
        %v3338 = vmul.f32 %v3237, 0.01
        %v3339 = vmul.f32 %v3240, 0.01
        %v3340 = vmul.f32 %v3242, 0.01
        %v3341 = vmul.f32 %v3245, 0.01
        %v3342 = vmul.f32 %v3247, 0.01
        %v3343 = vmul.f32 %v3250, 0.01
        %v3344 = vmul.f32 %v3252, 0.01
        %v3345 = vmul.f32 %v3255, 0.01
        %v3346 = vmul.f32 %v3257, 0.01
        %v3347 = vmul.f32 %v3260, 0.01
        %v3348 = vmul.f32 %v3262, 0.01
        %v3349 = vmul.f32 %v3265, 0.01
        %v3350 = vmul.f32 %v3267, 0.01
        %v3351 = vmul.f32 %v3270, 0.01
        %v3352 = vmul.f32 %v3272, 0.01
        %v3353 = vmul.f32 %v3275, 0.01
        %v3354 = vmul.f32 %v3277, 0.01
        %v3355 = vmul.f32 %v3280, 0.01
        %v3356 = vmul.f32 %v3282, 0.01
        %v3357 = vmul.f32 %v3285, 0.01
        %v3358 = vmul.f32 %v3287, 0.01
        %v3359 = vmul.f32 %v3290, 0.01
        %v3360 = vmul.f32 %v3292, 0.01
        %v3361 = vmul.f32 %v3295, 0.01
        %v3362 = vmul.f32 %v3297, 0.01
        %v3363 = vmax.f32 %v3140, %v3299
        %v3364 = vmax.f32 %v3142, %v3300
        %v3365 = vmax.f32 %v3145, %v3301
        %v3366 = vmax.f32 %v3147, %v3302
        %v3367 = vmax.f32 %v3150, %v3303
        %v3368 = vmax.f32 %v3152, %v3304
        %v3369 = vmax.f32 %v3155, %v3305
        %v3370 = vmax.f32 %v3157, %v3306
        %v3371 = vmax.f32 %v3160, %v3307
        %v3372 = vmax.f32 %v3162, %v3308
        %v3373 = vmax.f32 %v3165, %v3309
        %v3374 = vmax.f32 %v3167, %v3310
        %v3375 = vmax.f32 %v3170, %v3311
        %v3376 = vmax.f32 %v3172, %v3312
        %v3377 = vmax.f32 %v3175, %v3313
        %v3378 = vmax.f32 %v3177, %v3314
        %v3379 = vmax.f32 %v3180, %v3315
        %v3380 = vmax.f32 %v3182, %v3316
        %v3381 = vmax.f32 %v3185, %v3317
        %v3382 = vmax.f32 %v3187, %v3318
        %v3383 = vmax.f32 %v3190, %v3319
        %v3384 = vmax.f32 %v3192, %v3320
        %v3385 = vmax.f32 %v3195, %v3321
        %v3386 = vmax.f32 %v3197, %v3322
        %v3387 = vmax.f32 %v3200, %v3323
        %v3388 = vmax.f32 %v3202, %v3324
        %v3389 = vmax.f32 %v3205, %v3325
        %v3390 = vmax.f32 %v3207, %v3326
        %v3391 = vmax.f32 %v3210, %v3327
        %v3392 = vmax.f32 %v3212, %v3328
        %v3393 = vmax.f32 %v3215, %v3329
        %v3394 = vmax.f32 %v3217, %v3330
        %v3395 = vmax.f32 %v3220, %v3331
        %v3396 = vmax.f32 %v3222, %v3332
        %v3397 = vmax.f32 %v3225, %v3333
        %v3398 = vmax.f32 %v3227, %v3334
        %v3399 = vmax.f32 %v3230, %v3335
        %v3400 = vmax.f32 %v3232, %v3336
        %v3401 = vmax.f32 %v3235, %v3337
        %v3402 = vmax.f32 %v3237, %v3338
        %v3403 = vmax.f32 %v3240, %v3339
        %v3404 = vmax.f32 %v3242, %v3340
        %v3405 = vmax.f32 %v3245, %v3341
        %v3406 = vmax.f32 %v3247, %v3342
        %v3407 = vmax.f32 %v3250, %v3343
        %v3408 = vmax.f32 %v3252, %v3344
        %v3409 = vmax.f32 %v3255, %v3345
        %v3410 = vmax.f32 %v3257, %v3346
        %v3411 = vmax.f32 %v3260, %v3347
        %v3412 = vmax.f32 %v3262, %v3348
        %v3413 = vmax.f32 %v3265, %v3349
        %v3414 = vmax.f32 %v3267, %v3350
        %v3415 = vmax.f32 %v3270, %v3351
        %v3416 = vmax.f32 %v3272, %v3352
        %v3417 = vmax.f32 %v3275, %v3353
        %v3418 = vmax.f32 %v3277, %v3354
        %v3419 = vmax.f32 %v3280, %v3355
        %v3420 = vmax.f32 %v3282, %v3356
        %v3421 = vmax.f32 %v3285, %v3357
        %v3422 = vmax.f32 %v3287, %v3358
        %v3423 = vmax.f32 %v3290, %v3359
        %v3424 = vmax.f32 %v3292, %v3360
        %v3425 = vmax.f32 %v3295, %v3361
        %v3426 = vmax.f32 %v3297, %v3362
        %v3427 = vpack.c.bf16 %v3364, %v3363
        %v3428 = vpack.c.bf16 %v3366, %v3365
        %v3429 = vpack.c.bf16 %v3368, %v3367
        %v3430 = vpack.c.bf16 %v3370, %v3369
        %v3431 = vpack.c.bf16 %v3372, %v3371
        %v3432 = vpack.c.bf16 %v3374, %v3373
        %v3433 = vpack.c.bf16 %v3376, %v3375
        %v3434 = vpack.c.bf16 %v3378, %v3377
        %v3435 = vpack.c.bf16 %v3380, %v3379
        %v3436 = vpack.c.bf16 %v3382, %v3381
        %v3437 = vpack.c.bf16 %v3384, %v3383
        %v3438 = vpack.c.bf16 %v3386, %v3385
        %v3439 = vpack.c.bf16 %v3388, %v3387
        %v3440 = vpack.c.bf16 %v3390, %v3389
        %v3441 = vpack.c.bf16 %v3392, %v3391
        %v3442 = vpack.c.bf16 %v3394, %v3393
        %v3443 = vpack.c.bf16 %v3396, %v3395
        %v3444 = vpack.c.bf16 %v3398, %v3397
        %v3445 = vpack.c.bf16 %v3400, %v3399
        %v3446 = vpack.c.bf16 %v3402, %v3401
        %v3447 = vpack.c.bf16 %v3404, %v3403
        %v3448 = vpack.c.bf16 %v3406, %v3405
        %v3449 = vpack.c.bf16 %v3408, %v3407
        %v3450 = vpack.c.bf16 %v3410, %v3409
        %v3451 = vpack.c.bf16 %v3412, %v3411
        %v3452 = vpack.c.bf16 %v3414, %v3413
        %v3453 = vpack.c.bf16 %v3416, %v3415
        %v3454 = vpack.c.bf16 %v3418, %v3417
        %v3455 = vpack.c.bf16 %v3420, %v3419
        %v3456 = vpack.c.bf16 %v3422, %v3421
        %v3457 = vpack.c.bf16 %v3424, %v3423
        %v3458 = vpack.c.bf16 %v3426, %v3425
        %v3459 = vld [vmem:[%s2] sm:$0xf]
        %v3460 = vld [vmem:[%s2 + $0x4] sm:$0xf]
        %v3461 = vld [vmem:[%s2 + $0x8] sm:$0xf]
        %v3462 = vld [vmem:[%s2 + $0xc] sm:$0xf]
        %v3463 = vld [vmem:[%s2 + $0x10] sm:$0xf]
        %v3464 = vld [vmem:[%s2 + $0x14] sm:$0xf]
        %v3465 = vld [vmem:[%s2 + $0x18] sm:$0xf]
        %v3466 = vld [vmem:[%s2 + $0x1c] sm:$0xf]
        %v3467 = vld [vmem:[%s2 + $0x20] sm:$0xf]
        %v3468 = vld [vmem:[%s2 + $0x24] sm:$0xf]
        %v3469 = vld [vmem:[%s2 + $0x28] sm:$0xf]
        %v3470 = vld [vmem:[%s2 + $0x2c] sm:$0xf]
        %v3471 = vld [vmem:[%s2 + $0x30] sm:$0xf]
        %v3472 = vld [vmem:[%s2 + $0x34] sm:$0xf]
        %v3473 = vld [vmem:[%s2 + $0x38] sm:$0xf]
        %v3474 = vld [vmem:[%s2 + $0x3c] sm:$0xf]
        %v3475 = vld [vmem:[%s3] sm:$0x1]
        %v3477 = vperm.slane %v3475, 0
        %v3495 = vunpack.c.l.b16 %v3459
        %v3496 = vunpack.c.l.b16 %v3460
        %v3497 = vunpack.c.l.b16 %v3461
        %v3498 = vunpack.c.l.b16 %v3462
        %v3499 = vunpack.c.l.b16 %v3463
        %v3500 = vunpack.c.l.b16 %v3464
        %v3501 = vunpack.c.l.b16 %v3465
        %v3502 = vunpack.c.l.b16 %v3466
        %v3503 = vunpack.c.l.b16 %v3467
        %v3504 = vunpack.c.l.b16 %v3468
        %v3505 = vunpack.c.l.b16 %v3469
        %v3506 = vunpack.c.l.b16 %v3470
        %v3507 = vunpack.c.l.b16 %v3471
        %v3508 = vunpack.c.l.b16 %v3472
        %v3509 = vunpack.c.l.b16 %v3473
        %v3510 = vunpack.c.l.b16 %v3474
        %v3511 = vpack.c.b16 %v3496, %v3495
        %v3512 = vpack.c.b16 %v3498, %v3497
        %v3513 = vpack.c.b16 %v3500, %v3499
        %v3514 = vpack.c.b16 %v3502, %v3501
        %v3515 = vpack.c.b16 %v3504, %v3503
        %v3516 = vpack.c.b16 %v3506, %v3505
        %v3517 = vpack.c.b16 %v3508, %v3507
        %v3518 = vpack.c.b16 %v3510, %v3509
        %3527 = vmatpush.bf16.msra.mxu0 %v3518
        %3528 = vmatpush.bf16.msra.mxu0 %v3517
        %3529 = vmatpush.bf16.msra.mxu0 %v3516
        %3530 = vmatpush.bf16.msra.mxu0 %v3515
        %3531 = vmatpush.bf16.msra.mxu0 %v3514
        %3532 = vmatpush.bf16.msra.mxu0 %v3513
        %3533 = vmatpush.bf16.msra.mxu0 %v3512
        %3534 = vmatpush.bf16.msra.mxu0 %v3511
        %3535 = vmatmul.bf16.gmra.mxu0 %v3427
        %v3536 = vpop.f32.mrf.mxu0
        %v3537 = vadd.f32 %v3477, %v3536
        %v3538 = vpop.f32.mrf.mxu0
        %v3539 = vadd.f32 %v3477, %v3538
        %3540 = vmatmul.bf16.gmra.mxu0 %v3428
        %v3541 = vpop.f32.mrf.mxu0
        %v3542 = vadd.f32 %v3477, %v3541
        %v3543 = vpop.f32.mrf.mxu0
        %v3544 = vadd.f32 %v3477, %v3543
        %3545 = vmatmul.bf16.gmra.mxu0 %v3429
        %v3546 = vpop.f32.mrf.mxu0
        %v3547 = vadd.f32 %v3477, %v3546
        %v3548 = vpop.f32.mrf.mxu0
        %v3549 = vadd.f32 %v3477, %v3548
        %3550 = vmatmul.bf16.gmra.mxu0 %v3430
        %v3551 = vpop.f32.mrf.mxu0
        %v3552 = vadd.f32 %v3477, %v3551
        %v3553 = vpop.f32.mrf.mxu0
        %v3554 = vadd.f32 %v3477, %v3553
        %3555 = vmatmul.bf16.gmra.mxu0 %v3431
        %v3556 = vpop.f32.mrf.mxu0
        %v3557 = vadd.f32 %v3477, %v3556
        %v3558 = vpop.f32.mrf.mxu0
        %v3559 = vadd.f32 %v3477, %v3558
        %3560 = vmatmul.bf16.gmra.mxu0 %v3432
        %v3561 = vpop.f32.mrf.mxu0
        %v3562 = vadd.f32 %v3477, %v3561
        %v3563 = vpop.f32.mrf.mxu0
        %v3564 = vadd.f32 %v3477, %v3563
        %3565 = vmatmul.bf16.gmra.mxu0 %v3433
        %v3566 = vpop.f32.mrf.mxu0
        %v3567 = vadd.f32 %v3477, %v3566
        %v3568 = vpop.f32.mrf.mxu0
        %v3569 = vadd.f32 %v3477, %v3568
        %3570 = vmatmul.bf16.gmra.mxu0 %v3434
        %v3571 = vpop.f32.mrf.mxu0
        %v3572 = vadd.f32 %v3477, %v3571
        %v3573 = vpop.f32.mrf.mxu0
        %v3574 = vadd.f32 %v3477, %v3573
        %3575 = vmatmul.bf16.gmra.mxu0 %v3435
        %v3576 = vpop.f32.mrf.mxu0
        %v3577 = vadd.f32 %v3477, %v3576
        %v3578 = vpop.f32.mrf.mxu0
        %v3579 = vadd.f32 %v3477, %v3578
        %3580 = vmatmul.bf16.gmra.mxu0 %v3436
        %v3581 = vpop.f32.mrf.mxu0
        %v3582 = vadd.f32 %v3477, %v3581
        %v3583 = vpop.f32.mrf.mxu0
        %v3584 = vadd.f32 %v3477, %v3583
        %3585 = vmatmul.bf16.gmra.mxu0 %v3437
        %v3586 = vpop.f32.mrf.mxu0
        %v3587 = vadd.f32 %v3477, %v3586
        %v3588 = vpop.f32.mrf.mxu0
        %v3589 = vadd.f32 %v3477, %v3588
        %3590 = vmatmul.bf16.gmra.mxu0 %v3438
        %v3591 = vpop.f32.mrf.mxu0
        %v3592 = vadd.f32 %v3477, %v3591
        %v3593 = vpop.f32.mrf.mxu0
        %v3594 = vadd.f32 %v3477, %v3593
        %3595 = vmatmul.bf16.gmra.mxu0 %v3439
        %v3596 = vpop.f32.mrf.mxu0
        %v3597 = vadd.f32 %v3477, %v3596
        %v3598 = vpop.f32.mrf.mxu0
        %v3599 = vadd.f32 %v3477, %v3598
        %3600 = vmatmul.bf16.gmra.mxu0 %v3440
        %v3601 = vpop.f32.mrf.mxu0
        %v3602 = vadd.f32 %v3477, %v3601
        %v3603 = vpop.f32.mrf.mxu0
        %v3604 = vadd.f32 %v3477, %v3603
        %3605 = vmatmul.bf16.gmra.mxu0 %v3441
        %v3606 = vpop.f32.mrf.mxu0
        %v3607 = vadd.f32 %v3477, %v3606
        %v3608 = vpop.f32.mrf.mxu0
        %v3609 = vadd.f32 %v3477, %v3608
        %3610 = vmatmul.bf16.gmra.mxu0 %v3442
        %v3611 = vpop.f32.mrf.mxu0
        %v3612 = vadd.f32 %v3477, %v3611
        %v3613 = vpop.f32.mrf.mxu0
        %v3614 = vadd.f32 %v3477, %v3613
        %3615 = vmatmul.bf16.gmra.mxu0 %v3443
        %v3616 = vpop.f32.mrf.mxu0
        %v3617 = vadd.f32 %v3477, %v3616
        %v3618 = vpop.f32.mrf.mxu0
        %v3619 = vadd.f32 %v3477, %v3618
        %3620 = vmatmul.bf16.gmra.mxu0 %v3444
        %v3621 = vpop.f32.mrf.mxu0
        %v3622 = vadd.f32 %v3477, %v3621
        %v3623 = vpop.f32.mrf.mxu0
        %v3624 = vadd.f32 %v3477, %v3623
        %3625 = vmatmul.bf16.gmra.mxu0 %v3445
        %v3626 = vpop.f32.mrf.mxu0
        %v3627 = vadd.f32 %v3477, %v3626
        %v3628 = vpop.f32.mrf.mxu0
        %v3629 = vadd.f32 %v3477, %v3628
        %3630 = vmatmul.bf16.gmra.mxu0 %v3446
        %v3631 = vpop.f32.mrf.mxu0
        %v3632 = vadd.f32 %v3477, %v3631
        %v3633 = vpop.f32.mrf.mxu0
        %v3634 = vadd.f32 %v3477, %v3633
        %3635 = vmatmul.bf16.gmra.mxu0 %v3447
        %v3636 = vpop.f32.mrf.mxu0
        %v3637 = vadd.f32 %v3477, %v3636
        %v3638 = vpop.f32.mrf.mxu0
        %v3639 = vadd.f32 %v3477, %v3638
        %3640 = vmatmul.bf16.gmra.mxu0 %v3448
        %v3641 = vpop.f32.mrf.mxu0
        %v3642 = vadd.f32 %v3477, %v3641
        %v3643 = vpop.f32.mrf.mxu0
        %v3644 = vadd.f32 %v3477, %v3643
        %3645 = vmatmul.bf16.gmra.mxu0 %v3449
        %v3646 = vpop.f32.mrf.mxu0
        %v3647 = vadd.f32 %v3477, %v3646
        %v3648 = vpop.f32.mrf.mxu0
        %v3649 = vadd.f32 %v3477, %v3648
        %3650 = vmatmul.bf16.gmra.mxu0 %v3450
        %v3651 = vpop.f32.mrf.mxu0
        %v3652 = vadd.f32 %v3477, %v3651
        %v3653 = vpop.f32.mrf.mxu0
        %v3654 = vadd.f32 %v3477, %v3653
        %3655 = vmatmul.bf16.gmra.mxu0 %v3451
        %v3656 = vpop.f32.mrf.mxu0
        %v3657 = vadd.f32 %v3477, %v3656
        %v3658 = vpop.f32.mrf.mxu0
        %v3659 = vadd.f32 %v3477, %v3658
        %3660 = vmatmul.bf16.gmra.mxu0 %v3452
        %v3661 = vpop.f32.mrf.mxu0
        %v3662 = vadd.f32 %v3477, %v3661
        %v3663 = vpop.f32.mrf.mxu0
        %v3664 = vadd.f32 %v3477, %v3663
        %3665 = vmatmul.bf16.gmra.mxu0 %v3453
        %v3666 = vpop.f32.mrf.mxu0
        %v3667 = vadd.f32 %v3477, %v3666
        %v3668 = vpop.f32.mrf.mxu0
        %v3669 = vadd.f32 %v3477, %v3668
        %3670 = vmatmul.bf16.gmra.mxu0 %v3454
        %v3671 = vpop.f32.mrf.mxu0
        %v3672 = vadd.f32 %v3477, %v3671
        %v3673 = vpop.f32.mrf.mxu0
        %v3674 = vadd.f32 %v3477, %v3673
        %3675 = vmatmul.bf16.gmra.mxu0 %v3455
        %v3676 = vpop.f32.mrf.mxu0
        %v3677 = vadd.f32 %v3477, %v3676
        %v3678 = vpop.f32.mrf.mxu0
        %v3679 = vadd.f32 %v3477, %v3678
        %3680 = vmatmul.bf16.gmra.mxu0 %v3456
        %v3681 = vpop.f32.mrf.mxu0
        %v3682 = vadd.f32 %v3477, %v3681
        %v3683 = vpop.f32.mrf.mxu0
        %v3684 = vadd.f32 %v3477, %v3683
        %3685 = vmatmul.bf16.gmra.mxu0 %v3457
        %v3686 = vpop.f32.mrf.mxu0
        %v3687 = vadd.f32 %v3477, %v3686
        %v3688 = vpop.f32.mrf.mxu0
        %v3689 = vadd.f32 %v3477, %v3688
        %3690 = vmatmul.bf16.gmra.mxu0 %v3458
        %v3691 = vpop.f32.mrf.mxu0
        %v3692 = vadd.f32 %v3477, %v3691
        %v3693 = vpop.f32.mrf.mxu0
        %v3694 = vadd.f32 %v3477, %v3693
        %3695 = vdwg.mxu0
        %v3696 = vmul.f32 %v3537, 0.01
        %v3697 = vmul.f32 %v3539, 0.01
        %v3698 = vmul.f32 %v3542, 0.01
        %v3699 = vmul.f32 %v3544, 0.01
        %v3700 = vmul.f32 %v3547, 0.01
        %v3701 = vmul.f32 %v3549, 0.01
        %v3702 = vmul.f32 %v3552, 0.01
        %v3703 = vmul.f32 %v3554, 0.01
        %v3704 = vmul.f32 %v3557, 0.01
        %v3705 = vmul.f32 %v3559, 0.01
        %v3706 = vmul.f32 %v3562, 0.01
        %v3707 = vmul.f32 %v3564, 0.01
        %v3708 = vmul.f32 %v3567, 0.01
        %v3709 = vmul.f32 %v3569, 0.01
        %v3710 = vmul.f32 %v3572, 0.01
        %v3711 = vmul.f32 %v3574, 0.01
        %v3712 = vmul.f32 %v3577, 0.01
        %v3713 = vmul.f32 %v3579, 0.01
        %v3714 = vmul.f32 %v3582, 0.01
        %v3715 = vmul.f32 %v3584, 0.01
        %v3716 = vmul.f32 %v3587, 0.01
        %v3717 = vmul.f32 %v3589, 0.01
        %v3718 = vmul.f32 %v3592, 0.01
        %v3719 = vmul.f32 %v3594, 0.01
        %v3720 = vmul.f32 %v3597, 0.01
        %v3721 = vmul.f32 %v3599, 0.01
        %v3722 = vmul.f32 %v3602, 0.01
        %v3723 = vmul.f32 %v3604, 0.01
        %v3724 = vmul.f32 %v3607, 0.01
        %v3725 = vmul.f32 %v3609, 0.01
        %v3726 = vmul.f32 %v3612, 0.01
        %v3727 = vmul.f32 %v3614, 0.01
        %v3728 = vmul.f32 %v3617, 0.01
        %v3729 = vmul.f32 %v3619, 0.01
        %v3730 = vmul.f32 %v3622, 0.01
        %v3731 = vmul.f32 %v3624, 0.01
        %v3732 = vmul.f32 %v3627, 0.01
        %v3733 = vmul.f32 %v3629, 0.01
        %v3734 = vmul.f32 %v3632, 0.01
        %v3735 = vmul.f32 %v3634, 0.01
        %v3736 = vmul.f32 %v3637, 0.01
        %v3737 = vmul.f32 %v3639, 0.01
        %v3738 = vmul.f32 %v3642, 0.01
        %v3739 = vmul.f32 %v3644, 0.01
        %v3740 = vmul.f32 %v3647, 0.01
        %v3741 = vmul.f32 %v3649, 0.01
        %v3742 = vmul.f32 %v3652, 0.01
        %v3743 = vmul.f32 %v3654, 0.01
        %v3744 = vmul.f32 %v3657, 0.01
        %v3745 = vmul.f32 %v3659, 0.01
        %v3746 = vmul.f32 %v3662, 0.01
        %v3747 = vmul.f32 %v3664, 0.01
        %v3748 = vmul.f32 %v3667, 0.01
        %v3749 = vmul.f32 %v3669, 0.01
        %v3750 = vmul.f32 %v3672, 0.01
        %v3751 = vmul.f32 %v3674, 0.01
        %v3752 = vmul.f32 %v3677, 0.01
        %v3753 = vmul.f32 %v3679, 0.01
        %v3754 = vmul.f32 %v3682, 0.01
        %v3755 = vmul.f32 %v3684, 0.01
        %v3756 = vmul.f32 %v3687, 0.01
        %v3757 = vmul.f32 %v3689, 0.01
        %v3758 = vmul.f32 %v3692, 0.01
        %v3759 = vmul.f32 %v3694, 0.01
        %v3760 = vmax.f32 %v3537, %v3696
        %v3761 = vmax.f32 %v3539, %v3697
        %v3762 = vmax.f32 %v3542, %v3698
        %v3763 = vmax.f32 %v3544, %v3699
        %v3764 = vmax.f32 %v3547, %v3700
        %v3765 = vmax.f32 %v3549, %v3701
        %v3766 = vmax.f32 %v3552, %v3702
        %v3767 = vmax.f32 %v3554, %v3703
        %v3768 = vmax.f32 %v3557, %v3704
        %v3769 = vmax.f32 %v3559, %v3705
        %v3770 = vmax.f32 %v3562, %v3706
        %v3771 = vmax.f32 %v3564, %v3707
        %v3772 = vmax.f32 %v3567, %v3708
        %v3773 = vmax.f32 %v3569, %v3709
        %v3774 = vmax.f32 %v3572, %v3710
        %v3775 = vmax.f32 %v3574, %v3711
        %v3776 = vmax.f32 %v3577, %v3712
        %v3777 = vmax.f32 %v3579, %v3713
        %v3778 = vmax.f32 %v3582, %v3714
        %v3779 = vmax.f32 %v3584, %v3715
        %v3780 = vmax.f32 %v3587, %v3716
        %v3781 = vmax.f32 %v3589, %v3717
        %v3782 = vmax.f32 %v3592, %v3718
        %v3783 = vmax.f32 %v3594, %v3719
        %v3784 = vmax.f32 %v3597, %v3720
        %v3785 = vmax.f32 %v3599, %v3721
        %v3786 = vmax.f32 %v3602, %v3722
        %v3787 = vmax.f32 %v3604, %v3723
        %v3788 = vmax.f32 %v3607, %v3724
        %v3789 = vmax.f32 %v3609, %v3725
        %v3790 = vmax.f32 %v3612, %v3726
        %v3791 = vmax.f32 %v3614, %v3727
        %v3792 = vmax.f32 %v3617, %v3728
        %v3793 = vmax.f32 %v3619, %v3729
        %v3794 = vmax.f32 %v3622, %v3730
        %v3795 = vmax.f32 %v3624, %v3731
        %v3796 = vmax.f32 %v3627, %v3732
        %v3797 = vmax.f32 %v3629, %v3733
        %v3798 = vmax.f32 %v3632, %v3734
        %v3799 = vmax.f32 %v3634, %v3735
        %v3800 = vmax.f32 %v3637, %v3736
        %v3801 = vmax.f32 %v3639, %v3737
        %v3802 = vmax.f32 %v3642, %v3738
        %v3803 = vmax.f32 %v3644, %v3739
        %v3804 = vmax.f32 %v3647, %v3740
        %v3805 = vmax.f32 %v3649, %v3741
        %v3806 = vmax.f32 %v3652, %v3742
        %v3807 = vmax.f32 %v3654, %v3743
        %v3808 = vmax.f32 %v3657, %v3744
        %v3809 = vmax.f32 %v3659, %v3745
        %v3810 = vmax.f32 %v3662, %v3746
        %v3811 = vmax.f32 %v3664, %v3747
        %v3812 = vmax.f32 %v3667, %v3748
        %v3813 = vmax.f32 %v3669, %v3749
        %v3814 = vmax.f32 %v3672, %v3750
        %v3815 = vmax.f32 %v3674, %v3751
        %v3816 = vmax.f32 %v3677, %v3752
        %v3817 = vmax.f32 %v3679, %v3753
        %v3818 = vmax.f32 %v3682, %v3754
        %v3819 = vmax.f32 %v3684, %v3755
        %v3820 = vmax.f32 %v3687, %v3756
        %v3821 = vmax.f32 %v3689, %v3757
        %v3822 = vmax.f32 %v3692, %v3758
        %v3823 = vmax.f32 %v3694, %v3759
        %v3824 = vpack.c.bf16 %v3761, %v3760
        %v3825 = vpack.c.bf16 %v3763, %v3762
        %v3826 = vpack.c.bf16 %v3765, %v3764
        %v3827 = vpack.c.bf16 %v3767, %v3766
        %v3828 = vpack.c.bf16 %v3769, %v3768
        %v3829 = vpack.c.bf16 %v3771, %v3770
        %v3830 = vpack.c.bf16 %v3773, %v3772
        %v3831 = vpack.c.bf16 %v3775, %v3774
        %v3832 = vpack.c.bf16 %v3777, %v3776
        %v3833 = vpack.c.bf16 %v3779, %v3778
        %v3834 = vpack.c.bf16 %v3781, %v3780
        %v3835 = vpack.c.bf16 %v3783, %v3782
        %v3836 = vpack.c.bf16 %v3785, %v3784
        %v3837 = vpack.c.bf16 %v3787, %v3786
        %v3838 = vpack.c.bf16 %v3789, %v3788
        %v3839 = vpack.c.bf16 %v3791, %v3790
        %v3840 = vpack.c.bf16 %v3793, %v3792
        %v3841 = vpack.c.bf16 %v3795, %v3794
        %v3842 = vpack.c.bf16 %v3797, %v3796
        %v3843 = vpack.c.bf16 %v3799, %v3798
        %v3844 = vpack.c.bf16 %v3801, %v3800
        %v3845 = vpack.c.bf16 %v3803, %v3802
        %v3846 = vpack.c.bf16 %v3805, %v3804
        %v3847 = vpack.c.bf16 %v3807, %v3806
        %v3848 = vpack.c.bf16 %v3809, %v3808
        %v3849 = vpack.c.bf16 %v3811, %v3810
        %v3850 = vpack.c.bf16 %v3813, %v3812
        %v3851 = vpack.c.bf16 %v3815, %v3814
        %v3852 = vpack.c.bf16 %v3817, %v3816
        %v3853 = vpack.c.bf16 %v3819, %v3818
        %v3854 = vpack.c.bf16 %v3821, %v3820
        %v3855 = vpack.c.bf16 %v3823, %v3822
        %v3856 = vld [vmem:[%s4] sm:$0xff]
        %v3857 = vld [vmem:[%s4 + $0x8] sm:$0xff]
        %v3858 = vld [vmem:[%s4 + $0x10] sm:$0xff]
        %v3859 = vld [vmem:[%s4 + $0x18] sm:$0xff]
        %v3860 = vld [vmem:[%s4 + $0x20] sm:$0xff]
        %v3861 = vld [vmem:[%s4 + $0x28] sm:$0xff]
        %v3862 = vld [vmem:[%s4 + $0x30] sm:$0xff]
        %v3863 = vld [vmem:[%s4 + $0x38] sm:$0xff]
        %v3864 = vld [vmem:[%s4 + $0x40] sm:$0xff]
        %v3865 = vld [vmem:[%s4 + $0x48] sm:$0xff]
        %v3866 = vld [vmem:[%s4 + $0x50] sm:$0xff]
        %v3867 = vld [vmem:[%s4 + $0x58] sm:$0xff]
        %v3868 = vld [vmem:[%s4 + $0x60] sm:$0xff]
        %v3869 = vld [vmem:[%s4 + $0x68] sm:$0xff]
        %v3870 = vld [vmem:[%s4 + $0x70] sm:$0xff]
        %v3871 = vld [vmem:[%s4 + $0x78] sm:$0xff]
        %v3872 = vld [vmem:[%s5] sm:$0x3]
        %v3874 = vperm.slane %v3872, 0
        %v3875 = vperm.slane %v3872, 1
        %v3894 = vunpack.c.l.b16 %v3856
        %v3895 = vunpack.c.h.b16 %v3856
        %v3896 = vunpack.c.l.b16 %v3857
        %v3897 = vunpack.c.h.b16 %v3857
        %v3898 = vunpack.c.l.b16 %v3858
        %v3899 = vunpack.c.h.b16 %v3858
        %v3900 = vunpack.c.l.b16 %v3859
        %v3901 = vunpack.c.h.b16 %v3859
        %v3902 = vunpack.c.l.b16 %v3860
        %v3903 = vunpack.c.h.b16 %v3860
        %v3904 = vunpack.c.l.b16 %v3861
        %v3905 = vunpack.c.h.b16 %v3861
        %v3906 = vunpack.c.l.b16 %v3862
        %v3907 = vunpack.c.h.b16 %v3862
        %v3908 = vunpack.c.l.b16 %v3863
        %v3909 = vunpack.c.h.b16 %v3863
        %v3910 = vunpack.c.l.b16 %v3864
        %v3911 = vunpack.c.h.b16 %v3864
        %v3912 = vunpack.c.l.b16 %v3865
        %v3913 = vunpack.c.h.b16 %v3865
        %v3914 = vunpack.c.l.b16 %v3866
        %v3915 = vunpack.c.h.b16 %v3866
        %v3916 = vunpack.c.l.b16 %v3867
        %v3917 = vunpack.c.h.b16 %v3867
        %v3918 = vunpack.c.l.b16 %v3868
        %v3919 = vunpack.c.h.b16 %v3868
        %v3920 = vunpack.c.l.b16 %v3869
        %v3921 = vunpack.c.h.b16 %v3869
        %v3922 = vunpack.c.l.b16 %v3870
        %v3923 = vunpack.c.h.b16 %v3870
        %v3924 = vunpack.c.l.b16 %v3871
        %v3925 = vunpack.c.h.b16 %v3871
        %v3926 = vpack.c.b16 %v3896, %v3894
        %v3927 = vpack.c.b16 %v3897, %v3895
        %v3928 = vpack.c.b16 %v3900, %v3898
        %v3929 = vpack.c.b16 %v3901, %v3899
        %v3930 = vpack.c.b16 %v3904, %v3902
        %v3931 = vpack.c.b16 %v3905, %v3903
        %v3932 = vpack.c.b16 %v3908, %v3906
        %v3933 = vpack.c.b16 %v3909, %v3907
        %v3934 = vpack.c.b16 %v3912, %v3910
        %v3935 = vpack.c.b16 %v3913, %v3911
        %v3936 = vpack.c.b16 %v3916, %v3914
        %v3937 = vpack.c.b16 %v3917, %v3915
        %v3938 = vpack.c.b16 %v3920, %v3918
        %v3939 = vpack.c.b16 %v3921, %v3919
        %v3940 = vpack.c.b16 %v3924, %v3922
        %v3941 = vpack.c.b16 %v3925, %v3923
        %3958 = vmatpush.bf16.msra.mxu0 %v3940
        %3959 = vmatpush.bf16.msra.mxu0 %v3938
        %3960 = vmatpush.bf16.msra.mxu0 %v3936
        %3961 = vmatpush.bf16.msra.mxu0 %v3934
        %3962 = vmatpush.bf16.msra.mxu0 %v3932
        %3963 = vmatpush.bf16.msra.mxu0 %v3930
        %3964 = vmatpush.bf16.msra.mxu0 %v3928
        %3965 = vmatpush.bf16.msra.mxu0 %v3926
        %3966 = vmatmul.bf16.gmra.mxu0 %v3824
        %v3967 = vpop.f32.mrf.mxu0
        %v3968 = vadd.f32 %v3874, %v3967
        %v3969 = vpop.f32.mrf.mxu0
        %v3970 = vadd.f32 %v3874, %v3969
        %3971 = vmatmul.bf16.gmra.mxu0 %v3825
        %v3972 = vpop.f32.mrf.mxu0
        %v3973 = vadd.f32 %v3874, %v3972
        %v3974 = vpop.f32.mrf.mxu0
        %v3975 = vadd.f32 %v3874, %v3974
        %3976 = vmatmul.bf16.gmra.mxu0 %v3826
        %v3977 = vpop.f32.mrf.mxu0
        %v3978 = vadd.f32 %v3874, %v3977
        %v3979 = vpop.f32.mrf.mxu0
        %v3980 = vadd.f32 %v3874, %v3979
        %3981 = vmatmul.bf16.gmra.mxu0 %v3827
        %v3982 = vpop.f32.mrf.mxu0
        %v3983 = vadd.f32 %v3874, %v3982
        %v3984 = vpop.f32.mrf.mxu0
        %v3985 = vadd.f32 %v3874, %v3984
        %3986 = vmatmul.bf16.gmra.mxu0 %v3828
        %v3987 = vpop.f32.mrf.mxu0
        %v3988 = vadd.f32 %v3874, %v3987
        %v3989 = vpop.f32.mrf.mxu0
        %v3990 = vadd.f32 %v3874, %v3989
        %3991 = vmatmul.bf16.gmra.mxu0 %v3829
        %v3992 = vpop.f32.mrf.mxu0
        %v3993 = vadd.f32 %v3874, %v3992
        %v3994 = vpop.f32.mrf.mxu0
        %v3995 = vadd.f32 %v3874, %v3994
        %3996 = vmatmul.bf16.gmra.mxu0 %v3830
        %v3997 = vpop.f32.mrf.mxu0
        %v3998 = vadd.f32 %v3874, %v3997
        %v3999 = vpop.f32.mrf.mxu0
        %v4000 = vadd.f32 %v3874, %v3999
        %4001 = vmatmul.bf16.gmra.mxu0 %v3831
        %v4002 = vpop.f32.mrf.mxu0
        %v4003 = vadd.f32 %v3874, %v4002
        %v4004 = vpop.f32.mrf.mxu0
        %v4005 = vadd.f32 %v3874, %v4004
        %4006 = vmatmul.bf16.gmra.mxu0 %v3832
        %v4007 = vpop.f32.mrf.mxu0
        %v4008 = vadd.f32 %v3874, %v4007
        %v4009 = vpop.f32.mrf.mxu0
        %v4010 = vadd.f32 %v3874, %v4009
        %4011 = vmatmul.bf16.gmra.mxu0 %v3833
        %v4012 = vpop.f32.mrf.mxu0
        %v4013 = vadd.f32 %v3874, %v4012
        %v4014 = vpop.f32.mrf.mxu0
        %v4015 = vadd.f32 %v3874, %v4014
        %4016 = vmatmul.bf16.gmra.mxu0 %v3834
        %v4017 = vpop.f32.mrf.mxu0
        %v4018 = vadd.f32 %v3874, %v4017
        %v4019 = vpop.f32.mrf.mxu0
        %v4020 = vadd.f32 %v3874, %v4019
        %4021 = vmatmul.bf16.gmra.mxu0 %v3835
        %v4022 = vpop.f32.mrf.mxu0
        %v4023 = vadd.f32 %v3874, %v4022
        %v4024 = vpop.f32.mrf.mxu0
        %v4025 = vadd.f32 %v3874, %v4024
        %4026 = vmatmul.bf16.gmra.mxu0 %v3836
        %v4027 = vpop.f32.mrf.mxu0
        %v4028 = vadd.f32 %v3874, %v4027
        %v4029 = vpop.f32.mrf.mxu0
        %v4030 = vadd.f32 %v3874, %v4029
        %4031 = vmatmul.bf16.gmra.mxu0 %v3837
        %v4032 = vpop.f32.mrf.mxu0
        %v4033 = vadd.f32 %v3874, %v4032
        %v4034 = vpop.f32.mrf.mxu0
        %v4035 = vadd.f32 %v3874, %v4034
        %4036 = vmatmul.bf16.gmra.mxu0 %v3838
        %v4037 = vpop.f32.mrf.mxu0
        %v4038 = vadd.f32 %v3874, %v4037
        %v4039 = vpop.f32.mrf.mxu0
        %v4040 = vadd.f32 %v3874, %v4039
        %4041 = vmatmul.bf16.gmra.mxu0 %v3839
        %v4042 = vpop.f32.mrf.mxu0
        %v4043 = vadd.f32 %v3874, %v4042
        %v4044 = vpop.f32.mrf.mxu0
        %v4045 = vadd.f32 %v3874, %v4044
        %4046 = vmatmul.bf16.gmra.mxu0 %v3840
        %v4047 = vpop.f32.mrf.mxu0
        %v4048 = vadd.f32 %v3874, %v4047
        %v4049 = vpop.f32.mrf.mxu0
        %v4050 = vadd.f32 %v3874, %v4049
        %4051 = vmatmul.bf16.gmra.mxu0 %v3841
        %v4052 = vpop.f32.mrf.mxu0
        %v4053 = vadd.f32 %v3874, %v4052
        %v4054 = vpop.f32.mrf.mxu0
        %v4055 = vadd.f32 %v3874, %v4054
        %4056 = vmatmul.bf16.gmra.mxu0 %v3842
        %v4057 = vpop.f32.mrf.mxu0
        %v4058 = vadd.f32 %v3874, %v4057
        %v4059 = vpop.f32.mrf.mxu0
        %v4060 = vadd.f32 %v3874, %v4059
        %4061 = vmatmul.bf16.gmra.mxu0 %v3843
        %v4062 = vpop.f32.mrf.mxu0
        %v4063 = vadd.f32 %v3874, %v4062
        %v4064 = vpop.f32.mrf.mxu0
        %v4065 = vadd.f32 %v3874, %v4064
        %4066 = vmatmul.bf16.gmra.mxu0 %v3844
        %v4067 = vpop.f32.mrf.mxu0
        %v4068 = vadd.f32 %v3874, %v4067
        %v4069 = vpop.f32.mrf.mxu0
        %v4070 = vadd.f32 %v3874, %v4069
        %4071 = vmatmul.bf16.gmra.mxu0 %v3845
        %v4072 = vpop.f32.mrf.mxu0
        %v4073 = vadd.f32 %v3874, %v4072
        %v4074 = vpop.f32.mrf.mxu0
        %v4075 = vadd.f32 %v3874, %v4074
        %4076 = vmatmul.bf16.gmra.mxu0 %v3846
        %v4077 = vpop.f32.mrf.mxu0
        %v4078 = vadd.f32 %v3874, %v4077
        %v4079 = vpop.f32.mrf.mxu0
        %v4080 = vadd.f32 %v3874, %v4079
        %4081 = vmatmul.bf16.gmra.mxu0 %v3847
        %v4082 = vpop.f32.mrf.mxu0
        %v4083 = vadd.f32 %v3874, %v4082
        %v4084 = vpop.f32.mrf.mxu0
        %v4085 = vadd.f32 %v3874, %v4084
        %4086 = vmatmul.bf16.gmra.mxu0 %v3848
        %v4087 = vpop.f32.mrf.mxu0
        %v4088 = vadd.f32 %v3874, %v4087
        %v4089 = vpop.f32.mrf.mxu0
        %v4090 = vadd.f32 %v3874, %v4089
        %4091 = vmatmul.bf16.gmra.mxu0 %v3849
        %v4092 = vpop.f32.mrf.mxu0
        %v4093 = vadd.f32 %v3874, %v4092
        %v4094 = vpop.f32.mrf.mxu0
        %v4095 = vadd.f32 %v3874, %v4094
        %4096 = vmatmul.bf16.gmra.mxu0 %v3850
        %v4097 = vpop.f32.mrf.mxu0
        %v4098 = vadd.f32 %v3874, %v4097
        %v4099 = vpop.f32.mrf.mxu0
        %v4100 = vadd.f32 %v3874, %v4099
        %4101 = vmatmul.bf16.gmra.mxu0 %v3851
        %v4102 = vpop.f32.mrf.mxu0
        %v4103 = vadd.f32 %v3874, %v4102
        %v4104 = vpop.f32.mrf.mxu0
        %v4105 = vadd.f32 %v3874, %v4104
        %4106 = vmatmul.bf16.gmra.mxu0 %v3852
        %v4107 = vpop.f32.mrf.mxu0
        %v4108 = vadd.f32 %v3874, %v4107
        %v4109 = vpop.f32.mrf.mxu0
        %v4110 = vadd.f32 %v3874, %v4109
        %4111 = vmatmul.bf16.gmra.mxu0 %v3853
        %v4112 = vpop.f32.mrf.mxu0
        %v4113 = vadd.f32 %v3874, %v4112
        %v4114 = vpop.f32.mrf.mxu0
        %v4115 = vadd.f32 %v3874, %v4114
        %4116 = vmatmul.bf16.gmra.mxu0 %v3854
        %v4117 = vpop.f32.mrf.mxu0
        %v4118 = vadd.f32 %v3874, %v4117
        %v4119 = vpop.f32.mrf.mxu0
        %v4120 = vadd.f32 %v3874, %v4119
        %4121 = vmatmul.bf16.gmra.mxu0 %v3855
        %v4122 = vpop.f32.mrf.mxu0
        %v4123 = vadd.f32 %v3874, %v4122
        %v4124 = vpop.f32.mrf.mxu0
        %v4125 = vadd.f32 %v3874, %v4124
        %4126 = vdwg.mxu0
        %4127 = vmatpush.bf16.msra.mxu0 %v3941
        %4128 = vmatpush.bf16.msra.mxu0 %v3939
        %4129 = vmatpush.bf16.msra.mxu0 %v3937
        %4130 = vmatpush.bf16.msra.mxu0 %v3935
        %4131 = vmatpush.bf16.msra.mxu0 %v3933
        %4132 = vmatpush.bf16.msra.mxu0 %v3931
        %4133 = vmatpush.bf16.msra.mxu0 %v3929
        %4134 = vmatpush.bf16.msra.mxu0 %v3927
        %4135 = vmatmul.bf16.gmra.mxu0 %v3824
        %v4136 = vpop.f32.mrf.mxu0
        %v4137 = vadd.f32 %v3875, %v4136
        %v4138 = vpop.f32.mrf.mxu0
        %v4139 = vadd.f32 %v3875, %v4138
        %4140 = vmatmul.bf16.gmra.mxu0 %v3825
        %v4141 = vpop.f32.mrf.mxu0
        %v4142 = vadd.f32 %v3875, %v4141
        %v4143 = vpop.f32.mrf.mxu0
        %v4144 = vadd.f32 %v3875, %v4143
        %4145 = vmatmul.bf16.gmra.mxu0 %v3826
        %v4146 = vpop.f32.mrf.mxu0
        %v4147 = vadd.f32 %v3875, %v4146
        %v4148 = vpop.f32.mrf.mxu0
        %v4149 = vadd.f32 %v3875, %v4148
        %4150 = vmatmul.bf16.gmra.mxu0 %v3827
        %v4151 = vpop.f32.mrf.mxu0
        %v4152 = vadd.f32 %v3875, %v4151
        %v4153 = vpop.f32.mrf.mxu0
        %v4154 = vadd.f32 %v3875, %v4153
        %4155 = vmatmul.bf16.gmra.mxu0 %v3828
        %v4156 = vpop.f32.mrf.mxu0
        %v4157 = vadd.f32 %v3875, %v4156
        %v4158 = vpop.f32.mrf.mxu0
        %v4159 = vadd.f32 %v3875, %v4158
        %4160 = vmatmul.bf16.gmra.mxu0 %v3829
        %v4161 = vpop.f32.mrf.mxu0
        %v4162 = vadd.f32 %v3875, %v4161
        %v4163 = vpop.f32.mrf.mxu0
        %v4164 = vadd.f32 %v3875, %v4163
        %4165 = vmatmul.bf16.gmra.mxu0 %v3830
        %v4166 = vpop.f32.mrf.mxu0
        %v4167 = vadd.f32 %v3875, %v4166
        %v4168 = vpop.f32.mrf.mxu0
        %v4169 = vadd.f32 %v3875, %v4168
        %4170 = vmatmul.bf16.gmra.mxu0 %v3831
        %v4171 = vpop.f32.mrf.mxu0
        %v4172 = vadd.f32 %v3875, %v4171
        %v4173 = vpop.f32.mrf.mxu0
        %v4174 = vadd.f32 %v3875, %v4173
        %4175 = vmatmul.bf16.gmra.mxu0 %v3832
        %v4176 = vpop.f32.mrf.mxu0
        %v4177 = vadd.f32 %v3875, %v4176
        %v4178 = vpop.f32.mrf.mxu0
        %v4179 = vadd.f32 %v3875, %v4178
        %4180 = vmatmul.bf16.gmra.mxu0 %v3833
        %v4181 = vpop.f32.mrf.mxu0
        %v4182 = vadd.f32 %v3875, %v4181
        %v4183 = vpop.f32.mrf.mxu0
        %v4184 = vadd.f32 %v3875, %v4183
        %4185 = vmatmul.bf16.gmra.mxu0 %v3834
        %v4186 = vpop.f32.mrf.mxu0
        %v4187 = vadd.f32 %v3875, %v4186
        %v4188 = vpop.f32.mrf.mxu0
        %v4189 = vadd.f32 %v3875, %v4188
        %4190 = vmatmul.bf16.gmra.mxu0 %v3835
        %v4191 = vpop.f32.mrf.mxu0
        %v4192 = vadd.f32 %v3875, %v4191
        %v4193 = vpop.f32.mrf.mxu0
        %v4194 = vadd.f32 %v3875, %v4193
        %4195 = vmatmul.bf16.gmra.mxu0 %v3836
        %v4196 = vpop.f32.mrf.mxu0
        %v4197 = vadd.f32 %v3875, %v4196
        %v4198 = vpop.f32.mrf.mxu0
        %v4199 = vadd.f32 %v3875, %v4198
        %4200 = vmatmul.bf16.gmra.mxu0 %v3837
        %v4201 = vpop.f32.mrf.mxu0
        %v4202 = vadd.f32 %v3875, %v4201
        %v4203 = vpop.f32.mrf.mxu0
        %v4204 = vadd.f32 %v3875, %v4203
        %4205 = vmatmul.bf16.gmra.mxu0 %v3838
        %v4206 = vpop.f32.mrf.mxu0
        %v4207 = vadd.f32 %v3875, %v4206
        %v4208 = vpop.f32.mrf.mxu0
        %v4209 = vadd.f32 %v3875, %v4208
        %4210 = vmatmul.bf16.gmra.mxu0 %v3839
        %v4211 = vpop.f32.mrf.mxu0
        %v4212 = vadd.f32 %v3875, %v4211
        %v4213 = vpop.f32.mrf.mxu0
        %v4214 = vadd.f32 %v3875, %v4213
        %4215 = vmatmul.bf16.gmra.mxu0 %v3840
        %v4216 = vpop.f32.mrf.mxu0
        %v4217 = vadd.f32 %v3875, %v4216
        %v4218 = vpop.f32.mrf.mxu0
        %v4219 = vadd.f32 %v3875, %v4218
        %4220 = vmatmul.bf16.gmra.mxu0 %v3841
        %v4221 = vpop.f32.mrf.mxu0
        %v4222 = vadd.f32 %v3875, %v4221
        %v4223 = vpop.f32.mrf.mxu0
        %v4224 = vadd.f32 %v3875, %v4223
        %4225 = vmatmul.bf16.gmra.mxu0 %v3842
        %v4226 = vpop.f32.mrf.mxu0
        %v4227 = vadd.f32 %v3875, %v4226
        %v4228 = vpop.f32.mrf.mxu0
        %v4229 = vadd.f32 %v3875, %v4228
        %4230 = vmatmul.bf16.gmra.mxu0 %v3843
        %v4231 = vpop.f32.mrf.mxu0
        %v4232 = vadd.f32 %v3875, %v4231
        %v4233 = vpop.f32.mrf.mxu0
        %v4234 = vadd.f32 %v3875, %v4233
        %4235 = vmatmul.bf16.gmra.mxu0 %v3844
        %v4236 = vpop.f32.mrf.mxu0
        %v4237 = vadd.f32 %v3875, %v4236
        %v4238 = vpop.f32.mrf.mxu0
        %v4239 = vadd.f32 %v3875, %v4238
        %4240 = vmatmul.bf16.gmra.mxu0 %v3845
        %v4241 = vpop.f32.mrf.mxu0
        %v4242 = vadd.f32 %v3875, %v4241
        %v4243 = vpop.f32.mrf.mxu0
        %v4244 = vadd.f32 %v3875, %v4243
        %4245 = vmatmul.bf16.gmra.mxu0 %v3846
        %v4246 = vpop.f32.mrf.mxu0
        %v4247 = vadd.f32 %v3875, %v4246
        %v4248 = vpop.f32.mrf.mxu0
        %v4249 = vadd.f32 %v3875, %v4248
        %4250 = vmatmul.bf16.gmra.mxu0 %v3847
        %v4251 = vpop.f32.mrf.mxu0
        %v4252 = vadd.f32 %v3875, %v4251
        %v4253 = vpop.f32.mrf.mxu0
        %v4254 = vadd.f32 %v3875, %v4253
        %4255 = vmatmul.bf16.gmra.mxu0 %v3848
        %v4256 = vpop.f32.mrf.mxu0
        %v4257 = vadd.f32 %v3875, %v4256
        %v4258 = vpop.f32.mrf.mxu0
        %v4259 = vadd.f32 %v3875, %v4258
        %4260 = vmatmul.bf16.gmra.mxu0 %v3849
        %v4261 = vpop.f32.mrf.mxu0
        %v4262 = vadd.f32 %v3875, %v4261
        %v4263 = vpop.f32.mrf.mxu0
        %v4264 = vadd.f32 %v3875, %v4263
        %4265 = vmatmul.bf16.gmra.mxu0 %v3850
        %v4266 = vpop.f32.mrf.mxu0
        %v4267 = vadd.f32 %v3875, %v4266
        %v4268 = vpop.f32.mrf.mxu0
        %v4269 = vadd.f32 %v3875, %v4268
        %4270 = vmatmul.bf16.gmra.mxu0 %v3851
        %v4271 = vpop.f32.mrf.mxu0
        %v4272 = vadd.f32 %v3875, %v4271
        %v4273 = vpop.f32.mrf.mxu0
        %v4274 = vadd.f32 %v3875, %v4273
        %4275 = vmatmul.bf16.gmra.mxu0 %v3852
        %v4276 = vpop.f32.mrf.mxu0
        %v4277 = vadd.f32 %v3875, %v4276
        %v4278 = vpop.f32.mrf.mxu0
        %v4279 = vadd.f32 %v3875, %v4278
        %4280 = vmatmul.bf16.gmra.mxu0 %v3853
        %v4281 = vpop.f32.mrf.mxu0
        %v4282 = vadd.f32 %v3875, %v4281
        %v4283 = vpop.f32.mrf.mxu0
        %v4284 = vadd.f32 %v3875, %v4283
        %4285 = vmatmul.bf16.gmra.mxu0 %v3854
        %v4286 = vpop.f32.mrf.mxu0
        %v4287 = vadd.f32 %v3875, %v4286
        %v4288 = vpop.f32.mrf.mxu0
        %v4289 = vadd.f32 %v3875, %v4288
        %4290 = vmatmul.bf16.gmra.mxu0 %v3855
        %v4291 = vpop.f32.mrf.mxu0
        %v4292 = vadd.f32 %v3875, %v4291
        %v4293 = vpop.f32.mrf.mxu0
        %v4294 = vadd.f32 %v3875, %v4293
        %4295 = vdwg.mxu0
        %v4296 = vmul.f32 %v3968, 0.01
        %v4297 = vmul.f32 %v4137, 0.01
        %v4298 = vmul.f32 %v3970, 0.01
        %v4299 = vmul.f32 %v4139, 0.01
        %v4300 = vmul.f32 %v3973, 0.01
        %v4301 = vmul.f32 %v4142, 0.01
        %v4302 = vmul.f32 %v3975, 0.01
        %v4303 = vmul.f32 %v4144, 0.01
        %v4304 = vmul.f32 %v3978, 0.01
        %v4305 = vmul.f32 %v4147, 0.01
        %v4306 = vmul.f32 %v3980, 0.01
        %v4307 = vmul.f32 %v4149, 0.01
        %v4308 = vmul.f32 %v3983, 0.01
        %v4309 = vmul.f32 %v4152, 0.01
        %v4310 = vmul.f32 %v3985, 0.01
        %v4311 = vmul.f32 %v4154, 0.01
        %v4312 = vmul.f32 %v3988, 0.01
        %v4313 = vmul.f32 %v4157, 0.01
        %v4314 = vmul.f32 %v3990, 0.01
        %v4315 = vmul.f32 %v4159, 0.01
        %v4316 = vmul.f32 %v3993, 0.01
        %v4317 = vmul.f32 %v4162, 0.01
        %v4318 = vmul.f32 %v3995, 0.01
        %v4319 = vmul.f32 %v4164, 0.01
        %v4320 = vmul.f32 %v3998, 0.01
        %v4321 = vmul.f32 %v4167, 0.01
        %v4322 = vmul.f32 %v4000, 0.01
        %v4323 = vmul.f32 %v4169, 0.01
        %v4324 = vmul.f32 %v4003, 0.01
        %v4325 = vmul.f32 %v4172, 0.01
        %v4326 = vmul.f32 %v4005, 0.01
        %v4327 = vmul.f32 %v4174, 0.01
        %v4328 = vmul.f32 %v4008, 0.01
        %v4329 = vmul.f32 %v4177, 0.01
        %v4330 = vmul.f32 %v4010, 0.01
        %v4331 = vmul.f32 %v4179, 0.01
        %v4332 = vmul.f32 %v4013, 0.01
        %v4333 = vmul.f32 %v4182, 0.01
        %v4334 = vmul.f32 %v4015, 0.01
        %v4335 = vmul.f32 %v4184, 0.01
        %v4336 = vmul.f32 %v4018, 0.01
        %v4337 = vmul.f32 %v4187, 0.01
        %v4338 = vmul.f32 %v4020, 0.01
        %v4339 = vmul.f32 %v4189, 0.01
        %v4340 = vmul.f32 %v4023, 0.01
        %v4341 = vmul.f32 %v4192, 0.01
        %v4342 = vmul.f32 %v4025, 0.01
        %v4343 = vmul.f32 %v4194, 0.01
        %v4344 = vmul.f32 %v4028, 0.01
        %v4345 = vmul.f32 %v4197, 0.01
        %v4346 = vmul.f32 %v4030, 0.01
        %v4347 = vmul.f32 %v4199, 0.01
        %v4348 = vmul.f32 %v4033, 0.01
        %v4349 = vmul.f32 %v4202, 0.01
        %v4350 = vmul.f32 %v4035, 0.01
        %v4351 = vmul.f32 %v4204, 0.01
        %v4352 = vmul.f32 %v4038, 0.01
        %v4353 = vmul.f32 %v4207, 0.01
        %v4354 = vmul.f32 %v4040, 0.01
        %v4355 = vmul.f32 %v4209, 0.01
        %v4356 = vmul.f32 %v4043, 0.01
        %v4357 = vmul.f32 %v4212, 0.01
        %v4358 = vmul.f32 %v4045, 0.01
        %v4359 = vmul.f32 %v4214, 0.01
        %v4360 = vmul.f32 %v4048, 0.01
        %v4361 = vmul.f32 %v4217, 0.01
        %v4362 = vmul.f32 %v4050, 0.01
        %v4363 = vmul.f32 %v4219, 0.01
        %v4364 = vmul.f32 %v4053, 0.01
        %v4365 = vmul.f32 %v4222, 0.01
        %v4366 = vmul.f32 %v4055, 0.01
        %v4367 = vmul.f32 %v4224, 0.01
        %v4368 = vmul.f32 %v4058, 0.01
        %v4369 = vmul.f32 %v4227, 0.01
        %v4370 = vmul.f32 %v4060, 0.01
        %v4371 = vmul.f32 %v4229, 0.01
        %v4372 = vmul.f32 %v4063, 0.01
        %v4373 = vmul.f32 %v4232, 0.01
        %v4374 = vmul.f32 %v4065, 0.01
        %v4375 = vmul.f32 %v4234, 0.01
        %v4376 = vmul.f32 %v4068, 0.01
        %v4377 = vmul.f32 %v4237, 0.01
        %v4378 = vmul.f32 %v4070, 0.01
        %v4379 = vmul.f32 %v4239, 0.01
        %v4380 = vmul.f32 %v4073, 0.01
        %v4381 = vmul.f32 %v4242, 0.01
        %v4382 = vmul.f32 %v4075, 0.01
        %v4383 = vmul.f32 %v4244, 0.01
        %v4384 = vmul.f32 %v4078, 0.01
        %v4385 = vmul.f32 %v4247, 0.01
        %v4386 = vmul.f32 %v4080, 0.01
        %v4387 = vmul.f32 %v4249, 0.01
        %v4388 = vmul.f32 %v4083, 0.01
        %v4389 = vmul.f32 %v4252, 0.01
        %v4390 = vmul.f32 %v4085, 0.01
        %v4391 = vmul.f32 %v4254, 0.01
        %v4392 = vmul.f32 %v4088, 0.01
        %v4393 = vmul.f32 %v4257, 0.01
        %v4394 = vmul.f32 %v4090, 0.01
        %v4395 = vmul.f32 %v4259, 0.01
        %v4396 = vmul.f32 %v4093, 0.01
        %v4397 = vmul.f32 %v4262, 0.01
        %v4398 = vmul.f32 %v4095, 0.01
        %v4399 = vmul.f32 %v4264, 0.01
        %v4400 = vmul.f32 %v4098, 0.01
        %v4401 = vmul.f32 %v4267, 0.01
        %v4402 = vmul.f32 %v4100, 0.01
        %v4403 = vmul.f32 %v4269, 0.01
        %v4404 = vmul.f32 %v4103, 0.01
        %v4405 = vmul.f32 %v4272, 0.01
        %v4406 = vmul.f32 %v4105, 0.01
        %v4407 = vmul.f32 %v4274, 0.01
        %v4408 = vmul.f32 %v4108, 0.01
        %v4409 = vmul.f32 %v4277, 0.01
        %v4410 = vmul.f32 %v4110, 0.01
        %v4411 = vmul.f32 %v4279, 0.01
        %v4412 = vmul.f32 %v4113, 0.01
        %v4413 = vmul.f32 %v4282, 0.01
        %v4414 = vmul.f32 %v4115, 0.01
        %v4415 = vmul.f32 %v4284, 0.01
        %v4416 = vmul.f32 %v4118, 0.01
        %v4417 = vmul.f32 %v4287, 0.01
        %v4418 = vmul.f32 %v4120, 0.01
        %v4419 = vmul.f32 %v4289, 0.01
        %v4420 = vmul.f32 %v4123, 0.01
        %v4421 = vmul.f32 %v4292, 0.01
        %v4422 = vmul.f32 %v4125, 0.01
        %v4423 = vmul.f32 %v4294, 0.01
        %v4424 = vmax.f32 %v3968, %v4296
        %v4425 = vmax.f32 %v4137, %v4297
        %v4426 = vmax.f32 %v3970, %v4298
        %v4427 = vmax.f32 %v4139, %v4299
        %v4428 = vmax.f32 %v3973, %v4300
        %v4429 = vmax.f32 %v4142, %v4301
        %v4430 = vmax.f32 %v3975, %v4302
        %v4431 = vmax.f32 %v4144, %v4303
        %v4432 = vmax.f32 %v3978, %v4304
        %v4433 = vmax.f32 %v4147, %v4305
        %v4434 = vmax.f32 %v3980, %v4306
        %v4435 = vmax.f32 %v4149, %v4307
        %v4436 = vmax.f32 %v3983, %v4308
        %v4437 = vmax.f32 %v4152, %v4309
        %v4438 = vmax.f32 %v3985, %v4310
        %v4439 = vmax.f32 %v4154, %v4311
        %v4440 = vmax.f32 %v3988, %v4312
        %v4441 = vmax.f32 %v4157, %v4313
        %v4442 = vmax.f32 %v3990, %v4314
        %v4443 = vmax.f32 %v4159, %v4315
        %v4444 = vmax.f32 %v3993, %v4316
        %v4445 = vmax.f32 %v4162, %v4317
        %v4446 = vmax.f32 %v3995, %v4318
        %v4447 = vmax.f32 %v4164, %v4319
        %v4448 = vmax.f32 %v3998, %v4320
        %v4449 = vmax.f32 %v4167, %v4321
        %v4450 = vmax.f32 %v4000, %v4322
        %v4451 = vmax.f32 %v4169, %v4323
        %v4452 = vmax.f32 %v4003, %v4324
        %v4453 = vmax.f32 %v4172, %v4325
        %v4454 = vmax.f32 %v4005, %v4326
        %v4455 = vmax.f32 %v4174, %v4327
        %v4456 = vmax.f32 %v4008, %v4328
        %v4457 = vmax.f32 %v4177, %v4329
        %v4458 = vmax.f32 %v4010, %v4330
        %v4459 = vmax.f32 %v4179, %v4331
        %v4460 = vmax.f32 %v4013, %v4332
        %v4461 = vmax.f32 %v4182, %v4333
        %v4462 = vmax.f32 %v4015, %v4334
        %v4463 = vmax.f32 %v4184, %v4335
        %v4464 = vmax.f32 %v4018, %v4336
        %v4465 = vmax.f32 %v4187, %v4337
        %v4466 = vmax.f32 %v4020, %v4338
        %v4467 = vmax.f32 %v4189, %v4339
        %v4468 = vmax.f32 %v4023, %v4340
        %v4469 = vmax.f32 %v4192, %v4341
        %v4470 = vmax.f32 %v4025, %v4342
        %v4471 = vmax.f32 %v4194, %v4343
        %v4472 = vmax.f32 %v4028, %v4344
        %v4473 = vmax.f32 %v4197, %v4345
        %v4474 = vmax.f32 %v4030, %v4346
        %v4475 = vmax.f32 %v4199, %v4347
        %v4476 = vmax.f32 %v4033, %v4348
        %v4477 = vmax.f32 %v4202, %v4349
        %v4478 = vmax.f32 %v4035, %v4350
        %v4479 = vmax.f32 %v4204, %v4351
        %v4480 = vmax.f32 %v4038, %v4352
        %v4481 = vmax.f32 %v4207, %v4353
        %v4482 = vmax.f32 %v4040, %v4354
        %v4483 = vmax.f32 %v4209, %v4355
        %v4484 = vmax.f32 %v4043, %v4356
        %v4485 = vmax.f32 %v4212, %v4357
        %v4486 = vmax.f32 %v4045, %v4358
        %v4487 = vmax.f32 %v4214, %v4359
        %v4488 = vmax.f32 %v4048, %v4360
        %v4489 = vmax.f32 %v4217, %v4361
        %v4490 = vmax.f32 %v4050, %v4362
        %v4491 = vmax.f32 %v4219, %v4363
        %v4492 = vmax.f32 %v4053, %v4364
        %v4493 = vmax.f32 %v4222, %v4365
        %v4494 = vmax.f32 %v4055, %v4366
        %v4495 = vmax.f32 %v4224, %v4367
        %v4496 = vmax.f32 %v4058, %v4368
        %v4497 = vmax.f32 %v4227, %v4369
        %v4498 = vmax.f32 %v4060, %v4370
        %v4499 = vmax.f32 %v4229, %v4371
        %v4500 = vmax.f32 %v4063, %v4372
        %v4501 = vmax.f32 %v4232, %v4373
        %v4502 = vmax.f32 %v4065, %v4374
        %v4503 = vmax.f32 %v4234, %v4375
        %v4504 = vmax.f32 %v4068, %v4376
        %v4505 = vmax.f32 %v4237, %v4377
        %v4506 = vmax.f32 %v4070, %v4378
        %v4507 = vmax.f32 %v4239, %v4379
        %v4508 = vmax.f32 %v4073, %v4380
        %v4509 = vmax.f32 %v4242, %v4381
        %v4510 = vmax.f32 %v4075, %v4382
        %v4511 = vmax.f32 %v4244, %v4383
        %v4512 = vmax.f32 %v4078, %v4384
        %v4513 = vmax.f32 %v4247, %v4385
        %v4514 = vmax.f32 %v4080, %v4386
        %v4515 = vmax.f32 %v4249, %v4387
        %v4516 = vmax.f32 %v4083, %v4388
        %v4517 = vmax.f32 %v4252, %v4389
        %v4518 = vmax.f32 %v4085, %v4390
        %v4519 = vmax.f32 %v4254, %v4391
        %v4520 = vmax.f32 %v4088, %v4392
        %v4521 = vmax.f32 %v4257, %v4393
        %v4522 = vmax.f32 %v4090, %v4394
        %v4523 = vmax.f32 %v4259, %v4395
        %v4524 = vmax.f32 %v4093, %v4396
        %v4525 = vmax.f32 %v4262, %v4397
        %v4526 = vmax.f32 %v4095, %v4398
        %v4527 = vmax.f32 %v4264, %v4399
        %v4528 = vmax.f32 %v4098, %v4400
        %v4529 = vmax.f32 %v4267, %v4401
        %v4530 = vmax.f32 %v4100, %v4402
        %v4531 = vmax.f32 %v4269, %v4403
        %v4532 = vmax.f32 %v4103, %v4404
        %v4533 = vmax.f32 %v4272, %v4405
        %v4534 = vmax.f32 %v4105, %v4406
        %v4535 = vmax.f32 %v4274, %v4407
        %v4536 = vmax.f32 %v4108, %v4408
        %v4537 = vmax.f32 %v4277, %v4409
        %v4538 = vmax.f32 %v4110, %v4410
        %v4539 = vmax.f32 %v4279, %v4411
        %v4540 = vmax.f32 %v4113, %v4412
        %v4541 = vmax.f32 %v4282, %v4413
        %v4542 = vmax.f32 %v4115, %v4414
        %v4543 = vmax.f32 %v4284, %v4415
        %v4544 = vmax.f32 %v4118, %v4416
        %v4545 = vmax.f32 %v4287, %v4417
        %v4546 = vmax.f32 %v4120, %v4418
        %v4547 = vmax.f32 %v4289, %v4419
        %v4548 = vmax.f32 %v4123, %v4420
        %v4549 = vmax.f32 %v4292, %v4421
        %v4550 = vmax.f32 %v4125, %v4422
        %v4551 = vmax.f32 %v4294, %v4423
        %v4552 = vpack.c.bf16 %v4426, %v4424
        %v4553 = vpack.c.bf16 %v4427, %v4425
        %v4554 = vpack.c.bf16 %v4430, %v4428
        %v4555 = vpack.c.bf16 %v4431, %v4429
        %v4556 = vpack.c.bf16 %v4434, %v4432
        %v4557 = vpack.c.bf16 %v4435, %v4433
        %v4558 = vpack.c.bf16 %v4438, %v4436
        %v4559 = vpack.c.bf16 %v4439, %v4437
        %v4560 = vpack.c.bf16 %v4442, %v4440
        %v4561 = vpack.c.bf16 %v4443, %v4441
        %v4562 = vpack.c.bf16 %v4446, %v4444
        %v4563 = vpack.c.bf16 %v4447, %v4445
        %v4564 = vpack.c.bf16 %v4450, %v4448
        %v4565 = vpack.c.bf16 %v4451, %v4449
        %v4566 = vpack.c.bf16 %v4454, %v4452
        %v4567 = vpack.c.bf16 %v4455, %v4453
        %v4568 = vpack.c.bf16 %v4458, %v4456
        %v4569 = vpack.c.bf16 %v4459, %v4457
        %v4570 = vpack.c.bf16 %v4462, %v4460
        %v4571 = vpack.c.bf16 %v4463, %v4461
        %v4572 = vpack.c.bf16 %v4466, %v4464
        %v4573 = vpack.c.bf16 %v4467, %v4465
        %v4574 = vpack.c.bf16 %v4470, %v4468
        %v4575 = vpack.c.bf16 %v4471, %v4469
        %v4576 = vpack.c.bf16 %v4474, %v4472
        %v4577 = vpack.c.bf16 %v4475, %v4473
        %v4578 = vpack.c.bf16 %v4478, %v4476
        %v4579 = vpack.c.bf16 %v4479, %v4477
        %v4580 = vpack.c.bf16 %v4482, %v4480
        %v4581 = vpack.c.bf16 %v4483, %v4481
        %v4582 = vpack.c.bf16 %v4486, %v4484
        %v4583 = vpack.c.bf16 %v4487, %v4485
        %v4584 = vpack.c.bf16 %v4490, %v4488
        %v4585 = vpack.c.bf16 %v4491, %v4489
        %v4586 = vpack.c.bf16 %v4494, %v4492
        %v4587 = vpack.c.bf16 %v4495, %v4493
        %v4588 = vpack.c.bf16 %v4498, %v4496
        %v4589 = vpack.c.bf16 %v4499, %v4497
        %v4590 = vpack.c.bf16 %v4502, %v4500
        %v4591 = vpack.c.bf16 %v4503, %v4501
        %v4592 = vpack.c.bf16 %v4506, %v4504
        %v4593 = vpack.c.bf16 %v4507, %v4505
        %v4594 = vpack.c.bf16 %v4510, %v4508
        %v4595 = vpack.c.bf16 %v4511, %v4509
        %v4596 = vpack.c.bf16 %v4514, %v4512
        %v4597 = vpack.c.bf16 %v4515, %v4513
        %v4598 = vpack.c.bf16 %v4518, %v4516
        %v4599 = vpack.c.bf16 %v4519, %v4517
        %v4600 = vpack.c.bf16 %v4522, %v4520
        %v4601 = vpack.c.bf16 %v4523, %v4521
        %v4602 = vpack.c.bf16 %v4526, %v4524
        %v4603 = vpack.c.bf16 %v4527, %v4525
        %v4604 = vpack.c.bf16 %v4530, %v4528
        %v4605 = vpack.c.bf16 %v4531, %v4529
        %v4606 = vpack.c.bf16 %v4534, %v4532
        %v4607 = vpack.c.bf16 %v4535, %v4533
        %v4608 = vpack.c.bf16 %v4538, %v4536
        %v4609 = vpack.c.bf16 %v4539, %v4537
        %v4610 = vpack.c.bf16 %v4542, %v4540
        %v4611 = vpack.c.bf16 %v4543, %v4541
        %v4612 = vpack.c.bf16 %v4546, %v4544
        %v4613 = vpack.c.bf16 %v4547, %v4545
        %v4614 = vpack.c.bf16 %v4550, %v4548
        %v4615 = vpack.c.bf16 %v4551, %v4549
        %v4616 = vld [vmem:[%s6] sm:$0xf]
        %v4617 = vld [vmem:[%s6 + $0x4] sm:$0xf]
        %v4618 = vld [vmem:[%s6 + $0x8] sm:$0xf]
        %v4619 = vld [vmem:[%s6 + $0xc] sm:$0xf]
        %v4620 = vld [vmem:[%s6 + $0x10] sm:$0xf]
        %v4621 = vld [vmem:[%s6 + $0x14] sm:$0xf]
        %v4622 = vld [vmem:[%s6 + $0x18] sm:$0xf]
        %v4623 = vld [vmem:[%s6 + $0x1c] sm:$0xf]
        %v4624 = vld [vmem:[%s6 + $0x20] sm:$0xf]
        %v4625 = vld [vmem:[%s6 + $0x24] sm:$0xf]
        %v4626 = vld [vmem:[%s6 + $0x28] sm:$0xf]
        %v4627 = vld [vmem:[%s6 + $0x2c] sm:$0xf]
        %v4628 = vld [vmem:[%s6 + $0x30] sm:$0xf]
        %v4629 = vld [vmem:[%s6 + $0x34] sm:$0xf]
        %v4630 = vld [vmem:[%s6 + $0x38] sm:$0xf]
        %v4631 = vld [vmem:[%s6 + $0x3c] sm:$0xf]
        %v4632 = vld [vmem:[%s6 + $0x40] sm:$0xf]
        %v4633 = vld [vmem:[%s6 + $0x44] sm:$0xf]
        %v4634 = vld [vmem:[%s6 + $0x48] sm:$0xf]
        %v4635 = vld [vmem:[%s6 + $0x4c] sm:$0xf]
        %v4636 = vld [vmem:[%s6 + $0x50] sm:$0xf]
        %v4637 = vld [vmem:[%s6 + $0x54] sm:$0xf]
        %v4638 = vld [vmem:[%s6 + $0x58] sm:$0xf]
        %v4639 = vld [vmem:[%s6 + $0x5c] sm:$0xf]
        %v4640 = vld [vmem:[%s6 + $0x60] sm:$0xf]
        %v4641 = vld [vmem:[%s6 + $0x64] sm:$0xf]
        %v4642 = vld [vmem:[%s6 + $0x68] sm:$0xf]
        %v4643 = vld [vmem:[%s6 + $0x6c] sm:$0xf]
        %v4644 = vld [vmem:[%s6 + $0x70] sm:$0xf]
        %v4645 = vld [vmem:[%s6 + $0x74] sm:$0xf]
        %v4646 = vld [vmem:[%s6 + $0x78] sm:$0xf]
        %v4647 = vld [vmem:[%s6 + $0x7c] sm:$0xf]
        %v4648 = vld [vmem:[%s7] sm:$0x1]
        %v4650 = vperm.slane %v4648, 0
        %v4684 = vunpack.c.l.b16 %v4616
        %v4685 = vunpack.c.l.b16 %v4617
        %v4686 = vunpack.c.l.b16 %v4618
        %v4687 = vunpack.c.l.b16 %v4619
        %v4688 = vunpack.c.l.b16 %v4620
        %v4689 = vunpack.c.l.b16 %v4621
        %v4690 = vunpack.c.l.b16 %v4622
        %v4691 = vunpack.c.l.b16 %v4623
        %v4692 = vunpack.c.l.b16 %v4624
        %v4693 = vunpack.c.l.b16 %v4625
        %v4694 = vunpack.c.l.b16 %v4626
        %v4695 = vunpack.c.l.b16 %v4627
        %v4696 = vunpack.c.l.b16 %v4628
        %v4697 = vunpack.c.l.b16 %v4629
        %v4698 = vunpack.c.l.b16 %v4630
        %v4699 = vunpack.c.l.b16 %v4631
        %v4700 = vunpack.c.l.b16 %v4632
        %v4701 = vunpack.c.l.b16 %v4633
        %v4702 = vunpack.c.l.b16 %v4634
        %v4703 = vunpack.c.l.b16 %v4635
        %v4704 = vunpack.c.l.b16 %v4636
        %v4705 = vunpack.c.l.b16 %v4637
        %v4706 = vunpack.c.l.b16 %v4638
        %v4707 = vunpack.c.l.b16 %v4639
        %v4708 = vunpack.c.l.b16 %v4640
        %v4709 = vunpack.c.l.b16 %v4641
        %v4710 = vunpack.c.l.b16 %v4642
        %v4711 = vunpack.c.l.b16 %v4643
        %v4712 = vunpack.c.l.b16 %v4644
        %v4713 = vunpack.c.l.b16 %v4645
        %v4714 = vunpack.c.l.b16 %v4646
        %v4715 = vunpack.c.l.b16 %v4647
        %v4716 = vpack.c.b16 %v4685, %v4684
        %v4717 = vpack.c.b16 %v4687, %v4686
        %v4718 = vpack.c.b16 %v4689, %v4688
        %v4719 = vpack.c.b16 %v4691, %v4690
        %v4720 = vpack.c.b16 %v4693, %v4692
        %v4721 = vpack.c.b16 %v4695, %v4694
        %v4722 = vpack.c.b16 %v4697, %v4696
        %v4723 = vpack.c.b16 %v4699, %v4698
        %v4724 = vpack.c.b16 %v4701, %v4700
        %v4725 = vpack.c.b16 %v4703, %v4702
        %v4726 = vpack.c.b16 %v4705, %v4704
        %v4727 = vpack.c.b16 %v4707, %v4706
        %v4728 = vpack.c.b16 %v4709, %v4708
        %v4729 = vpack.c.b16 %v4711, %v4710
        %v4730 = vpack.c.b16 %v4713, %v4712
        %v4731 = vpack.c.b16 %v4715, %v4714
        %4748 = vmatpush.bf16.msra.mxu0 %v4723
        %4749 = vmatpush.bf16.msra.mxu0 %v4722
        %4750 = vmatpush.bf16.msra.mxu0 %v4721
        %4751 = vmatpush.bf16.msra.mxu0 %v4720
        %4752 = vmatpush.bf16.msra.mxu0 %v4719
        %4753 = vmatpush.bf16.msra.mxu0 %v4718
        %4754 = vmatpush.bf16.msra.mxu0 %v4717
        %4755 = vmatpush.bf16.msra.mxu0 %v4716
        %4756 = vmatmul.bf16.gmra.mxu0 %v4552
        %v4757 = vpop.f32.mrf.mxu0
        %v4758 = vadd.f32 %v4650, %v4757
        %v4759 = vpop.f32.mrf.mxu0
        %v4760 = vadd.f32 %v4650, %v4759
        %4761 = vmatmul.bf16.gmra.mxu0 %v4554
        %v4762 = vpop.f32.mrf.mxu0
        %v4763 = vadd.f32 %v4650, %v4762
        %v4764 = vpop.f32.mrf.mxu0
        %v4765 = vadd.f32 %v4650, %v4764
        %4766 = vmatmul.bf16.gmra.mxu0 %v4556
        %v4767 = vpop.f32.mrf.mxu0
        %v4768 = vadd.f32 %v4650, %v4767
        %v4769 = vpop.f32.mrf.mxu0
        %v4770 = vadd.f32 %v4650, %v4769
        %4771 = vmatmul.bf16.gmra.mxu0 %v4558
        %v4772 = vpop.f32.mrf.mxu0
        %v4773 = vadd.f32 %v4650, %v4772
        %v4774 = vpop.f32.mrf.mxu0
        %v4775 = vadd.f32 %v4650, %v4774
        %4776 = vmatmul.bf16.gmra.mxu0 %v4560
        %v4777 = vpop.f32.mrf.mxu0
        %v4778 = vadd.f32 %v4650, %v4777
        %v4779 = vpop.f32.mrf.mxu0
        %v4780 = vadd.f32 %v4650, %v4779
        %4781 = vmatmul.bf16.gmra.mxu0 %v4562
        %v4782 = vpop.f32.mrf.mxu0
        %v4783 = vadd.f32 %v4650, %v4782
        %v4784 = vpop.f32.mrf.mxu0
        %v4785 = vadd.f32 %v4650, %v4784
        %4786 = vmatmul.bf16.gmra.mxu0 %v4564
        %v4787 = vpop.f32.mrf.mxu0
        %v4788 = vadd.f32 %v4650, %v4787
        %v4789 = vpop.f32.mrf.mxu0
        %v4790 = vadd.f32 %v4650, %v4789
        %4791 = vmatmul.bf16.gmra.mxu0 %v4566
        %v4792 = vpop.f32.mrf.mxu0
        %v4793 = vadd.f32 %v4650, %v4792
        %v4794 = vpop.f32.mrf.mxu0
        %v4795 = vadd.f32 %v4650, %v4794
        %4796 = vmatmul.bf16.gmra.mxu0 %v4568
        %v4797 = vpop.f32.mrf.mxu0
        %v4798 = vadd.f32 %v4650, %v4797
        %v4799 = vpop.f32.mrf.mxu0
        %v4800 = vadd.f32 %v4650, %v4799
        %4801 = vmatmul.bf16.gmra.mxu0 %v4570
        %v4802 = vpop.f32.mrf.mxu0
        %v4803 = vadd.f32 %v4650, %v4802
        %v4804 = vpop.f32.mrf.mxu0
        %v4805 = vadd.f32 %v4650, %v4804
        %4806 = vmatmul.bf16.gmra.mxu0 %v4572
        %v4807 = vpop.f32.mrf.mxu0
        %v4808 = vadd.f32 %v4650, %v4807
        %v4809 = vpop.f32.mrf.mxu0
        %v4810 = vadd.f32 %v4650, %v4809
        %4811 = vmatmul.bf16.gmra.mxu0 %v4574
        %v4812 = vpop.f32.mrf.mxu0
        %v4813 = vadd.f32 %v4650, %v4812
        %v4814 = vpop.f32.mrf.mxu0
        %v4815 = vadd.f32 %v4650, %v4814
        %4816 = vmatmul.bf16.gmra.mxu0 %v4576
        %v4817 = vpop.f32.mrf.mxu0
        %v4818 = vadd.f32 %v4650, %v4817
        %v4819 = vpop.f32.mrf.mxu0
        %v4820 = vadd.f32 %v4650, %v4819
        %4821 = vmatmul.bf16.gmra.mxu0 %v4578
        %v4822 = vpop.f32.mrf.mxu0
        %v4823 = vadd.f32 %v4650, %v4822
        %v4824 = vpop.f32.mrf.mxu0
        %v4825 = vadd.f32 %v4650, %v4824
        %4826 = vmatmul.bf16.gmra.mxu0 %v4580
        %v4827 = vpop.f32.mrf.mxu0
        %v4828 = vadd.f32 %v4650, %v4827
        %v4829 = vpop.f32.mrf.mxu0
        %v4830 = vadd.f32 %v4650, %v4829
        %4831 = vmatmul.bf16.gmra.mxu0 %v4582
        %v4832 = vpop.f32.mrf.mxu0
        %v4833 = vadd.f32 %v4650, %v4832
        %v4834 = vpop.f32.mrf.mxu0
        %v4835 = vadd.f32 %v4650, %v4834
        %4836 = vmatmul.bf16.gmra.mxu0 %v4584
        %v4837 = vpop.f32.mrf.mxu0
        %v4838 = vadd.f32 %v4650, %v4837
        %v4839 = vpop.f32.mrf.mxu0
        %v4840 = vadd.f32 %v4650, %v4839
        %4841 = vmatmul.bf16.gmra.mxu0 %v4586
        %v4842 = vpop.f32.mrf.mxu0
        %v4843 = vadd.f32 %v4650, %v4842
        %v4844 = vpop.f32.mrf.mxu0
        %v4845 = vadd.f32 %v4650, %v4844
        %4846 = vmatmul.bf16.gmra.mxu0 %v4588
        %v4847 = vpop.f32.mrf.mxu0
        %v4848 = vadd.f32 %v4650, %v4847
        %v4849 = vpop.f32.mrf.mxu0
        %v4850 = vadd.f32 %v4650, %v4849
        %4851 = vmatmul.bf16.gmra.mxu0 %v4590
        %v4852 = vpop.f32.mrf.mxu0
        %v4853 = vadd.f32 %v4650, %v4852
        %v4854 = vpop.f32.mrf.mxu0
        %v4855 = vadd.f32 %v4650, %v4854
        %4856 = vmatmul.bf16.gmra.mxu0 %v4592
        %v4857 = vpop.f32.mrf.mxu0
        %v4858 = vadd.f32 %v4650, %v4857
        %v4859 = vpop.f32.mrf.mxu0
        %v4860 = vadd.f32 %v4650, %v4859
        %4861 = vmatmul.bf16.gmra.mxu0 %v4594
        %v4862 = vpop.f32.mrf.mxu0
        %v4863 = vadd.f32 %v4650, %v4862
        %v4864 = vpop.f32.mrf.mxu0
        %v4865 = vadd.f32 %v4650, %v4864
        %4866 = vmatmul.bf16.gmra.mxu0 %v4596
        %v4867 = vpop.f32.mrf.mxu0
        %v4868 = vadd.f32 %v4650, %v4867
        %v4869 = vpop.f32.mrf.mxu0
        %v4870 = vadd.f32 %v4650, %v4869
        %4871 = vmatmul.bf16.gmra.mxu0 %v4598
        %v4872 = vpop.f32.mrf.mxu0
        %v4873 = vadd.f32 %v4650, %v4872
        %v4874 = vpop.f32.mrf.mxu0
        %v4875 = vadd.f32 %v4650, %v4874
        %4876 = vmatmul.bf16.gmra.mxu0 %v4600
        %v4877 = vpop.f32.mrf.mxu0
        %v4878 = vadd.f32 %v4650, %v4877
        %v4879 = vpop.f32.mrf.mxu0
        %v4880 = vadd.f32 %v4650, %v4879
        %4881 = vmatmul.bf16.gmra.mxu0 %v4602
        %v4882 = vpop.f32.mrf.mxu0
        %v4883 = vadd.f32 %v4650, %v4882
        %v4884 = vpop.f32.mrf.mxu0
        %v4885 = vadd.f32 %v4650, %v4884
        %4886 = vmatmul.bf16.gmra.mxu0 %v4604
        %v4887 = vpop.f32.mrf.mxu0
        %v4888 = vadd.f32 %v4650, %v4887
        %v4889 = vpop.f32.mrf.mxu0
        %v4890 = vadd.f32 %v4650, %v4889
        %4891 = vmatmul.bf16.gmra.mxu0 %v4606
        %v4892 = vpop.f32.mrf.mxu0
        %v4893 = vadd.f32 %v4650, %v4892
        %v4894 = vpop.f32.mrf.mxu0
        %v4895 = vadd.f32 %v4650, %v4894
        %4896 = vmatmul.bf16.gmra.mxu0 %v4608
        %v4897 = vpop.f32.mrf.mxu0
        %v4898 = vadd.f32 %v4650, %v4897
        %v4899 = vpop.f32.mrf.mxu0
        %v4900 = vadd.f32 %v4650, %v4899
        %4901 = vmatmul.bf16.gmra.mxu0 %v4610
        %v4902 = vpop.f32.mrf.mxu0
        %v4903 = vadd.f32 %v4650, %v4902
        %v4904 = vpop.f32.mrf.mxu0
        %v4905 = vadd.f32 %v4650, %v4904
        %4906 = vmatmul.bf16.gmra.mxu0 %v4612
        %v4907 = vpop.f32.mrf.mxu0
        %v4908 = vadd.f32 %v4650, %v4907
        %v4909 = vpop.f32.mrf.mxu0
        %v4910 = vadd.f32 %v4650, %v4909
        %4911 = vmatmul.bf16.gmra.mxu0 %v4614
        %v4912 = vpop.f32.mrf.mxu0
        %v4913 = vadd.f32 %v4650, %v4912
        %v4914 = vpop.f32.mrf.mxu0
        %v4915 = vadd.f32 %v4650, %v4914
        %4916 = vdwg.mxu0
        %4917 = vmatpush.bf16.msra.mxu0 %v4731
        %4918 = vmatpush.bf16.msra.mxu0 %v4730
        %4919 = vmatpush.bf16.msra.mxu0 %v4729
        %4920 = vmatpush.bf16.msra.mxu0 %v4728
        %4921 = vmatpush.bf16.msra.mxu0 %v4727
        %4922 = vmatpush.bf16.msra.mxu0 %v4726
        %4923 = vmatpush.bf16.msra.mxu0 %v4725
        %4924 = vmatpush.bf16.msra.mxu0 %v4724
        %4925 = vmatmul.bf16.gmra.mxu0 %v4553
        %v4926 = vpop.f32.mrf.mxu0
        %v4927 = vadd.f32 %v4758, %v4926
        %v4928 = vpop.f32.mrf.mxu0
        %v4929 = vadd.f32 %v4760, %v4928
        %4930 = vmatmul.bf16.gmra.mxu0 %v4555
        %v4931 = vpop.f32.mrf.mxu0
        %v4932 = vadd.f32 %v4763, %v4931
        %v4933 = vpop.f32.mrf.mxu0
        %v4934 = vadd.f32 %v4765, %v4933
        %4935 = vmatmul.bf16.gmra.mxu0 %v4557
        %v4936 = vpop.f32.mrf.mxu0
        %v4937 = vadd.f32 %v4768, %v4936
        %v4938 = vpop.f32.mrf.mxu0
        %v4939 = vadd.f32 %v4770, %v4938
        %4940 = vmatmul.bf16.gmra.mxu0 %v4559
        %v4941 = vpop.f32.mrf.mxu0
        %v4942 = vadd.f32 %v4773, %v4941
        %v4943 = vpop.f32.mrf.mxu0
        %v4944 = vadd.f32 %v4775, %v4943
        %4945 = vmatmul.bf16.gmra.mxu0 %v4561
        %v4946 = vpop.f32.mrf.mxu0
        %v4947 = vadd.f32 %v4778, %v4946
        %v4948 = vpop.f32.mrf.mxu0
        %v4949 = vadd.f32 %v4780, %v4948
        %4950 = vmatmul.bf16.gmra.mxu0 %v4563
        %v4951 = vpop.f32.mrf.mxu0
        %v4952 = vadd.f32 %v4783, %v4951
        %v4953 = vpop.f32.mrf.mxu0
        %v4954 = vadd.f32 %v4785, %v4953
        %4955 = vmatmul.bf16.gmra.mxu0 %v4565
        %v4956 = vpop.f32.mrf.mxu0
        %v4957 = vadd.f32 %v4788, %v4956
        %v4958 = vpop.f32.mrf.mxu0
        %v4959 = vadd.f32 %v4790, %v4958
        %4960 = vmatmul.bf16.gmra.mxu0 %v4567
        %v4961 = vpop.f32.mrf.mxu0
        %v4962 = vadd.f32 %v4793, %v4961
        %v4963 = vpop.f32.mrf.mxu0
        %v4964 = vadd.f32 %v4795, %v4963
        %4965 = vmatmul.bf16.gmra.mxu0 %v4569
        %v4966 = vpop.f32.mrf.mxu0
        %v4967 = vadd.f32 %v4798, %v4966
        %v4968 = vpop.f32.mrf.mxu0
        %v4969 = vadd.f32 %v4800, %v4968
        %4970 = vmatmul.bf16.gmra.mxu0 %v4571
        %v4971 = vpop.f32.mrf.mxu0
        %v4972 = vadd.f32 %v4803, %v4971
        %v4973 = vpop.f32.mrf.mxu0
        %v4974 = vadd.f32 %v4805, %v4973
        %4975 = vmatmul.bf16.gmra.mxu0 %v4573
        %v4976 = vpop.f32.mrf.mxu0
        %v4977 = vadd.f32 %v4808, %v4976
        %v4978 = vpop.f32.mrf.mxu0
        %v4979 = vadd.f32 %v4810, %v4978
        %4980 = vmatmul.bf16.gmra.mxu0 %v4575
        %v4981 = vpop.f32.mrf.mxu0
        %v4982 = vadd.f32 %v4813, %v4981
        %v4983 = vpop.f32.mrf.mxu0
        %v4984 = vadd.f32 %v4815, %v4983
        %4985 = vmatmul.bf16.gmra.mxu0 %v4577
        %v4986 = vpop.f32.mrf.mxu0
        %v4987 = vadd.f32 %v4818, %v4986
        %v4988 = vpop.f32.mrf.mxu0
        %v4989 = vadd.f32 %v4820, %v4988
        %4990 = vmatmul.bf16.gmra.mxu0 %v4579
        %v4991 = vpop.f32.mrf.mxu0
        %v4992 = vadd.f32 %v4823, %v4991
        %v4993 = vpop.f32.mrf.mxu0
        %v4994 = vadd.f32 %v4825, %v4993
        %4995 = vmatmul.bf16.gmra.mxu0 %v4581
        %v4996 = vpop.f32.mrf.mxu0
        %v4997 = vadd.f32 %v4828, %v4996
        %v4998 = vpop.f32.mrf.mxu0
        %v4999 = vadd.f32 %v4830, %v4998
        %5000 = vmatmul.bf16.gmra.mxu0 %v4583
        %v5001 = vpop.f32.mrf.mxu0
        %v5002 = vadd.f32 %v4833, %v5001
        %v5003 = vpop.f32.mrf.mxu0
        %v5004 = vadd.f32 %v4835, %v5003
        %5005 = vmatmul.bf16.gmra.mxu0 %v4585
        %v5006 = vpop.f32.mrf.mxu0
        %v5007 = vadd.f32 %v4838, %v5006
        %v5008 = vpop.f32.mrf.mxu0
        %v5009 = vadd.f32 %v4840, %v5008
        %5010 = vmatmul.bf16.gmra.mxu0 %v4587
        %v5011 = vpop.f32.mrf.mxu0
        %v5012 = vadd.f32 %v4843, %v5011
        %v5013 = vpop.f32.mrf.mxu0
        %v5014 = vadd.f32 %v4845, %v5013
        %5015 = vmatmul.bf16.gmra.mxu0 %v4589
        %v5016 = vpop.f32.mrf.mxu0
        %v5017 = vadd.f32 %v4848, %v5016
        %v5018 = vpop.f32.mrf.mxu0
        %v5019 = vadd.f32 %v4850, %v5018
        %5020 = vmatmul.bf16.gmra.mxu0 %v4591
        %v5021 = vpop.f32.mrf.mxu0
        %v5022 = vadd.f32 %v4853, %v5021
        %v5023 = vpop.f32.mrf.mxu0
        %v5024 = vadd.f32 %v4855, %v5023
        %5025 = vmatmul.bf16.gmra.mxu0 %v4593
        %v5026 = vpop.f32.mrf.mxu0
        %v5027 = vadd.f32 %v4858, %v5026
        %v5028 = vpop.f32.mrf.mxu0
        %v5029 = vadd.f32 %v4860, %v5028
        %5030 = vmatmul.bf16.gmra.mxu0 %v4595
        %v5031 = vpop.f32.mrf.mxu0
        %v5032 = vadd.f32 %v4863, %v5031
        %v5033 = vpop.f32.mrf.mxu0
        %v5034 = vadd.f32 %v4865, %v5033
        %5035 = vmatmul.bf16.gmra.mxu0 %v4597
        %v5036 = vpop.f32.mrf.mxu0
        %v5037 = vadd.f32 %v4868, %v5036
        %v5038 = vpop.f32.mrf.mxu0
        %v5039 = vadd.f32 %v4870, %v5038
        %5040 = vmatmul.bf16.gmra.mxu0 %v4599
        %v5041 = vpop.f32.mrf.mxu0
        %v5042 = vadd.f32 %v4873, %v5041
        %v5043 = vpop.f32.mrf.mxu0
        %v5044 = vadd.f32 %v4875, %v5043
        %5045 = vmatmul.bf16.gmra.mxu0 %v4601
        %v5046 = vpop.f32.mrf.mxu0
        %v5047 = vadd.f32 %v4878, %v5046
        %v5048 = vpop.f32.mrf.mxu0
        %v5049 = vadd.f32 %v4880, %v5048
        %5050 = vmatmul.bf16.gmra.mxu0 %v4603
        %v5051 = vpop.f32.mrf.mxu0
        %v5052 = vadd.f32 %v4883, %v5051
        %v5053 = vpop.f32.mrf.mxu0
        %v5054 = vadd.f32 %v4885, %v5053
        %5055 = vmatmul.bf16.gmra.mxu0 %v4605
        %v5056 = vpop.f32.mrf.mxu0
        %v5057 = vadd.f32 %v4888, %v5056
        %v5058 = vpop.f32.mrf.mxu0
        %v5059 = vadd.f32 %v4890, %v5058
        %5060 = vmatmul.bf16.gmra.mxu0 %v4607
        %v5061 = vpop.f32.mrf.mxu0
        %v5062 = vadd.f32 %v4893, %v5061
        %v5063 = vpop.f32.mrf.mxu0
        %v5064 = vadd.f32 %v4895, %v5063
        %5065 = vmatmul.bf16.gmra.mxu0 %v4609
        %v5066 = vpop.f32.mrf.mxu0
        %v5067 = vadd.f32 %v4898, %v5066
        %v5068 = vpop.f32.mrf.mxu0
        %v5069 = vadd.f32 %v4900, %v5068
        %5070 = vmatmul.bf16.gmra.mxu0 %v4611
        %v5071 = vpop.f32.mrf.mxu0
        %v5072 = vadd.f32 %v4903, %v5071
        %v5073 = vpop.f32.mrf.mxu0
        %v5074 = vadd.f32 %v4905, %v5073
        %5075 = vmatmul.bf16.gmra.mxu0 %v4613
        %v5076 = vpop.f32.mrf.mxu0
        %v5077 = vadd.f32 %v4908, %v5076
        %v5078 = vpop.f32.mrf.mxu0
        %v5079 = vadd.f32 %v4910, %v5078
        %5080 = vmatmul.bf16.gmra.mxu0 %v4615
        %v5081 = vpop.f32.mrf.mxu0
        %v5082 = vadd.f32 %v4913, %v5081
        %v5083 = vpop.f32.mrf.mxu0
        %v5084 = vadd.f32 %v4915, %v5083
        %5085 = vdwg.mxu0
        %v5086 = vmul.f32 %v4927, 0.01
        %v5087 = vmul.f32 %v4929, 0.01
        %v5088 = vmul.f32 %v4932, 0.01
        %v5089 = vmul.f32 %v4934, 0.01
        %v5090 = vmul.f32 %v4937, 0.01
        %v5091 = vmul.f32 %v4939, 0.01
        %v5092 = vmul.f32 %v4942, 0.01
        %v5093 = vmul.f32 %v4944, 0.01
        %v5094 = vmul.f32 %v4947, 0.01
        %v5095 = vmul.f32 %v4949, 0.01
        %v5096 = vmul.f32 %v4952, 0.01
        %v5097 = vmul.f32 %v4954, 0.01
        %v5098 = vmul.f32 %v4957, 0.01
        %v5099 = vmul.f32 %v4959, 0.01
        %v5100 = vmul.f32 %v4962, 0.01
        %v5101 = vmul.f32 %v4964, 0.01
        %v5102 = vmul.f32 %v4967, 0.01
        %v5103 = vmul.f32 %v4969, 0.01
        %v5104 = vmul.f32 %v4972, 0.01
        %v5105 = vmul.f32 %v4974, 0.01
        %v5106 = vmul.f32 %v4977, 0.01
        %v5107 = vmul.f32 %v4979, 0.01
        %v5108 = vmul.f32 %v4982, 0.01
        %v5109 = vmul.f32 %v4984, 0.01
        %v5110 = vmul.f32 %v4987, 0.01
        %v5111 = vmul.f32 %v4989, 0.01
        %v5112 = vmul.f32 %v4992, 0.01
        %v5113 = vmul.f32 %v4994, 0.01
        %v5114 = vmul.f32 %v4997, 0.01
        %v5115 = vmul.f32 %v4999, 0.01
        %v5116 = vmul.f32 %v5002, 0.01
        %v5117 = vmul.f32 %v5004, 0.01
        %v5118 = vmul.f32 %v5007, 0.01
        %v5119 = vmul.f32 %v5009, 0.01
        %v5120 = vmul.f32 %v5012, 0.01
        %v5121 = vmul.f32 %v5014, 0.01
        %v5122 = vmul.f32 %v5017, 0.01
        %v5123 = vmul.f32 %v5019, 0.01
        %v5124 = vmul.f32 %v5022, 0.01
        %v5125 = vmul.f32 %v5024, 0.01
        %v5126 = vmul.f32 %v5027, 0.01
        %v5127 = vmul.f32 %v5029, 0.01
        %v5128 = vmul.f32 %v5032, 0.01
        %v5129 = vmul.f32 %v5034, 0.01
        %v5130 = vmul.f32 %v5037, 0.01
        %v5131 = vmul.f32 %v5039, 0.01
        %v5132 = vmul.f32 %v5042, 0.01
        %v5133 = vmul.f32 %v5044, 0.01
        %v5134 = vmul.f32 %v5047, 0.01
        %v5135 = vmul.f32 %v5049, 0.01
        %v5136 = vmul.f32 %v5052, 0.01
        %v5137 = vmul.f32 %v5054, 0.01
        %v5138 = vmul.f32 %v5057, 0.01
        %v5139 = vmul.f32 %v5059, 0.01
        %v5140 = vmul.f32 %v5062, 0.01
        %v5141 = vmul.f32 %v5064, 0.01
        %v5142 = vmul.f32 %v5067, 0.01
        %v5143 = vmul.f32 %v5069, 0.01
        %v5144 = vmul.f32 %v5072, 0.01
        %v5145 = vmul.f32 %v5074, 0.01
        %v5146 = vmul.f32 %v5077, 0.01
        %v5147 = vmul.f32 %v5079, 0.01
        %v5148 = vmul.f32 %v5082, 0.01
        %v5149 = vmul.f32 %v5084, 0.01
        %v5150 = vmax.f32 %v4927, %v5086
        %v5151 = vmax.f32 %v4929, %v5087
        %v5152 = vmax.f32 %v4932, %v5088
        %v5153 = vmax.f32 %v4934, %v5089
        %v5154 = vmax.f32 %v4937, %v5090
        %v5155 = vmax.f32 %v4939, %v5091
        %v5156 = vmax.f32 %v4942, %v5092
        %v5157 = vmax.f32 %v4944, %v5093
        %v5158 = vmax.f32 %v4947, %v5094
        %v5159 = vmax.f32 %v4949, %v5095
        %v5160 = vmax.f32 %v4952, %v5096
        %v5161 = vmax.f32 %v4954, %v5097
        %v5162 = vmax.f32 %v4957, %v5098
        %v5163 = vmax.f32 %v4959, %v5099
        %v5164 = vmax.f32 %v4962, %v5100
        %v5165 = vmax.f32 %v4964, %v5101
        %v5166 = vmax.f32 %v4967, %v5102
        %v5167 = vmax.f32 %v4969, %v5103
        %v5168 = vmax.f32 %v4972, %v5104
        %v5169 = vmax.f32 %v4974, %v5105
        %v5170 = vmax.f32 %v4977, %v5106
        %v5171 = vmax.f32 %v4979, %v5107
        %v5172 = vmax.f32 %v4982, %v5108
        %v5173 = vmax.f32 %v4984, %v5109
        %v5174 = vmax.f32 %v4987, %v5110
        %v5175 = vmax.f32 %v4989, %v5111
        %v5176 = vmax.f32 %v4992, %v5112
        %v5177 = vmax.f32 %v4994, %v5113
        %v5178 = vmax.f32 %v4997, %v5114
        %v5179 = vmax.f32 %v4999, %v5115
        %v5180 = vmax.f32 %v5002, %v5116
        %v5181 = vmax.f32 %v5004, %v5117
        %v5182 = vmax.f32 %v5007, %v5118
        %v5183 = vmax.f32 %v5009, %v5119
        %v5184 = vmax.f32 %v5012, %v5120
        %v5185 = vmax.f32 %v5014, %v5121
        %v5186 = vmax.f32 %v5017, %v5122
        %v5187 = vmax.f32 %v5019, %v5123
        %v5188 = vmax.f32 %v5022, %v5124
        %v5189 = vmax.f32 %v5024, %v5125
        %v5190 = vmax.f32 %v5027, %v5126
        %v5191 = vmax.f32 %v5029, %v5127
        %v5192 = vmax.f32 %v5032, %v5128
        %v5193 = vmax.f32 %v5034, %v5129
        %v5194 = vmax.f32 %v5037, %v5130
        %v5195 = vmax.f32 %v5039, %v5131
        %v5196 = vmax.f32 %v5042, %v5132
        %v5197 = vmax.f32 %v5044, %v5133
        %v5198 = vmax.f32 %v5047, %v5134
        %v5199 = vmax.f32 %v5049, %v5135
        %v5200 = vmax.f32 %v5052, %v5136
        %v5201 = vmax.f32 %v5054, %v5137
        %v5202 = vmax.f32 %v5057, %v5138
        %v5203 = vmax.f32 %v5059, %v5139
        %v5204 = vmax.f32 %v5062, %v5140
        %v5205 = vmax.f32 %v5064, %v5141
        %v5206 = vmax.f32 %v5067, %v5142
        %v5207 = vmax.f32 %v5069, %v5143
        %v5208 = vmax.f32 %v5072, %v5144
        %v5209 = vmax.f32 %v5074, %v5145
        %v5210 = vmax.f32 %v5077, %v5146
        %v5211 = vmax.f32 %v5079, %v5147
        %v5212 = vmax.f32 %v5082, %v5148
        %v5213 = vmax.f32 %v5084, %v5149
        %v5214 = vmax.f32 %v5150, %v5154
        %v5215 = vmax.f32 %v5151, %v5155
        %v5216 = vmax.f32 %v5152, %v5156
        %v5217 = vmax.f32 %v5153, %v5157
        %v5218 = vmax.f32 %v5214, %v5158
        %v5219 = vmax.f32 %v5215, %v5159
        %v5220 = vmax.f32 %v5216, %v5160
        %v5221 = vmax.f32 %v5217, %v5161
        %v5222 = vmax.f32 %v5218, %v5162
        %v5223 = vmax.f32 %v5219, %v5163
        %v5224 = vmax.f32 %v5220, %v5164
        %v5225 = vmax.f32 %v5221, %v5165
        %v5226 = vmax.f32 %v5222, %v5166
        %v5227 = vmax.f32 %v5223, %v5167
        %v5228 = vmax.f32 %v5224, %v5168
        %v5229 = vmax.f32 %v5225, %v5169
        %v5230 = vmax.f32 %v5226, %v5170
        %v5231 = vmax.f32 %v5227, %v5171
        %v5232 = vmax.f32 %v5228, %v5172
        %v5233 = vmax.f32 %v5229, %v5173
        %v5234 = vmax.f32 %v5230, %v5174
        %v5235 = vmax.f32 %v5231, %v5175
        %v5236 = vmax.f32 %v5232, %v5176
        %v5237 = vmax.f32 %v5233, %v5177
        %v5238 = vmax.f32 %v5234, %v5178
        %v5239 = vmax.f32 %v5235, %v5179
        %v5240 = vmax.f32 %v5236, %v5180
        %v5241 = vmax.f32 %v5237, %v5181
        %v5242 = vmax.f32 %v5238, %v5182
        %v5243 = vmax.f32 %v5239, %v5183
        %v5244 = vmax.f32 %v5240, %v5184
        %v5245 = vmax.f32 %v5241, %v5185
        %v5246 = vmax.f32 %v5242, %v5186
        %v5247 = vmax.f32 %v5243, %v5187
        %v5248 = vmax.f32 %v5244, %v5188
        %v5249 = vmax.f32 %v5245, %v5189
        %v5250 = vmax.f32 %v5246, %v5190
        %v5251 = vmax.f32 %v5247, %v5191
        %v5252 = vmax.f32 %v5248, %v5192
        %v5253 = vmax.f32 %v5249, %v5193
        %v5254 = vmax.f32 %v5250, %v5194
        %v5255 = vmax.f32 %v5251, %v5195
        %v5256 = vmax.f32 %v5252, %v5196
        %v5257 = vmax.f32 %v5253, %v5197
        %v5258 = vmax.f32 %v5254, %v5198
        %v5259 = vmax.f32 %v5255, %v5199
        %v5260 = vmax.f32 %v5256, %v5200
        %v5261 = vmax.f32 %v5257, %v5201
        %v5262 = vmax.f32 %v5258, %v5202
        %v5263 = vmax.f32 %v5259, %v5203
        %v5264 = vmax.f32 %v5260, %v5204
        %v5265 = vmax.f32 %v5261, %v5205
        %v5266 = vmax.f32 %v5262, %v5206
        %v5267 = vmax.f32 %v5263, %v5207
        %v5268 = vmax.f32 %v5264, %v5208
        %v5269 = vmax.f32 %v5265, %v5209
        %v5270 = vmax.f32 %v5266, %v5210
        %v5271 = vmax.f32 %v5267, %v5211
        %v5272 = vmax.f32 %v5268, %v5212
        %v5273 = vmax.f32 %v5269, %v5213
        %v5274 = vmax.f32 %v5270, %v5271
        %v5275 = vmax.f32 %v5272, %v5273
        %v5276 = vmax.f32 %v5274, %v5275
        %v5277 = vrot.slane %v5276, 4
        %v5278 = vmax.f32 %v5276, %v5277
        %v5279 = vrot.slane %v5278, 2
        %v5280 = vmax.f32 %v5278, %v5279
        %v5281 = vrot.slane %v5280, 1
        %v5282 = vmax.f32 %v5280, %v5281
        %5283 = vst [vmem:[%s409] sm:$0x1] %v5282
        %s5284 = sand.u32 %s291, 1
        %s5285 = scalar_lea.sflag [#allocation8], %s5284
        %s5286 = sand.u32 %s291, 1
        %s5287 = scalar_lea.vmem [#allocation7], %s5286
        // Predicated region
        $region65: #{_lambda_.2} parent=63 // pred_check
          %p5288 = pneg %p301
        $region66: #{_lambda_.2} parent=63 // pred_check_branch
          %5290 = sbr.rel (%p5288) target = $region68
        $region67: #{_lambda_.2} parent=63 // pred_region
          %s5291 = sadd.s32 %s35, %s36
          %5293 = vsyncadd %s5285, 0
          %s5294 = scalar_lea.hbm %s12, %s5291
          %s5296 = sshll.u32 %s5287, 4
          %s5297 = int_to_ptr.vmem [resolvable:$true] %s5296
          %s5298 = sshll.u32 %s5294, 4
          %s5299 = int_to_ptr.hbm [resolvable:$true] %s5298
          %5301 = dma.vmem_to_hbm [thread:$0]  %s5297, 16, %s5299, %s5285
        $region68: #{_lambda_.2} parent=63 // pred_fallthru
          _
      $region64: #{_lambda_.2} parent=5 // pred_fallthru
        _
      %p5302 = scmp.le.s32.totalorder 2, %s26
      // Predicated region
      $region69: #{_lambda_.2} parent=5 // pred_check
        %p5303 = pneg %p5302
      $region70: #{_lambda_.2} parent=5 // pred_check_branch
        %5305 = sbr.rel (%p5303) target = $region72
      $region71: #{_lambda_.2} parent=5 // pred_region
        %s5306 = ssub.s32 %s26, 2
        // Predicated region
        $region73: #{_lambda_.2} parent=71 // pred_check
          %p5307 = pneg %p307
        $region74: #{_lambda_.2} parent=71 // pred_check_branch
          %5309 = sbr.rel (%p5307) target = $region76
        $region75: #{_lambda_.2} parent=71 // pred_region
          %s5310 = sand.u32 %s292, 1
          %s5311 = scalar_lea.sflag [#allocation8], %s5310
          %s5312 = sand.u32 %s292, 1
          %s5313 = scalar_lea.vmem [#allocation7], %s5312
          %5315 = dma.done %s5311, 16
        $region76: #{_lambda_.2} parent=71 // pred_fallthru
          _
      $region72: #{_lambda_.2} parent=5 // pred_fallthru
        _
    $region6: #{_lambda_.2} parent=1 // loop_footer
      %s30 = sadd.s32 1, %s26
    $region7: #{_lambda_.2} parent=1 // loop_footer_branch
      %25 = sbr.rel target = $region3
    $region8: #{_lambda_.2} parent=1 // loop_exit
      _
    %5316 = vsyncpa [#allocation8], 1
    %s5317 = scalar_lea.sflag [#allocation8], 1
    %5318 = vsyncpa %s5317, 1

</llo_original>
